<compile_context>
chip_gen: v5e
topology: v5e:2x2
jax: 0.10.0
libtpu: 0.0.40
codegen_flags: <defaults>
</compile_context>

<pallas_src>
import functools

import jax
import jax.numpy as jnp
from jax import lax
from jax.experimental import pallas as pl
from jax.experimental.pallas import tpu as pltpu


def _dkvmn_scan_kernel(attn_ref, ea_ref, init_mv_ref, read_ref, mv_scratch, *,
                       value_dim, t_block):
    """Sequential DKVMN value-memory scan for one (batch-block, time-block) grid cell.

    Batch-on-lanes layout (last dim = padded batch, 128 lanes):
      attn_ref   : (t_block, M,     B_blk)   softmax attention weights
      ea_ref     : (t_block, 2*VD,  B_blk)   packed [erase | add] gates
      init_mv_ref: (M, VD, B_blk)            initial value memory (pre-broadcast)
      read_ref   : (t_block, VD,    B_blk)   per-step weighted memory read (output)
      mv_scratch : (M, VD, B_blk)            value memory state, persists across time blocks
    """
    VD = value_dim
    tb = pl.program_id(1)

    # memory.init_value_memory(batch_size, init_value_memory)
    @pl.when(tb == 0)
    def _():
        mv_scratch[...] = init_mv_ref[...]

    def step(tt, carry):
        attn = attn_ref[tt]                           # (M, B_blk)
        ea = ea_ref[tt]                               # (2*VD, B_blk)
        erase = ea[:VD]                               # (VD, B_blk)
        add = ea[VD:]                                 # (VD, B_blk)
        mv = mv_scratch[...]                          # (M, VD, B_blk)
        a3 = attn[:, None, :]                         # (M, 1, B_blk) sublane broadcast

        # memory.read: weighted sum over slots -> lane-dense store.
        read_ref[tt] = jnp.sum(a3 * mv, axis=0)       # (VD, B_blk)

        # memory.write (unconditional: the write after the final real timestep is never
        # read, and padded steps have attn == 0, so this is output-equivalent to the
        # PyTorch `if t < seq_len - 1` guard).
        mv_scratch[...] = (mv * (1.0 - a3 * erase[None, :, :])
                           + a3 * add[None, :, :])
        return carry

    lax.fori_loop(0, t_block, step, 0, unroll=True)


def improved_deep_gpcm_coral_forward(params, q_data, r_data, *, t_block=None):
    """Forward pass: returns (abilities, thresholds, discriminations, predictions, coral_logits)."""
    cfg = params["config"]
    B, T = q_data.shape
    Q, K = cfg["n_questions"], cfg["n_cats"]
    M, KD, VD = cfg["memory_size"], cfg["key_dim"], cfg["value_dim"]
    FD = cfg["final_fc_dim"]
    f32 = jnp.float32

    # ---------------- hoisted time-independent compute (plain XLA, batched over B*T) ----
    q_emb = params["q_embed_table"][q_data].astype(f32)                      # (B, T, KD)

    # 'ordered' value embedding via gather (replaces one-hot (B,T,2Q) @ (2Q,VD) matmul)
    W_v = params["w_value"]                                                  # (2Q, VD)
    q_idx = jnp.clip(q_data - 1, 0, Q - 1)
    valid = (q_data > 0).astype(f32)[..., None]
    r_scale = (r_data.astype(f32) / float(K - 1))[..., None]
    v = valid * (W_v[q_idx] + r_scale * W_v[Q + q_idx]) + params["b_value"]  # (B, T, VD)

    erase_all = jax.nn.sigmoid(
        jnp.einsum("btv,vw->btw", v, params["w_erase"]) + params["b_erase"])
    add_all = jnp.tanh(
        jnp.einsum("btv,vw->btw", v, params["w_add"]) + params["b_add"])
    attn_all = jax.nn.softmax(
        jnp.einsum("btk,mk->btm", q_emb, params["key_memory"]), axis=-1)     # (B, T, M)

    # ---------------- Pallas scan: batch on lanes (pad to 128), time-major --------------
    B_BLK = 128
    if t_block is None:
        t_block = T if T <= 32 else 32
    T_pad = ((T + t_block - 1) // t_block) * t_block
    Bp = ((B + B_BLK - 1) // B_BLK) * B_BLK

    # TODO(synk): on v6e/v7x the two input slabs could be stored as bf16 and upcast in
    #             kernel to halve DMA bytes; kept f32 here for exact-parity simplicity.
    def bl_pad(x):  # (B, T, F) -> (T_pad, F, Bp); zero pads are read/write no-ops
        x = jnp.transpose(x.astype(f32), (1, 2, 0))
        return jnp.pad(x, ((0, T_pad - T), (0, 0), (0, Bp - B)))

    attn_tm = bl_pad(attn_all)                                               # (T_pad, M, Bp)
    ea_tm = bl_pad(jnp.concatenate([erase_all, add_all], axis=-1))           # (T_pad, 2VD, Bp)
    init_mv_bc = jnp.broadcast_to(
        params["init_value_memory"].astype(f32)[:, :, None], (M, VD, B_BLK))

    kernel = functools.partial(_dkvmn_scan_kernel, value_dim=VD, t_block=t_block)

    # NOTE: for very large B / t_block raise vmem_limit_bytes; defaults are ample here.
    reads_tm = pl.pallas_call(
        kernel,
        out_shape=jax.ShapeDtypeStruct((T_pad, VD, Bp), f32),
        grid_spec=pltpu.PrefetchScalarGridSpec(
            num_scalar_prefetch=0,
            grid=(Bp // B_BLK, T_pad // t_block),          # (batch blocks, time blocks)
            in_specs=[
                pl.BlockSpec((t_block, M, B_BLK), lambda bb, tb: (tb, 0, bb)),
                pl.BlockSpec((t_block, 2 * VD, B_BLK), lambda bb, tb: (tb, 0, bb)),
                pl.BlockSpec((M, VD, B_BLK), lambda bb, tb: (0, 0, 0)),
            ],
            out_specs=pl.BlockSpec((t_block, VD, B_BLK), lambda bb, tb: (tb, 0, bb)),
            scratch_shapes=[pltpu.VMEM((M, VD, B_BLK), f32)],
        ),
        compiler_params=pltpu.CompilerParams(
            # batch blocks are independent (megacore shard); memory state carries over time
            dimension_semantics=("parallel", "arbitrary")),
    )(attn_tm, ea_tm, init_mv_bc)

    reads = jnp.transpose(reads_tm[:T, :, :B], (2, 0, 1))                    # (B, T, VD)

    # ---------------- head: batched (B*T, .) GEMMs in XLA (hoisted out of the scan) -----
    W_s = params["w_summary"]                                                # (VD+KD, FD)
    summary = jnp.tanh(
        jnp.einsum("btv,vf->btf", reads, W_s[:VD])
        + jnp.einsum("btk,kf->btf", q_emb, W_s[VD:])
        + params["b_summary"])                                               # (B, T, FD)

    theta = (jnp.einsum("btf,f->bt", summary, params["w_theta"][0])
             + params["b_theta"][0, 0]) * float(cfg["ability_scale"])        # (B, T)

    betas = (jnp.einsum("btk,kc->btc", q_emb, params["w_beta"])
             + params["b_beta"])                                             # (B, T, K-1)

    W_d = params["w_discrim"]                                                # (1, FD+KD)
    alpha = jax.nn.softplus(
        jnp.einsum("btf,f->bt", summary, W_d[0, :FD])
        + jnp.einsum("btk,k->bt", q_emb, W_d[0, FD:])
        + params["b_discrim"][0, 0])                                         # (B, T)

    # CORAL head on IRT features = [theta, alpha, betas]
    irt = jnp.concatenate([theta[..., None], alpha[..., None], betas], axis=-1)  # (B,T,K+1)
    h1 = jax.nn.relu(jnp.einsum("bti,ih->bth", irt, params["w_coral1"])
                     + params["b_coral1"])                                   # (B, T, 64)
    h2 = jax.nn.relu(jnp.einsum("bth,hg->btg", h1, params["w_coral2"])
                     + params["b_coral2"])                                   # (B, T, 32)
    logits = (jnp.einsum("btg,g->bt", h2, params["w_coral_out"][0])[..., None]
              + params["b_coral_out"])                                       # (B, T, K-1)

    # CORN cumulative-product probabilities (vectorized, rows telescope to sum 1):
    #   probs[0] = 1-s0, probs[k] = (prod_{j<k} s_j)*(1-s_k), probs[K-1] = prod_j s_j
    sig = jax.nn.sigmoid(logits)
    cum = jnp.cumprod(sig, axis=-1)
    cum_excl = jnp.concatenate([jnp.ones_like(sig[..., :1]), cum[..., :-1]], axis=-1)
    probs = jnp.concatenate([cum_excl * (1.0 - sig), cum[..., -1:]], axis=-1)    # (B,T,K)

    return theta, betas, alpha, probs, logits


def init_params(key, *, n_questions, n_cats, memory_size, key_dim, value_dim,
                final_fc_dim, ability_scale):
    Q, K = n_questions, n_cats
    keys = jax.random.split(key, 16)

    def w(k, shape, scale=0.1):
        return (scale * jax.random.normal(k, shape)).astype(jnp.float32)

    return {
        "config": dict(n_questions=Q, n_cats=K, memory_size=memory_size,
                       key_dim=key_dim, value_dim=value_dim,
                       final_fc_dim=final_fc_dim, ability_scale=ability_scale),
        "q_embed_table": w(keys[0], (Q + 1, key_dim)),
        "key_memory": w(keys[1], (memory_size, key_dim)),
        "init_value_memory": w(keys[2], (memory_size, value_dim)),
        "w_value": w(keys[3], (2 * Q, value_dim)),
        "b_value": jnp.zeros((1, value_dim), jnp.float32),
        "w_erase": w(keys[4], (value_dim, value_dim)),
        "b_erase": jnp.zeros((1, value_dim), jnp.float32),
        "w_add": w(keys[5], (value_dim, value_dim)),
        "b_add": jnp.zeros((1, value_dim), jnp.float32),
        "w_summary": w(keys[6], (value_dim + key_dim, final_fc_dim)),
        "b_summary": jnp.zeros((1, final_fc_dim), jnp.float32),
        "w_theta": w(keys[7], (1, final_fc_dim)),
        "b_theta": jnp.zeros((1, 1), jnp.float32),
        "w_beta": w(keys[8], (key_dim, K - 1)),
        "b_beta": jnp.zeros((1, K - 1), jnp.float32),
        "w_discrim": w(keys[9], (1, final_fc_dim + key_dim)),
        "b_discrim": jnp.zeros((1, 1), jnp.float32),
        "w_coral1": w(keys[10], (2 + (K - 1), 64)),
        "b_coral1": jnp.zeros((1, 64), jnp.float32),
        "w_coral2": w(keys[11], (64, 32)),
        "b_coral2": jnp.zeros((1, 32), jnp.float32),
        "w_coral_out": w(keys[12], (1, 32)),
        "b_coral_out": jnp.zeros((1, K - 1), jnp.float32),
    }


if __name__ == "__main__":
    key = jax.random.PRNGKey(0)
    k_params, k_q, k_r = jax.random.split(key, 3)

    B, T = 4, 8          # batch, seq_len
    Q, K = 16, 4         # n_questions, n_cats
    params = init_params(k_params, n_questions=Q, n_cats=K, memory_size=16,
                         key_dim=32, value_dim=32, final_fc_dim=32,
                         ability_scale=2.0)

    q_data = jax.random.randint(k_q, (B, T), 1, Q + 1)   # question ids (0 = pad, excluded)
    r_data = jax.random.randint(k_r, (B, T), 0, K)       # response categories

    outs = improved_deep_gpcm_coral_forward(params, q_data, r_data)
    outs = jax.block_until_ready(outs)
    theta, betas, alpha, probs, logits = outs

    assert theta.shape == (B, T)
    assert betas.shape == (B, T, K - 1)
    assert alpha.shape == (B, T)
    assert probs.shape == (B, T, K)
    assert logits.shape == (B, T, K - 1)
    assert all(bool(jnp.all(jnp.isfinite(o))) for o in outs)
    # class probabilities sum to 1 by construction (telescoping CORN products)
    assert bool(jnp.allclose(jnp.sum(probs, axis=-1), 1.0, atol=1e-5))

    print("KERNEL_OK")
</pallas_src>

<mosaic_0001>
module attributes {stable_mosaic.version = 11 : i64} {
  func.func @_dkvmn_scan_kernel(%arg0: i32, %arg1: i32, %arg2: memref<8x16x128xf32, #tpu.memory_space<vmem>>, %arg3: memref<8x64x128xf32, #tpu.memory_space<vmem>>, %arg4: memref<16x32x128xf32, #tpu.memory_space<vmem>>, %arg5: memref<8x32x128xf32, #tpu.memory_space<vmem>>, %arg6: memref<16x32x128xf32, #tpu.memory_space<vmem>>) attributes {dimension_semantics = [#tpu.dimension_semantics<parallel>, #tpu.dimension_semantics<arbitrary>], iteration_bounds = array<i64: 1, 1>, scalar_prefetch = 0 : i64, scratch_operands = 1 : i64, tpu.core_type = #tpu.core_type<tc>, window_params = [{transform_indices = @transform_0, window_bounds = array<i64: 8, 16, 128>}, {transform_indices = @transform_1, window_bounds = array<i64: 8, 64, 128>}, {pipeline_mode = #tpu.pipeline_mode<synchronous>, transform_indices = @transform_2, window_bounds = array<i64: 16, 32, 128>}, {transform_indices = @transform_3, window_bounds = array<i64: 8, 32, 128>}]} {
    %c0_i32 = arith.constant 0 : i32
    %0 = arith.cmpi eq, %arg1, %c0_i32 : i32
    %1 = arith.extui %0 : i1 to i32
    %c0_i32_0 = arith.constant 0 : i32
    %2 = arith.cmpi ne, %1, %c0_i32_0 : i32
    scf.if %2 {
      %c0_112 = arith.constant 0 : index
      %c0_113 = arith.constant 0 : index
      %c0_114 = arith.constant 0 : index
      %243 = vector.load %arg4[%c0_112, %c0_113, %c0_114] : memref<16x32x128xf32, #tpu.memory_space<vmem>>, vector<16x32x128xf32>
      %c0_115 = arith.constant 0 : index
      %c0_116 = arith.constant 0 : index
      %c0_117 = arith.constant 0 : index
      %244 = vector.load %arg6[%c0_115, %c0_116, %c0_117] : memref<16x32x128xf32, #tpu.memory_space<vmem>>, vector<16x32x128xf32>
      tpu.vector_store %arg6[%c0_115, %c0_116, %c0_117], %243 {strides = array<i32>} : memref<16x32x128xf32, #tpu.memory_space<vmem>>, vector<16x32x128xf32>,
    } else {
    }
    %c0_i32_1 = arith.constant 0 : i32
    %3 = arith.index_cast %c0_i32_1 : i32 to index
    %c0 = arith.constant 0 : index
    %c0_2 = arith.constant 0 : index
    %4 = vector.load %arg2[%3, %c0, %c0_2] : memref<8x16x128xf32, #tpu.memory_space<vmem>>, vector<1x16x128xf32>
    %5 = vector.shape_cast %4 : vector<1x16x128xf32> to vector<16x128xf32>
    %6 = arith.index_cast %c0_i32_1 : i32 to index
    %c0_3 = arith.constant 0 : index
    %c0_4 = arith.constant 0 : index
    %7 = vector.load %arg3[%6, %c0_3, %c0_4] : memref<8x64x128xf32, #tpu.memory_space<vmem>>, vector<1x64x128xf32>
    %8 = vector.shape_cast %7 : vector<1x64x128xf32> to vector<64x128xf32>
    %9 = vector.extract_strided_slice %8 {offsets = [0, 0], sizes = [32, 128], strides = [1, 1]} : vector<64x128xf32> to vector<32x128xf32>
    %10 = vector.extract_strided_slice %8 {offsets = [32, 0], sizes = [32, 128], strides = [1, 1]} : vector<64x128xf32> to vector<32x128xf32>
    %c0_5 = arith.constant 0 : index
    %c0_6 = arith.constant 0 : index
    %c0_7 = arith.constant 0 : index
    %11 = vector.load %arg6[%c0_5, %c0_6, %c0_7] : memref<16x32x128xf32, #tpu.memory_space<vmem>>, vector<16x32x128xf32>
    %12 = vector.shape_cast %5 : vector<16x128xf32> to vector<16x1x128xf32>
    %13 = vector.broadcast %12 : vector<16x1x128xf32> to vector<16x32x128xf32>
    %14 = arith.mulf %13, %11 : vector<16x32x128xf32>
    %cst = arith.constant dense<0.000000e+00> : vector<32x128xf32>
    %15 = vector.multi_reduction <add>, %14, %cst [0] : vector<16x32x128xf32> to vector<32x128xf32>
    %16 = arith.index_cast %c0_i32_1 : i32 to index
    %c0_8 = arith.constant 0 : index
    %c0_9 = arith.constant 0 : index
    %17 = vector.load %arg5[%16, %c0_8, %c0_9] : memref<8x32x128xf32, #tpu.memory_space<vmem>>, vector<1x32x128xf32>
    %18 = vector.shape_cast %17 : vector<1x32x128xf32> to vector<32x128xf32>
    %19 = vector.shape_cast %15 : vector<32x128xf32> to vector<1x32x128xf32>
    tpu.vector_store %arg5[%16, %c0_8, %c0_9], %19 {strides = array<i32>} : memref<8x32x128xf32, #tpu.memory_space<vmem>>, vector<1x32x128xf32>,
    %20 = vector.shape_cast %9 : vector<32x128xf32> to vector<1x32x128xf32>
    %21 = vector.broadcast %12 : vector<16x1x128xf32> to vector<16x32x128xf32>
    %22 = vector.broadcast %20 : vector<1x32x128xf32> to vector<16x32x128xf32>
    %23 = arith.mulf %21, %22 : vector<16x32x128xf32>
    %cst_10 = arith.constant 1.000000e+00 : f32
    %24 = vector.broadcast %cst_10 : f32 to vector<16x32x128xf32>
    %25 = arith.subf %24, %23 : vector<16x32x128xf32>
    %26 = arith.mulf %11, %25 : vector<16x32x128xf32>
    %27 = vector.shape_cast %10 : vector<32x128xf32> to vector<1x32x128xf32>
    %28 = vector.broadcast %12 : vector<16x1x128xf32> to vector<16x32x128xf32>
    %29 = vector.broadcast %27 : vector<1x32x128xf32> to vector<16x32x128xf32>
    %30 = arith.mulf %28, %29 : vector<16x32x128xf32>
    %31 = arith.addf %26, %30 : vector<16x32x128xf32>
    %c0_11 = arith.constant 0 : index
    %c0_12 = arith.constant 0 : index
    %c0_13 = arith.constant 0 : index
    %32 = vector.load %arg6[%c0_11, %c0_12, %c0_13] : memref<16x32x128xf32, #tpu.memory_space<vmem>>, vector<16x32x128xf32>
    tpu.vector_store %arg6[%c0_11, %c0_12, %c0_13], %31 {strides = array<i32>} : memref<16x32x128xf32, #tpu.memory_space<vmem>>, vector<16x32x128xf32>,
    %c1_i32 = arith.constant 1 : i32
    %33 = arith.index_cast %c1_i32 : i32 to index
    %c0_14 = arith.constant 0 : index
    %c0_15 = arith.constant 0 : index
    %34 = vector.load %arg2[%33, %c0_14, %c0_15] : memref<8x16x128xf32, #tpu.memory_space<vmem>>, vector<1x16x128xf32>
    %35 = vector.shape_cast %34 : vector<1x16x128xf32> to vector<16x128xf32>
    %36 = arith.index_cast %c1_i32 : i32 to index
    %c0_16 = arith.constant 0 : index
    %c0_17 = arith.constant 0 : index
    %37 = vector.load %arg3[%36, %c0_16, %c0_17] : memref<8x64x128xf32, #tpu.memory_space<vmem>>, vector<1x64x128xf32>
    %38 = vector.shape_cast %37 : vector<1x64x128xf32> to vector<64x128xf32>
    %39 = vector.extract_strided_slice %38 {offsets = [0, 0], sizes = [32, 128], strides = [1, 1]} : vector<64x128xf32> to vector<32x128xf32>
    %40 = vector.extract_strided_slice %38 {offsets = [32, 0], sizes = [32, 128], strides = [1, 1]} : vector<64x128xf32> to vector<32x128xf32>
    %c0_18 = arith.constant 0 : index
    %c0_19 = arith.constant 0 : index
    %c0_20 = arith.constant 0 : index
    %41 = vector.load %arg6[%c0_18, %c0_19, %c0_20] : memref<16x32x128xf32, #tpu.memory_space<vmem>>, vector<16x32x128xf32>
    %42 = vector.shape_cast %35 : vector<16x128xf32> to vector<16x1x128xf32>
    %43 = vector.broadcast %42 : vector<16x1x128xf32> to vector<16x32x128xf32>
    %44 = arith.mulf %43, %41 : vector<16x32x128xf32>
    %cst_21 = arith.constant dense<0.000000e+00> : vector<32x128xf32>
    %45 = vector.multi_reduction <add>, %44, %cst_21 [0] : vector<16x32x128xf32> to vector<32x128xf32>
    %46 = arith.index_cast %c1_i32 : i32 to index
    %c0_22 = arith.constant 0 : index
    %c0_23 = arith.constant 0 : index
    %47 = vector.load %arg5[%46, %c0_22, %c0_23] : memref<8x32x128xf32, #tpu.memory_space<vmem>>, vector<1x32x128xf32>
    %48 = vector.shape_cast %47 : vector<1x32x128xf32> to vector<32x128xf32>
    %49 = vector.shape_cast %45 : vector<32x128xf32> to vector<1x32x128xf32>
    tpu.vector_store %arg5[%46, %c0_22, %c0_23], %49 {strides = array<i32>} : memref<8x32x128xf32, #tpu.memory_space<vmem>>, vector<1x32x128xf32>,
    %50 = vector.shape_cast %39 : vector<32x128xf32> to vector<1x32x128xf32>
    %51 = vector.broadcast %42 : vector<16x1x128xf32> to vector<16x32x128xf32>
    %52 = vector.broadcast %50 : vector<1x32x128xf32> to vector<16x32x128xf32>
    %53 = arith.mulf %51, %52 : vector<16x32x128xf32>
    %cst_24 = arith.constant 1.000000e+00 : f32
    %54 = vector.broadcast %cst_24 : f32 to vector<16x32x128xf32>
    %55 = arith.subf %54, %53 : vector<16x32x128xf32>
    %56 = arith.mulf %41, %55 : vector<16x32x128xf32>
    %57 = vector.shape_cast %40 : vector<32x128xf32> to vector<1x32x128xf32>
    %58 = vector.broadcast %42 : vector<16x1x128xf32> to vector<16x32x128xf32>
    %59 = vector.broadcast %57 : vector<1x32x128xf32> to vector<16x32x128xf32>
    %60 = arith.mulf %58, %59 : vector<16x32x128xf32>
    %61 = arith.addf %56, %60 : vector<16x32x128xf32>
    %c0_25 = arith.constant 0 : index
    %c0_26 = arith.constant 0 : index
    %c0_27 = arith.constant 0 : index
    %62 = vector.load %arg6[%c0_25, %c0_26, %c0_27] : memref<16x32x128xf32, #tpu.memory_space<vmem>>, vector<16x32x128xf32>
    tpu.vector_store %arg6[%c0_25, %c0_26, %c0_27], %61 {strides = array<i32>} : memref<16x32x128xf32, #tpu.memory_space<vmem>>, vector<16x32x128xf32>,
    %c2_i32 = arith.constant 2 : i32
    %63 = arith.index_cast %c2_i32 : i32 to index
    %c0_28 = arith.constant 0 : index
    %c0_29 = arith.constant 0 : index
    %64 = vector.load %arg2[%63, %c0_28, %c0_29] : memref<8x16x128xf32, #tpu.memory_space<vmem>>, vector<1x16x128xf32>
    %65 = vector.shape_cast %64 : vector<1x16x128xf32> to vector<16x128xf32>
    %66 = arith.index_cast %c2_i32 : i32 to index
    %c0_30 = arith.constant 0 : index
    %c0_31 = arith.constant 0 : index
    %67 = vector.load %arg3[%66, %c0_30, %c0_31] : memref<8x64x128xf32, #tpu.memory_space<vmem>>, vector<1x64x128xf32>
    %68 = vector.shape_cast %67 : vector<1x64x128xf32> to vector<64x128xf32>
    %69 = vector.extract_strided_slice %68 {offsets = [0, 0], sizes = [32, 128], strides = [1, 1]} : vector<64x128xf32> to vector<32x128xf32>
    %70 = vector.extract_strided_slice %68 {offsets = [32, 0], sizes = [32, 128], strides = [1, 1]} : vector<64x128xf32> to vector<32x128xf32>
    %c0_32 = arith.constant 0 : index
    %c0_33 = arith.constant 0 : index
    %c0_34 = arith.constant 0 : index
    %71 = vector.load %arg6[%c0_32, %c0_33, %c0_34] : memref<16x32x128xf32, #tpu.memory_space<vmem>>, vector<16x32x128xf32>
    %72 = vector.shape_cast %65 : vector<16x128xf32> to vector<16x1x128xf32>
    %73 = vector.broadcast %72 : vector<16x1x128xf32> to vector<16x32x128xf32>
    %74 = arith.mulf %73, %71 : vector<16x32x128xf32>
    %cst_35 = arith.constant dense<0.000000e+00> : vector<32x128xf32>
    %75 = vector.multi_reduction <add>, %74, %cst_35 [0] : vector<16x32x128xf32> to vector<32x128xf32>
    %76 = arith.index_cast %c2_i32 : i32 to index
    %c0_36 = arith.constant 0 : index
    %c0_37 = arith.constant 0 : index
    %77 = vector.load %arg5[%76, %c0_36, %c0_37] : memref<8x32x128xf32, #tpu.memory_space<vmem>>, vector<1x32x128xf32>
    %78 = vector.shape_cast %77 : vector<1x32x128xf32> to vector<32x128xf32>
    %79 = vector.shape_cast %75 : vector<32x128xf32> to vector<1x32x128xf32>
    tpu.vector_store %arg5[%76, %c0_36, %c0_37], %79 {strides = array<i32>} : memref<8x32x128xf32, #tpu.memory_space<vmem>>, vector<1x32x128xf32>,
    %80 = vector.shape_cast %69 : vector<32x128xf32> to vector<1x32x128xf32>
    %81 = vector.broadcast %72 : vector<16x1x128xf32> to vector<16x32x128xf32>
    %82 = vector.broadcast %80 : vector<1x32x128xf32> to vector<16x32x128xf32>
    %83 = arith.mulf %81, %82 : vector<16x32x128xf32>
    %cst_38 = arith.constant 1.000000e+00 : f32
    %84 = vector.broadcast %cst_38 : f32 to vector<16x32x128xf32>
    %85 = arith.subf %84, %83 : vector<16x32x128xf32>
    %86 = arith.mulf %71, %85 : vector<16x32x128xf32>
    %87 = vector.shape_cast %70 : vector<32x128xf32> to vector<1x32x128xf32>
    %88 = vector.broadcast %72 : vector<16x1x128xf32> to vector<16x32x128xf32>
    %89 = vector.broadcast %87 : vector<1x32x128xf32> to vector<16x32x128xf32>
    %90 = arith.mulf %88, %89 : vector<16x32x128xf32>
    %91 = arith.addf %86, %90 : vector<16x32x128xf32>
    %c0_39 = arith.constant 0 : index
    %c0_40 = arith.constant 0 : index
    %c0_41 = arith.constant 0 : index
    %92 = vector.load %arg6[%c0_39, %c0_40, %c0_41] : memref<16x32x128xf32, #tpu.memory_space<vmem>>, vector<16x32x128xf32>
    tpu.vector_store %arg6[%c0_39, %c0_40, %c0_41], %91 {strides = array<i32>} : memref<16x32x128xf32, #tpu.memory_space<vmem>>, vector<16x32x128xf32>,
    %c3_i32 = arith.constant 3 : i32
    %93 = arith.index_cast %c3_i32 : i32 to index
    %c0_42 = arith.constant 0 : index
    %c0_43 = arith.constant 0 : index
    %94 = vector.load %arg2[%93, %c0_42, %c0_43] : memref<8x16x128xf32, #tpu.memory_space<vmem>>, vector<1x16x128xf32>
    %95 = vector.shape_cast %94 : vector<1x16x128xf32> to vector<16x128xf32>
    %96 = arith.index_cast %c3_i32 : i32 to index
    %c0_44 = arith.constant 0 : index
    %c0_45 = arith.constant 0 : index
    %97 = vector.load %arg3[%96, %c0_44, %c0_45] : memref<8x64x128xf32, #tpu.memory_space<vmem>>, vector<1x64x128xf32>
    %98 = vector.shape_cast %97 : vector<1x64x128xf32> to vector<64x128xf32>
    %99 = vector.extract_strided_slice %98 {offsets = [0, 0], sizes = [32, 128], strides = [1, 1]} : vector<64x128xf32> to vector<32x128xf32>
    %100 = vector.extract_strided_slice %98 {offsets = [32, 0], sizes = [32, 128], strides = [1, 1]} : vector<64x128xf32> to vector<32x128xf32>
    %c0_46 = arith.constant 0 : index
    %c0_47 = arith.constant 0 : index
    %c0_48 = arith.constant 0 : index
    %101 = vector.load %arg6[%c0_46, %c0_47, %c0_48] : memref<16x32x128xf32, #tpu.memory_space<vmem>>, vector<16x32x128xf32>
    %102 = vector.shape_cast %95 : vector<16x128xf32> to vector<16x1x128xf32>
    %103 = vector.broadcast %102 : vector<16x1x128xf32> to vector<16x32x128xf32>
    %104 = arith.mulf %103, %101 : vector<16x32x128xf32>
    %cst_49 = arith.constant dense<0.000000e+00> : vector<32x128xf32>
    %105 = vector.multi_reduction <add>, %104, %cst_49 [0] : vector<16x32x128xf32> to vector<32x128xf32>
    %106 = arith.index_cast %c3_i32 : i32 to index
    %c0_50 = arith.constant 0 : index
    %c0_51 = arith.constant 0 : index
    %107 = vector.load %arg5[%106, %c0_50, %c0_51] : memref<8x32x128xf32, #tpu.memory_space<vmem>>, vector<1x32x128xf32>
    %108 = vector.shape_cast %107 : vector<1x32x128xf32> to vector<32x128xf32>
    %109 = vector.shape_cast %105 : vector<32x128xf32> to vector<1x32x128xf32>
    tpu.vector_store %arg5[%106, %c0_50, %c0_51], %109 {strides = array<i32>} : memref<8x32x128xf32, #tpu.memory_space<vmem>>, vector<1x32x128xf32>,
    %110 = vector.shape_cast %99 : vector<32x128xf32> to vector<1x32x128xf32>
    %111 = vector.broadcast %102 : vector<16x1x128xf32> to vector<16x32x128xf32>
    %112 = vector.broadcast %110 : vector<1x32x128xf32> to vector<16x32x128xf32>
    %113 = arith.mulf %111, %112 : vector<16x32x128xf32>
    %cst_52 = arith.constant 1.000000e+00 : f32
    %114 = vector.broadcast %cst_52 : f32 to vector<16x32x128xf32>
    %115 = arith.subf %114, %113 : vector<16x32x128xf32>
    %116 = arith.mulf %101, %115 : vector<16x32x128xf32>
    %117 = vector.shape_cast %100 : vector<32x128xf32> to vector<1x32x128xf32>
    %118 = vector.broadcast %102 : vector<16x1x128xf32> to vector<16x32x128xf32>
    %119 = vector.broadcast %117 : vector<1x32x128xf32> to vector<16x32x128xf32>
    %120 = arith.mulf %118, %119 : vector<16x32x128xf32>
    %121 = arith.addf %116, %120 : vector<16x32x128xf32>
    %c0_53 = arith.constant 0 : index
    %c0_54 = arith.constant 0 : index
    %c0_55 = arith.constant 0 : index
    %122 = vector.load %arg6[%c0_53, %c0_54, %c0_55] : memref<16x32x128xf32, #tpu.memory_space<vmem>>, vector<16x32x128xf32>
    tpu.vector_store %arg6[%c0_53, %c0_54, %c0_55], %121 {strides = array<i32>} : memref<16x32x128xf32, #tpu.memory_space<vmem>>, vector<16x32x128xf32>,
    %c4_i32 = arith.constant 4 : i32
    %123 = arith.index_cast %c4_i32 : i32 to index
    %c0_56 = arith.constant 0 : index
    %c0_57 = arith.constant 0 : index
    %124 = vector.load %arg2[%123, %c0_56, %c0_57] : memref<8x16x128xf32, #tpu.memory_space<vmem>>, vector<1x16x128xf32>
    %125 = vector.shape_cast %124 : vector<1x16x128xf32> to vector<16x128xf32>
    %126 = arith.index_cast %c4_i32 : i32 to index
    %c0_58 = arith.constant 0 : index
    %c0_59 = arith.constant 0 : index
    %127 = vector.load %arg3[%126, %c0_58, %c0_59] : memref<8x64x128xf32, #tpu.memory_space<vmem>>, vector<1x64x128xf32>
    %128 = vector.shape_cast %127 : vector<1x64x128xf32> to vector<64x128xf32>
    %129 = vector.extract_strided_slice %128 {offsets = [0, 0], sizes = [32, 128], strides = [1, 1]} : vector<64x128xf32> to vector<32x128xf32>
    %130 = vector.extract_strided_slice %128 {offsets = [32, 0], sizes = [32, 128], strides = [1, 1]} : vector<64x128xf32> to vector<32x128xf32>
    %c0_60 = arith.constant 0 : index
    %c0_61 = arith.constant 0 : index
    %c0_62 = arith.constant 0 : index
    %131 = vector.load %arg6[%c0_60, %c0_61, %c0_62] : memref<16x32x128xf32, #tpu.memory_space<vmem>>, vector<16x32x128xf32>
    %132 = vector.shape_cast %125 : vector<16x128xf32> to vector<16x1x128xf32>
    %133 = vector.broadcast %132 : vector<16x1x128xf32> to vector<16x32x128xf32>
    %134 = arith.mulf %133, %131 : vector<16x32x128xf32>
    %cst_63 = arith.constant dense<0.000000e+00> : vector<32x128xf32>
    %135 = vector.multi_reduction <add>, %134, %cst_63 [0] : vector<16x32x128xf32> to vector<32x128xf32>
    %136 = arith.index_cast %c4_i32 : i32 to index
    %c0_64 = arith.constant 0 : index
    %c0_65 = arith.constant 0 : index
    %137 = vector.load %arg5[%136, %c0_64, %c0_65] : memref<8x32x128xf32, #tpu.memory_space<vmem>>, vector<1x32x128xf32>
    %138 = vector.shape_cast %137 : vector<1x32x128xf32> to vector<32x128xf32>
    %139 = vector.shape_cast %135 : vector<32x128xf32> to vector<1x32x128xf32>
    tpu.vector_store %arg5[%136, %c0_64, %c0_65], %139 {strides = array<i32>} : memref<8x32x128xf32, #tpu.memory_space<vmem>>, vector<1x32x128xf32>,
    %140 = vector.shape_cast %129 : vector<32x128xf32> to vector<1x32x128xf32>
    %141 = vector.broadcast %132 : vector<16x1x128xf32> to vector<16x32x128xf32>
    %142 = vector.broadcast %140 : vector<1x32x128xf32> to vector<16x32x128xf32>
    %143 = arith.mulf %141, %142 : vector<16x32x128xf32>
    %cst_66 = arith.constant 1.000000e+00 : f32
    %144 = vector.broadcast %cst_66 : f32 to vector<16x32x128xf32>
    %145 = arith.subf %144, %143 : vector<16x32x128xf32>
    %146 = arith.mulf %131, %145 : vector<16x32x128xf32>
    %147 = vector.shape_cast %130 : vector<32x128xf32> to vector<1x32x128xf32>
    %148 = vector.broadcast %132 : vector<16x1x128xf32> to vector<16x32x128xf32>
    %149 = vector.broadcast %147 : vector<1x32x128xf32> to vector<16x32x128xf32>
    %150 = arith.mulf %148, %149 : vector<16x32x128xf32>
    %151 = arith.addf %146, %150 : vector<16x32x128xf32>
    %c0_67 = arith.constant 0 : index
    %c0_68 = arith.constant 0 : index
    %c0_69 = arith.constant 0 : index
    %152 = vector.load %arg6[%c0_67, %c0_68, %c0_69] : memref<16x32x128xf32, #tpu.memory_space<vmem>>, vector<16x32x128xf32>
    tpu.vector_store %arg6[%c0_67, %c0_68, %c0_69], %151 {strides = array<i32>} : memref<16x32x128xf32, #tpu.memory_space<vmem>>, vector<16x32x128xf32>,
    %c5_i32 = arith.constant 5 : i32
    %153 = arith.index_cast %c5_i32 : i32 to index
    %c0_70 = arith.constant 0 : index
    %c0_71 = arith.constant 0 : index
    %154 = vector.load %arg2[%153, %c0_70, %c0_71] : memref<8x16x128xf32, #tpu.memory_space<vmem>>, vector<1x16x128xf32>
    %155 = vector.shape_cast %154 : vector<1x16x128xf32> to vector<16x128xf32>
    %156 = arith.index_cast %c5_i32 : i32 to index
    %c0_72 = arith.constant 0 : index
    %c0_73 = arith.constant 0 : index
    %157 = vector.load %arg3[%156, %c0_72, %c0_73] : memref<8x64x128xf32, #tpu.memory_space<vmem>>, vector<1x64x128xf32>
    %158 = vector.shape_cast %157 : vector<1x64x128xf32> to vector<64x128xf32>
    %159 = vector.extract_strided_slice %158 {offsets = [0, 0], sizes = [32, 128], strides = [1, 1]} : vector<64x128xf32> to vector<32x128xf32>
    %160 = vector.extract_strided_slice %158 {offsets = [32, 0], sizes = [32, 128], strides = [1, 1]} : vector<64x128xf32> to vector<32x128xf32>
    %c0_74 = arith.constant 0 : index
    %c0_75 = arith.constant 0 : index
    %c0_76 = arith.constant 0 : index
    %161 = vector.load %arg6[%c0_74, %c0_75, %c0_76] : memref<16x32x128xf32, #tpu.memory_space<vmem>>, vector<16x32x128xf32>
    %162 = vector.shape_cast %155 : vector<16x128xf32> to vector<16x1x128xf32>
    %163 = vector.broadcast %162 : vector<16x1x128xf32> to vector<16x32x128xf32>
    %164 = arith.mulf %163, %161 : vector<16x32x128xf32>
    %cst_77 = arith.constant dense<0.000000e+00> : vector<32x128xf32>
    %165 = vector.multi_reduction <add>, %164, %cst_77 [0] : vector<16x32x128xf32> to vector<32x128xf32>
    %166 = arith.index_cast %c5_i32 : i32 to index
    %c0_78 = arith.constant 0 : index
    %c0_79 = arith.constant 0 : index
    %167 = vector.load %arg5[%166, %c0_78, %c0_79] : memref<8x32x128xf32, #tpu.memory_space<vmem>>, vector<1x32x128xf32>
    %168 = vector.shape_cast %167 : vector<1x32x128xf32> to vector<32x128xf32>
    %169 = vector.shape_cast %165 : vector<32x128xf32> to vector<1x32x128xf32>
    tpu.vector_store %arg5[%166, %c0_78, %c0_79], %169 {strides = array<i32>} : memref<8x32x128xf32, #tpu.memory_space<vmem>>, vector<1x32x128xf32>,
    %170 = vector.shape_cast %159 : vector<32x128xf32> to vector<1x32x128xf32>
    %171 = vector.broadcast %162 : vector<16x1x128xf32> to vector<16x32x128xf32>
    %172 = vector.broadcast %170 : vector<1x32x128xf32> to vector<16x32x128xf32>
    %173 = arith.mulf %171, %172 : vector<16x32x128xf32>
    %cst_80 = arith.constant 1.000000e+00 : f32
    %174 = vector.broadcast %cst_80 : f32 to vector<16x32x128xf32>
    %175 = arith.subf %174, %173 : vector<16x32x128xf32>
    %176 = arith.mulf %161, %175 : vector<16x32x128xf32>
    %177 = vector.shape_cast %160 : vector<32x128xf32> to vector<1x32x128xf32>
    %178 = vector.broadcast %162 : vector<16x1x128xf32> to vector<16x32x128xf32>
    %179 = vector.broadcast %177 : vector<1x32x128xf32> to vector<16x32x128xf32>
    %180 = arith.mulf %178, %179 : vector<16x32x128xf32>
    %181 = arith.addf %176, %180 : vector<16x32x128xf32>
    %c0_81 = arith.constant 0 : index
    %c0_82 = arith.constant 0 : index
    %c0_83 = arith.constant 0 : index
    %182 = vector.load %arg6[%c0_81, %c0_82, %c0_83] : memref<16x32x128xf32, #tpu.memory_space<vmem>>, vector<16x32x128xf32>
    tpu.vector_store %arg6[%c0_81, %c0_82, %c0_83], %181 {strides = array<i32>} : memref<16x32x128xf32, #tpu.memory_space<vmem>>, vector<16x32x128xf32>,
    %c6_i32 = arith.constant 6 : i32
    %183 = arith.index_cast %c6_i32 : i32 to index
    %c0_84 = arith.constant 0 : index
    %c0_85 = arith.constant 0 : index
    %184 = vector.load %arg2[%183, %c0_84, %c0_85] : memref<8x16x128xf32, #tpu.memory_space<vmem>>, vector<1x16x128xf32>
    %185 = vector.shape_cast %184 : vector<1x16x128xf32> to vector<16x128xf32>
    %186 = arith.index_cast %c6_i32 : i32 to index
    %c0_86 = arith.constant 0 : index
    %c0_87 = arith.constant 0 : index
    %187 = vector.load %arg3[%186, %c0_86, %c0_87] : memref<8x64x128xf32, #tpu.memory_space<vmem>>, vector<1x64x128xf32>
    %188 = vector.shape_cast %187 : vector<1x64x128xf32> to vector<64x128xf32>
    %189 = vector.extract_strided_slice %188 {offsets = [0, 0], sizes = [32, 128], strides = [1, 1]} : vector<64x128xf32> to vector<32x128xf32>
    %190 = vector.extract_strided_slice %188 {offsets = [32, 0], sizes = [32, 128], strides = [1, 1]} : vector<64x128xf32> to vector<32x128xf32>
    %c0_88 = arith.constant 0 : index
    %c0_89 = arith.constant 0 : index
    %c0_90 = arith.constant 0 : index
    %191 = vector.load %arg6[%c0_88, %c0_89, %c0_90] : memref<16x32x128xf32, #tpu.memory_space<vmem>>, vector<16x32x128xf32>
    %192 = vector.shape_cast %185 : vector<16x128xf32> to vector<16x1x128xf32>
    %193 = vector.broadcast %192 : vector<16x1x128xf32> to vector<16x32x128xf32>
    %194 = arith.mulf %193, %191 : vector<16x32x128xf32>
    %cst_91 = arith.constant dense<0.000000e+00> : vector<32x128xf32>
    %195 = vector.multi_reduction <add>, %194, %cst_91 [0] : vector<16x32x128xf32> to vector<32x128xf32>
    %196 = arith.index_cast %c6_i32 : i32 to index
    %c0_92 = arith.constant 0 : index
    %c0_93 = arith.constant 0 : index
    %197 = vector.load %arg5[%196, %c0_92, %c0_93] : memref<8x32x128xf32, #tpu.memory_space<vmem>>, vector<1x32x128xf32>
    %198 = vector.shape_cast %197 : vector<1x32x128xf32> to vector<32x128xf32>
    %199 = vector.shape_cast %195 : vector<32x128xf32> to vector<1x32x128xf32>
    tpu.vector_store %arg5[%196, %c0_92, %c0_93], %199 {strides = array<i32>} : memref<8x32x128xf32, #tpu.memory_space<vmem>>, vector<1x32x128xf32>,
    %200 = vector.shape_cast %189 : vector<32x128xf32> to vector<1x32x128xf32>
    %201 = vector.broadcast %192 : vector<16x1x128xf32> to vector<16x32x128xf32>
    %202 = vector.broadcast %200 : vector<1x32x128xf32> to vector<16x32x128xf32>
    %203 = arith.mulf %201, %202 : vector<16x32x128xf32>
    %cst_94 = arith.constant 1.000000e+00 : f32
    %204 = vector.broadcast %cst_94 : f32 to vector<16x32x128xf32>
    %205 = arith.subf %204, %203 : vector<16x32x128xf32>
    %206 = arith.mulf %191, %205 : vector<16x32x128xf32>
    %207 = vector.shape_cast %190 : vector<32x128xf32> to vector<1x32x128xf32>
    %208 = vector.broadcast %192 : vector<16x1x128xf32> to vector<16x32x128xf32>
    %209 = vector.broadcast %207 : vector<1x32x128xf32> to vector<16x32x128xf32>
    %210 = arith.mulf %208, %209 : vector<16x32x128xf32>
    %211 = arith.addf %206, %210 : vector<16x32x128xf32>
    %c0_95 = arith.constant 0 : index
    %c0_96 = arith.constant 0 : index
    %c0_97 = arith.constant 0 : index
    %212 = vector.load %arg6[%c0_95, %c0_96, %c0_97] : memref<16x32x128xf32, #tpu.memory_space<vmem>>, vector<16x32x128xf32>
    tpu.vector_store %arg6[%c0_95, %c0_96, %c0_97], %211 {strides = array<i32>} : memref<16x32x128xf32, #tpu.memory_space<vmem>>, vector<16x32x128xf32>,
    %c7_i32 = arith.constant 7 : i32
    %213 = arith.index_cast %c7_i32 : i32 to index
    %c0_98 = arith.constant 0 : index
    %c0_99 = arith.constant 0 : index
    %214 = vector.load %arg2[%213, %c0_98, %c0_99] : memref<8x16x128xf32, #tpu.memory_space<vmem>>, vector<1x16x128xf32>
    %215 = vector.shape_cast %214 : vector<1x16x128xf32> to vector<16x128xf32>
    %216 = arith.index_cast %c7_i32 : i32 to index
    %c0_100 = arith.constant 0 : index
    %c0_101 = arith.constant 0 : index
    %217 = vector.load %arg3[%216, %c0_100, %c0_101] : memref<8x64x128xf32, #tpu.memory_space<vmem>>, vector<1x64x128xf32>
    %218 = vector.shape_cast %217 : vector<1x64x128xf32> to vector<64x128xf32>
    %219 = vector.extract_strided_slice %218 {offsets = [0, 0], sizes = [32, 128], strides = [1, 1]} : vector<64x128xf32> to vector<32x128xf32>
    %220 = vector.extract_strided_slice %218 {offsets = [32, 0], sizes = [32, 128], strides = [1, 1]} : vector<64x128xf32> to vector<32x128xf32>
    %c0_102 = arith.constant 0 : index
    %c0_103 = arith.constant 0 : index
    %c0_104 = arith.constant 0 : index
    %221 = vector.load %arg6[%c0_102, %c0_103, %c0_104] : memref<16x32x128xf32, #tpu.memory_space<vmem>>, vector<16x32x128xf32>
    %222 = vector.shape_cast %215 : vector<16x128xf32> to vector<16x1x128xf32>
    %223 = vector.broadcast %222 : vector<16x1x128xf32> to vector<16x32x128xf32>
    %224 = arith.mulf %223, %221 : vector<16x32x128xf32>
    %cst_105 = arith.constant dense<0.000000e+00> : vector<32x128xf32>
    %225 = vector.multi_reduction <add>, %224, %cst_105 [0] : vector<16x32x128xf32> to vector<32x128xf32>
    %226 = arith.index_cast %c7_i32 : i32 to index
    %c0_106 = arith.constant 0 : index
    %c0_107 = arith.constant 0 : index
    %227 = vector.load %arg5[%226, %c0_106, %c0_107] : memref<8x32x128xf32, #tpu.memory_space<vmem>>, vector<1x32x128xf32>
    %228 = vector.shape_cast %227 : vector<1x32x128xf32> to vector<32x128xf32>
    %229 = vector.shape_cast %225 : vector<32x128xf32> to vector<1x32x128xf32>
    tpu.vector_store %arg5[%226, %c0_106, %c0_107], %229 {strides = array<i32>} : memref<8x32x128xf32, #tpu.memory_space<vmem>>, vector<1x32x128xf32>,
    %230 = vector.shape_cast %219 : vector<32x128xf32> to vector<1x32x128xf32>
    %231 = vector.broadcast %222 : vector<16x1x128xf32> to vector<16x32x128xf32>
    %232 = vector.broadcast %230 : vector<1x32x128xf32> to vector<16x32x128xf32>
    %233 = arith.mulf %231, %232 : vector<16x32x128xf32>
    %cst_108 = arith.constant 1.000000e+00 : f32
    %234 = vector.broadcast %cst_108 : f32 to vector<16x32x128xf32>
    %235 = arith.subf %234, %233 : vector<16x32x128xf32>
    %236 = arith.mulf %221, %235 : vector<16x32x128xf32>
    %237 = vector.shape_cast %220 : vector<32x128xf32> to vector<1x32x128xf32>
    %238 = vector.broadcast %222 : vector<16x1x128xf32> to vector<16x32x128xf32>
    %239 = vector.broadcast %237 : vector<1x32x128xf32> to vector<16x32x128xf32>
    %240 = arith.mulf %238, %239 : vector<16x32x128xf32>
    %241 = arith.addf %236, %240 : vector<16x32x128xf32>
    %c0_109 = arith.constant 0 : index
    %c0_110 = arith.constant 0 : index
    %c0_111 = arith.constant 0 : index
    %242 = vector.load %arg6[%c0_109, %c0_110, %c0_111] : memref<16x32x128xf32, #tpu.memory_space<vmem>>, vector<16x32x128xf32>
    tpu.vector_store %arg6[%c0_109, %c0_110, %c0_111], %241 {strides = array<i32>} : memref<16x32x128xf32, #tpu.memory_space<vmem>>, vector<16x32x128xf32>,
    %c8_i32 = arith.constant 8 : i32
    return
  }
  func.func @transform_0(%arg0: i32, %arg1: i32) -> (i32, i32, i32) {
    %c0_i32 = arith.constant 0 : i32
    %c0_i32_0 = arith.constant 0 : i32
    return %arg1, %c0_i32, %arg0 : i32, i32, i32
  }
  func.func @transform_1(%arg0: i32, %arg1: i32) -> (i32, i32, i32) {
    %c0_i32 = arith.constant 0 : i32
    %c0_i32_0 = arith.constant 0 : i32
    return %arg1, %c0_i32, %arg0 : i32, i32, i32
  }
  func.func @transform_2(%arg0: i32, %arg1: i32) -> (i32, i32, i32) {
    %c0_i32 = arith.constant 0 : i32
    %c0_i32_0 = arith.constant 0 : i32
    %c0_i32_1 = arith.constant 0 : i32
    %c0_i32_2 = arith.constant 0 : i32
    return %c0_i32, %c0_i32_0, %c0_i32_1 : i32, i32, i32
  }
  func.func @transform_3(%arg0: i32, %arg1: i32) -> (i32, i32, i32) {
    %c0_i32 = arith.constant 0 : i32
    %c0_i32_0 = arith.constant 0 : i32
    return %arg1, %c0_i32, %arg0 : i32, i32, i32
  }
}

</mosaic_0001>

<llo_original>
// kernel: tpu_custom_call.1
$region0: #{tpu_custom_call.1}
  #allocation0 [shape = 'u32[]', space=smem, size = 0x4, offset = 0x4, fixed_abs, tag = 'smem constant byte address 0x4 - core index']
  #allocation1 [shape = 'u32[72,128]{1,0:T(1,128)}', space=vmem, size = 0x9000, scoped, tag = 'internal scratch']
  #allocation2 [shape = 'f32[16,32,128]{2,1,0:T(8,128)}', space=vmem, size = 0x40000, scoped, tag = 'scratch operand']
  %s0 = inlined_call_operand.hbm [shape: f32[8,16,128], index: 0, kind: input, shape index: {}]
  %s1 = inlined_call_operand.hbm [shape: f32[8,64,128], index: 1, kind: input, shape index: {}]
  %s2 = inlined_call_operand.hbm [shape: f32[16,32,128], index: 2, kind: input, shape index: {}]
  %s3 = inlined_call_operand.hbm [shape: f32[8,32,128], index: 3, kind: output, shape index: {}]
  %s4 = sld [smem:[#allocation0]]
  $region38: #{tpu_custom_call.1} parent=0
    _
  %s6 = ssub.s32 1, %s4
  %s7 = scalar_select 0, %s6, %s4
  $region1: #{tpu_custom_call.1} parent=0
    #allocation3 [shape = 'u8[65536]{0}', space=vmem, size = 0x10000, scoped, tag = 'input window, operand 0, single buffered']
    #allocation4 [shape = 's32[1]{0}', space=sflag, size = 0x4, scoped, tag = 'scoped memory for tpu_custom_call.1']
    #allocation5 [shape = 's32[1]{0}', space=sflag, size = 0x4, scoped, tag = 'scoped memory for tpu_custom_call.1']
    #allocation6 [shape = 'u8[262144]{0}', space=vmem, size = 0x40000, scoped, tag = 'input window, operand 1, single buffered']
    #allocation7 [shape = 's32[1]{0}', space=sflag, size = 0x4, scoped, tag = 'scoped memory for tpu_custom_call.1']
    #allocation8 [shape = 'u8[262144]{0}', space=vmem, size = 0x40000, scoped, tag = 'input window, operand 2, single buffered']
    #allocation9 [shape = 'u8[131072]{0}', space=vmem, size = 0x20000, scoped, tag = 'output window, operand 0, single buffered']
    %8 = vsyncpa [#allocation4], 0
    %9 = vsyncpa [#allocation7], 0
    %10 = vsyncpa [#allocation5], 0
    // Predicated region
    $region2: #{tpu_custom_call.1} parent=1 // pred_check
      _
    $region3: #{tpu_custom_call.1} parent=1 // pred_check_branch
      %12 = sbr.rel (0) target = $region5
    $region4: #{tpu_custom_call.1} parent=1 // pred_region
      %14 = vsyncadd [#allocation4], 0
      %s15 = sshll.u32 %s0, 4
      %s16 = int_to_ptr.hbm [resolvable:$true] %s15
      %s17 = sshll.u32 [#allocation3], 4
      %s18 = int_to_ptr.vmem [resolvable:$true] %s17
      %23 = dma.hbm_to_vmem [thread:$0]  %s16, 2048, %s18, [#allocation4], 128, 128, 8
    $region5: #{tpu_custom_call.1} parent=1 // pred_fallthru
      _
    // Predicated region
    $region6: #{tpu_custom_call.1} parent=1 // pred_check
      _
    $region7: #{tpu_custom_call.1} parent=1 // pred_check_branch
      %25 = sbr.rel (0) target = $region9
    $region8: #{tpu_custom_call.1} parent=1 // pred_region
      %27 = vsyncadd [#allocation7], 0
      %s28 = sshll.u32 %s1, 4
      %s29 = int_to_ptr.hbm [resolvable:$true] %s28
      %s30 = sshll.u32 [#allocation6], 4
      %s31 = int_to_ptr.vmem [resolvable:$true] %s30
      %36 = dma.hbm_to_vmem [thread:$0]  %s29, 8192, %s31, [#allocation7], 128, 128, 8
    $region9: #{tpu_custom_call.1} parent=1 // pred_fallthru
      _
    // Predicated region
    $region10: #{tpu_custom_call.1} parent=1 // pred_check
      _
    $region11: #{tpu_custom_call.1} parent=1 // pred_check_branch
      %38 = sbr.rel (0) target = $region13
    $region12: #{tpu_custom_call.1} parent=1 // pred_region
      %40 = vsyncadd [#allocation7], 0
      %s41 = sshll.u32 %s2, 4
      %s42 = int_to_ptr.hbm [resolvable:$true] %s41
      %s43 = sshll.u32 [#allocation8], 4
      %s44 = int_to_ptr.vmem [resolvable:$true] %s43
      %49 = dma.hbm_to_vmem [thread:$0]  %s42, 8192, %s44, [#allocation7], 128, 128, 8
    $region13: #{tpu_custom_call.1} parent=1 // pred_fallthru
      _
    // Predicated region
    $region14: #{tpu_custom_call.1} parent=1 // pred_check
      _
    $region15: #{tpu_custom_call.1} parent=1 // pred_check_branch
      %51 = sbr.rel (0) target = $region17
    $region16: #{tpu_custom_call.1} parent=1 // pred_region
      %53 = dma.done [#allocation4], 2048
    $region17: #{tpu_custom_call.1} parent=1 // pred_fallthru
      _
    // Predicated region
    $region18: #{tpu_custom_call.1} parent=1 // pred_check
      _
    $region19: #{tpu_custom_call.1} parent=1 // pred_check_branch
      %55 = sbr.rel (0) target = $region21
    $region20: #{tpu_custom_call.1} parent=1 // pred_region
      %57 = dma.done [#allocation7], 8192
    $region21: #{tpu_custom_call.1} parent=1 // pred_fallthru
      _
    // Predicated region
    $region22: #{tpu_custom_call.1} parent=1 // pred_check
      _
    $region23: #{tpu_custom_call.1} parent=1 // pred_check_branch
      %59 = sbr.rel (0) target = $region25
    $region24: #{tpu_custom_call.1} parent=1 // pred_region
      %61 = dma.done [#allocation7], 8192
    $region25: #{tpu_custom_call.1} parent=1 // pred_fallthru
      _
    %p62 = scmp.eq.s32.totalorder 0, 0
    // Predicated region
    $region26: #{tpu_custom_call.1} parent=1 // pred_check
      %p63 = pneg %p62
    $region27: #{tpu_custom_call.1} parent=1 // pred_check_branch
      %65 = sbr.rel (%p63) target = $region29
    $region28: #{tpu_custom_call.1} parent=1 // pred_region
      %v66 = vld [vmem:[#allocation8] sm:$0xff]
      %v67 = vld [vmem:[#allocation8 + $0x8] sm:$0xff]
      %v68 = vld [vmem:[#allocation8 + $0x10] sm:$0xff]
      %v69 = vld [vmem:[#allocation8 + $0x18] sm:$0xff]
      %v70 = vld [vmem:[#allocation8 + $0x20] sm:$0xff]
      %v71 = vld [vmem:[#allocation8 + $0x28] sm:$0xff]
      %v72 = vld [vmem:[#allocation8 + $0x30] sm:$0xff]
      %v73 = vld [vmem:[#allocation8 + $0x38] sm:$0xff]
      %v74 = vld [vmem:[#allocation8 + $0x40] sm:$0xff]
      %v75 = vld [vmem:[#allocation8 + $0x48] sm:$0xff]
      %v76 = vld [vmem:[#allocation8 + $0x50] sm:$0xff]
      %v77 = vld [vmem:[#allocation8 + $0x58] sm:$0xff]
      %v78 = vld [vmem:[#allocation8 + $0x60] sm:$0xff]
      %v79 = vld [vmem:[#allocation8 + $0x68] sm:$0xff]
      %v80 = vld [vmem:[#allocation8 + $0x70] sm:$0xff]
      %v81 = vld [vmem:[#allocation8 + $0x78] sm:$0xff]
      %v82 = vld [vmem:[#allocation8 + $0x80] sm:$0xff]
      %v83 = vld [vmem:[#allocation8 + $0x88] sm:$0xff]
      %v84 = vld [vmem:[#allocation8 + $0x90] sm:$0xff]
      %v85 = vld [vmem:[#allocation8 + $0x98] sm:$0xff]
      %v86 = vld [vmem:[#allocation8 + $0xa0] sm:$0xff]
      %v87 = vld [vmem:[#allocation8 + $0xa8] sm:$0xff]
      %v88 = vld [vmem:[#allocation8 + $0xb0] sm:$0xff]
      %v89 = vld [vmem:[#allocation8 + $0xb8] sm:$0xff]
      %v90 = vld [vmem:[#allocation8 + $0xc0] sm:$0xff]
      %v91 = vld [vmem:[#allocation8 + $0xc8] sm:$0xff]
      %v92 = vld [vmem:[#allocation8 + $0xd0] sm:$0xff]
      %v93 = vld [vmem:[#allocation8 + $0xd8] sm:$0xff]
      %v94 = vld [vmem:[#allocation8 + $0xe0] sm:$0xff]
      %v95 = vld [vmem:[#allocation8 + $0xe8] sm:$0xff]
      %v96 = vld [vmem:[#allocation8 + $0xf0] sm:$0xff]
      %v97 = vld [vmem:[#allocation8 + $0xf8] sm:$0xff]
      %v98 = vld [vmem:[#allocation8 + $0x100] sm:$0xff]
      %v99 = vld [vmem:[#allocation8 + $0x108] sm:$0xff]
      %v100 = vld [vmem:[#allocation8 + $0x110] sm:$0xff]
      %v101 = vld [vmem:[#allocation8 + $0x118] sm:$0xff]
      %v102 = vld [vmem:[#allocation8 + $0x120] sm:$0xff]
      %v103 = vld [vmem:[#allocation8 + $0x128] sm:$0xff]
      %v104 = vld [vmem:[#allocation8 + $0x130] sm:$0xff]
      %v105 = vld [vmem:[#allocation8 + $0x138] sm:$0xff]
      %v106 = vld [vmem:[#allocation8 + $0x140] sm:$0xff]
      %v107 = vld [vmem:[#allocation8 + $0x148] sm:$0xff]
      %v108 = vld [vmem:[#allocation8 + $0x150] sm:$0xff]
      %v109 = vld [vmem:[#allocation8 + $0x158] sm:$0xff]
      %v110 = vld [vmem:[#allocation8 + $0x160] sm:$0xff]
      %v111 = vld [vmem:[#allocation8 + $0x168] sm:$0xff]
      %v112 = vld [vmem:[#allocation8 + $0x170] sm:$0xff]
      %v113 = vld [vmem:[#allocation8 + $0x178] sm:$0xff]
      %v114 = vld [vmem:[#allocation8 + $0x180] sm:$0xff]
      %v115 = vld [vmem:[#allocation8 + $0x188] sm:$0xff]
      %v116 = vld [vmem:[#allocation8 + $0x190] sm:$0xff]
      %v117 = vld [vmem:[#allocation8 + $0x198] sm:$0xff]
      %v118 = vld [vmem:[#allocation8 + $0x1a0] sm:$0xff]
      %v119 = vld [vmem:[#allocation8 + $0x1a8] sm:$0xff]
      %v120 = vld [vmem:[#allocation8 + $0x1b0] sm:$0xff]
      %v121 = vld [vmem:[#allocation8 + $0x1b8] sm:$0xff]
      %v122 = vld [vmem:[#allocation8 + $0x1c0] sm:$0xff]
      %v123 = vld [vmem:[#allocation8 + $0x1c8] sm:$0xff]
      %v124 = vld [vmem:[#allocation8 + $0x1d0] sm:$0xff]
      %v125 = vld [vmem:[#allocation8 + $0x1d8] sm:$0xff]
      %v126 = vld [vmem:[#allocation8 + $0x1e0] sm:$0xff]
      %v127 = vld [vmem:[#allocation8 + $0x1e8] sm:$0xff]
      %v128 = vld [vmem:[#allocation8 + $0x1f0] sm:$0xff]
      %v129 = vld [vmem:[#allocation8 + $0x1f8] sm:$0xff]
      %130 = vst [vmem:[#allocation2] sm:$0xff] %v66
      %131 = vst [vmem:[#allocation2 + $0x8] sm:$0xff] %v67
      %132 = vst [vmem:[#allocation2 + $0x10] sm:$0xff] %v68
      %133 = vst [vmem:[#allocation2 + $0x18] sm:$0xff] %v69
      %134 = vst [vmem:[#allocation2 + $0x20] sm:$0xff] %v70
      %135 = vst [vmem:[#allocation2 + $0x28] sm:$0xff] %v71
      %136 = vst [vmem:[#allocation2 + $0x30] sm:$0xff] %v72
      %137 = vst [vmem:[#allocation2 + $0x38] sm:$0xff] %v73
      %138 = vst [vmem:[#allocation2 + $0x40] sm:$0xff] %v74
      %139 = vst [vmem:[#allocation2 + $0x48] sm:$0xff] %v75
      %140 = vst [vmem:[#allocation2 + $0x50] sm:$0xff] %v76
      %141 = vst [vmem:[#allocation2 + $0x58] sm:$0xff] %v77
      %142 = vst [vmem:[#allocation2 + $0x60] sm:$0xff] %v78
      %143 = vst [vmem:[#allocation2 + $0x68] sm:$0xff] %v79
      %144 = vst [vmem:[#allocation2 + $0x70] sm:$0xff] %v80
      %145 = vst [vmem:[#allocation2 + $0x78] sm:$0xff] %v81
      %146 = vst [vmem:[#allocation2 + $0x80] sm:$0xff] %v82
      %147 = vst [vmem:[#allocation2 + $0x88] sm:$0xff] %v83
      %148 = vst [vmem:[#allocation2 + $0x90] sm:$0xff] %v84
      %149 = vst [vmem:[#allocation2 + $0x98] sm:$0xff] %v85
      %150 = vst [vmem:[#allocation2 + $0xa0] sm:$0xff] %v86
      %151 = vst [vmem:[#allocation2 + $0xa8] sm:$0xff] %v87
      %152 = vst [vmem:[#allocation2 + $0xb0] sm:$0xff] %v88
      %153 = vst [vmem:[#allocation2 + $0xb8] sm:$0xff] %v89
      %154 = vst [vmem:[#allocation2 + $0xc0] sm:$0xff] %v90
      %155 = vst [vmem:[#allocation2 + $0xc8] sm:$0xff] %v91
      %156 = vst [vmem:[#allocation2 + $0xd0] sm:$0xff] %v92
      %157 = vst [vmem:[#allocation2 + $0xd8] sm:$0xff] %v93
      %158 = vst [vmem:[#allocation2 + $0xe0] sm:$0xff] %v94
      %159 = vst [vmem:[#allocation2 + $0xe8] sm:$0xff] %v95
      %160 = vst [vmem:[#allocation2 + $0xf0] sm:$0xff] %v96
      %161 = vst [vmem:[#allocation2 + $0xf8] sm:$0xff] %v97
      %162 = vst [vmem:[#allocation2 + $0x100] sm:$0xff] %v98
      %163 = vst [vmem:[#allocation2 + $0x108] sm:$0xff] %v99
      %164 = vst [vmem:[#allocation2 + $0x110] sm:$0xff] %v100
      %165 = vst [vmem:[#allocation2 + $0x118] sm:$0xff] %v101
      %166 = vst [vmem:[#allocation2 + $0x120] sm:$0xff] %v102
      %167 = vst [vmem:[#allocation2 + $0x128] sm:$0xff] %v103
      %168 = vst [vmem:[#allocation2 + $0x130] sm:$0xff] %v104
      %169 = vst [vmem:[#allocation2 + $0x138] sm:$0xff] %v105
      %170 = vst [vmem:[#allocation2 + $0x140] sm:$0xff] %v106
      %171 = vst [vmem:[#allocation2 + $0x148] sm:$0xff] %v107
      %172 = vst [vmem:[#allocation2 + $0x150] sm:$0xff] %v108
      %173 = vst [vmem:[#allocation2 + $0x158] sm:$0xff] %v109
      %174 = vst [vmem:[#allocation2 + $0x160] sm:$0xff] %v110
      %175 = vst [vmem:[#allocation2 + $0x168] sm:$0xff] %v111
      %176 = vst [vmem:[#allocation2 + $0x170] sm:$0xff] %v112
      %177 = vst [vmem:[#allocation2 + $0x178] sm:$0xff] %v113
      %178 = vst [vmem:[#allocation2 + $0x180] sm:$0xff] %v114
      %179 = vst [vmem:[#allocation2 + $0x188] sm:$0xff] %v115
      %180 = vst [vmem:[#allocation2 + $0x190] sm:$0xff] %v116
      %181 = vst [vmem:[#allocation2 + $0x198] sm:$0xff] %v117
      %182 = vst [vmem:[#allocation2 + $0x1a0] sm:$0xff] %v118
      %183 = vst [vmem:[#allocation2 + $0x1a8] sm:$0xff] %v119
      %184 = vst [vmem:[#allocation2 + $0x1b0] sm:$0xff] %v120
      %185 = vst [vmem:[#allocation2 + $0x1b8] sm:$0xff] %v121
      %186 = vst [vmem:[#allocation2 + $0x1c0] sm:$0xff] %v122
      %187 = vst [vmem:[#allocation2 + $0x1c8] sm:$0xff] %v123
      %188 = vst [vmem:[#allocation2 + $0x1d0] sm:$0xff] %v124
      %189 = vst [vmem:[#allocation2 + $0x1d8] sm:$0xff] %v125
      %190 = vst [vmem:[#allocation2 + $0x1e0] sm:$0xff] %v126
      %191 = vst [vmem:[#allocation2 + $0x1e8] sm:$0xff] %v127
      %192 = vst [vmem:[#allocation2 + $0x1f0] sm:$0xff] %v128
      %193 = vst [vmem:[#allocation2 + $0x1f8] sm:$0xff] %v129
    $region29: #{tpu_custom_call.1} parent=1 // pred_fallthru
      _
    %v194 = vld [vmem:[#allocation3] sm:$0xff]
    %v195 = vld [vmem:[#allocation3 + $0x8] sm:$0xff]
    %v196 = vld [vmem:[#allocation6] sm:$0xff]
    %v197 = vld [vmem:[#allocation6 + $0x8] sm:$0xff]
    %v198 = vld [vmem:[#allocation6 + $0x10] sm:$0xff]
    %v199 = vld [vmem:[#allocation6 + $0x18] sm:$0xff]
    %v200 = vld [vmem:[#allocation6 + $0x20] sm:$0xff]
    %v201 = vld [vmem:[#allocation6 + $0x28] sm:$0xff]
    %v202 = vld [vmem:[#allocation6 + $0x30] sm:$0xff]
    %v203 = vld [vmem:[#allocation6 + $0x38] sm:$0xff]
    %v204 = vld [vmem:[#allocation2] sm:$0xff]
    %v205 = vld [vmem:[#allocation2 + $0x8] sm:$0xff]
    %v206 = vld [vmem:[#allocation2 + $0x10] sm:$0xff]
    %v207 = vld [vmem:[#allocation2 + $0x18] sm:$0xff]
    %v208 = vld [vmem:[#allocation2 + $0x20] sm:$0xff]
    %v209 = vld [vmem:[#allocation2 + $0x28] sm:$0xff]
    %v210 = vld [vmem:[#allocation2 + $0x30] sm:$0xff]
    %v211 = vld [vmem:[#allocation2 + $0x38] sm:$0xff]
    %v212 = vld [vmem:[#allocation2 + $0x40] sm:$0xff]
    %v213 = vld [vmem:[#allocation2 + $0x48] sm:$0xff]
    %v214 = vld [vmem:[#allocation2 + $0x50] sm:$0xff]
    %v215 = vld [vmem:[#allocation2 + $0x58] sm:$0xff]
    %v216 = vld [vmem:[#allocation2 + $0x60] sm:$0xff]
    %v217 = vld [vmem:[#allocation2 + $0x68] sm:$0xff]
    %v218 = vld [vmem:[#allocation2 + $0x70] sm:$0xff]
    %v219 = vld [vmem:[#allocation2 + $0x78] sm:$0xff]
    %v220 = vld [vmem:[#allocation2 + $0x80] sm:$0xff]
    %v221 = vld [vmem:[#allocation2 + $0x88] sm:$0xff]
    %v222 = vld [vmem:[#allocation2 + $0x90] sm:$0xff]
    %v223 = vld [vmem:[#allocation2 + $0x98] sm:$0xff]
    %v224 = vld [vmem:[#allocation2 + $0xa0] sm:$0xff]
    %v225 = vld [vmem:[#allocation2 + $0xa8] sm:$0xff]
    %v226 = vld [vmem:[#allocation2 + $0xb0] sm:$0xff]
    %v227 = vld [vmem:[#allocation2 + $0xb8] sm:$0xff]
    %v228 = vld [vmem:[#allocation2 + $0xc0] sm:$0xff]
    %v229 = vld [vmem:[#allocation2 + $0xc8] sm:$0xff]
    %v230 = vld [vmem:[#allocation2 + $0xd0] sm:$0xff]
    %v231 = vld [vmem:[#allocation2 + $0xd8] sm:$0xff]
    %v232 = vld [vmem:[#allocation2 + $0xe0] sm:$0xff]
    %v233 = vld [vmem:[#allocation2 + $0xe8] sm:$0xff]
    %v234 = vld [vmem:[#allocation2 + $0xf0] sm:$0xff]
    %v235 = vld [vmem:[#allocation2 + $0xf8] sm:$0xff]
    %v236 = vld [vmem:[#allocation2 + $0x100] sm:$0xff]
    %v237 = vld [vmem:[#allocation2 + $0x108] sm:$0xff]
    %v238 = vld [vmem:[#allocation2 + $0x110] sm:$0xff]
    %v239 = vld [vmem:[#allocation2 + $0x118] sm:$0xff]
    %v240 = vld [vmem:[#allocation2 + $0x120] sm:$0xff]
    %v241 = vld [vmem:[#allocation2 + $0x128] sm:$0xff]
    %v242 = vld [vmem:[#allocation2 + $0x130] sm:$0xff]
    %v243 = vld [vmem:[#allocation2 + $0x138] sm:$0xff]
    %v244 = vld [vmem:[#allocation2 + $0x140] sm:$0xff]
    %v245 = vld [vmem:[#allocation2 + $0x148] sm:$0xff]
    %v246 = vld [vmem:[#allocation2 + $0x150] sm:$0xff]
    %v247 = vld [vmem:[#allocation2 + $0x158] sm:$0xff]
    %v248 = vld [vmem:[#allocation2 + $0x160] sm:$0xff]
    %v249 = vld [vmem:[#allocation2 + $0x168] sm:$0xff]
    %v250 = vld [vmem:[#allocation2 + $0x170] sm:$0xff]
    %v251 = vld [vmem:[#allocation2 + $0x178] sm:$0xff]
    %v252 = vld [vmem:[#allocation2 + $0x180] sm:$0xff]
    %v253 = vld [vmem:[#allocation2 + $0x188] sm:$0xff]
    %v254 = vld [vmem:[#allocation2 + $0x190] sm:$0xff]
    %v255 = vld [vmem:[#allocation2 + $0x198] sm:$0xff]
    %v256 = vld [vmem:[#allocation2 + $0x1a0] sm:$0xff]
    %v257 = vld [vmem:[#allocation2 + $0x1a8] sm:$0xff]
    %v258 = vld [vmem:[#allocation2 + $0x1b0] sm:$0xff]
    %v259 = vld [vmem:[#allocation2 + $0x1b8] sm:$0xff]
    %v260 = vld [vmem:[#allocation2 + $0x1c0] sm:$0xff]
    %v261 = vld [vmem:[#allocation2 + $0x1c8] sm:$0xff]
    %v262 = vld [vmem:[#allocation2 + $0x1d0] sm:$0xff]
    %v263 = vld [vmem:[#allocation2 + $0x1d8] sm:$0xff]
    %v264 = vld [vmem:[#allocation2 + $0x1e0] sm:$0xff]
    %v265 = vld [vmem:[#allocation2 + $0x1e8] sm:$0xff]
    %v266 = vld [vmem:[#allocation2 + $0x1f0] sm:$0xff]
    %v267 = vld [vmem:[#allocation2 + $0x1f8] sm:$0xff]
    %v270 = vrot.slane %v194, 1
    %v271 = vrot.slane %v194, 2
    %v272 = vrot.slane %v194, 3
    %v273 = vrot.slane %v194, 4
    %v274 = vrot.slane %v194, 5
    %v275 = vrot.slane %v194, 6
    %v276 = vrot.slane %v194, 7
    %v277 = vrot.slane %v195, 1
    %v278 = vrot.slane %v195, 2
    %v279 = vrot.slane %v195, 3
    %v280 = vrot.slane %v195, 4
    %v281 = vrot.slane %v195, 5
    %v282 = vrot.slane %v195, 6
    %v283 = vrot.slane %v195, 7
    %v284 = vperm.slane %v194, 0
    %v285 = vperm.slane %v270, 0
    %v286 = vperm.slane %v271, 0
    %v287 = vperm.slane %v272, 0
    %v288 = vperm.slane %v273, 0
    %v289 = vperm.slane %v274, 0
    %v290 = vperm.slane %v275, 0
    %v291 = vperm.slane %v276, 0
    %v292 = vperm.slane %v195, 0
    %v293 = vperm.slane %v277, 0
    %v294 = vperm.slane %v278, 0
    %v295 = vperm.slane %v279, 0
    %v296 = vperm.slane %v280, 0
    %v297 = vperm.slane %v281, 0
    %v298 = vperm.slane %v282, 0
    %v299 = vperm.slane %v283, 0
    %v316 = vmul.f32 %v284, %v204
    %v317 = vmul.f32 %v284, %v205
    %v318 = vmul.f32 %v284, %v206
    %v319 = vmul.f32 %v284, %v207
    %v320 = vmul.f32 %v285, %v208
    %v321 = vmul.f32 %v285, %v209
    %v322 = vmul.f32 %v285, %v210
    %v323 = vmul.f32 %v285, %v211
    %v324 = vmul.f32 %v286, %v212
    %v325 = vmul.f32 %v286, %v213
    %v326 = vmul.f32 %v286, %v214
    %v327 = vmul.f32 %v286, %v215
    %v328 = vmul.f32 %v287, %v216
    %v329 = vmul.f32 %v287, %v217
    %v330 = vmul.f32 %v287, %v218
    %v331 = vmul.f32 %v287, %v219
    %v332 = vmul.f32 %v288, %v220
    %v333 = vmul.f32 %v288, %v221
    %v334 = vmul.f32 %v288, %v222
    %v335 = vmul.f32 %v288, %v223
    %v336 = vmul.f32 %v289, %v224
    %v337 = vmul.f32 %v289, %v225
    %v338 = vmul.f32 %v289, %v226
    %v339 = vmul.f32 %v289, %v227
    %v340 = vmul.f32 %v290, %v228
    %v341 = vmul.f32 %v290, %v229
    %v342 = vmul.f32 %v290, %v230
    %v343 = vmul.f32 %v290, %v231
    %v344 = vmul.f32 %v291, %v232
    %v345 = vmul.f32 %v291, %v233
    %v346 = vmul.f32 %v291, %v234
    %v347 = vmul.f32 %v291, %v235
    %v348 = vmul.f32 %v292, %v236
    %v349 = vmul.f32 %v292, %v237
    %v350 = vmul.f32 %v292, %v238
    %v351 = vmul.f32 %v292, %v239
    %v352 = vmul.f32 %v293, %v240
    %v353 = vmul.f32 %v293, %v241
    %v354 = vmul.f32 %v293, %v242
    %v355 = vmul.f32 %v293, %v243
    %v356 = vmul.f32 %v294, %v244
    %v357 = vmul.f32 %v294, %v245
    %v358 = vmul.f32 %v294, %v246
    %v359 = vmul.f32 %v294, %v247
    %v360 = vmul.f32 %v295, %v248
    %v361 = vmul.f32 %v295, %v249
    %v362 = vmul.f32 %v295, %v250
    %v363 = vmul.f32 %v295, %v251
    %v364 = vmul.f32 %v296, %v252
    %v365 = vmul.f32 %v296, %v253
    %v366 = vmul.f32 %v296, %v254
    %v367 = vmul.f32 %v296, %v255
    %v368 = vmul.f32 %v297, %v256
    %v369 = vmul.f32 %v297, %v257
    %v370 = vmul.f32 %v297, %v258
    %v371 = vmul.f32 %v297, %v259
    %v372 = vmul.f32 %v298, %v260
    %v373 = vmul.f32 %v298, %v261
    %v374 = vmul.f32 %v298, %v262
    %v375 = vmul.f32 %v298, %v263
    %v376 = vmul.f32 %v299, %v264
    %v377 = vmul.f32 %v299, %v265
    %v378 = vmul.f32 %v299, %v266
    %v379 = vmul.f32 %v299, %v267
    %v380 = vadd.f32 %v316, %v320
    %v381 = vadd.f32 %v380, %v324
    %v382 = vadd.f32 %v381, %v328
    %v383 = vadd.f32 %v382, %v332
    %v384 = vadd.f32 %v383, %v336
    %v385 = vadd.f32 %v384, %v340
    %v386 = vadd.f32 %v385, %v344
    %v387 = vadd.f32 %v386, %v348
    %v388 = vadd.f32 %v387, %v352
    %v389 = vadd.f32 %v388, %v356
    %v390 = vadd.f32 %v389, %v360
    %v391 = vadd.f32 %v390, %v364
    %v392 = vadd.f32 %v391, %v368
    %v393 = vadd.f32 %v392, %v372
    %v394 = vadd.f32 %v393, %v376
    %v395 = vadd.f32 %v317, %v321
    %v396 = vadd.f32 %v395, %v325
    %v397 = vadd.f32 %v396, %v329
    %v398 = vadd.f32 %v397, %v333
    %v399 = vadd.f32 %v398, %v337
    %v400 = vadd.f32 %v399, %v341
    %v401 = vadd.f32 %v400, %v345
    %v402 = vadd.f32 %v401, %v349
    %v403 = vadd.f32 %v402, %v353
    %v404 = vadd.f32 %v403, %v357
    %v405 = vadd.f32 %v404, %v361
    %v406 = vadd.f32 %v405, %v365
    %v407 = vadd.f32 %v406, %v369
    %v408 = vadd.f32 %v407, %v373
    %v409 = vadd.f32 %v408, %v377
    %v410 = vadd.f32 %v318, %v322
    %v411 = vadd.f32 %v410, %v326
    %v412 = vadd.f32 %v411, %v330
    %v413 = vadd.f32 %v412, %v334
    %v414 = vadd.f32 %v413, %v338
    %v415 = vadd.f32 %v414, %v342
    %v416 = vadd.f32 %v415, %v346
    %v417 = vadd.f32 %v416, %v350
    %v418 = vadd.f32 %v417, %v354
    %v419 = vadd.f32 %v418, %v358
    %v420 = vadd.f32 %v419, %v362
    %v421 = vadd.f32 %v420, %v366
    %v422 = vadd.f32 %v421, %v370
    %v423 = vadd.f32 %v422, %v374
    %v424 = vadd.f32 %v423, %v378
    %v425 = vadd.f32 %v319, %v323
    %v426 = vadd.f32 %v425, %v327
    %v427 = vadd.f32 %v426, %v331
    %v428 = vadd.f32 %v427, %v335
    %v429 = vadd.f32 %v428, %v339
    %v430 = vadd.f32 %v429, %v343
    %v431 = vadd.f32 %v430, %v347
    %v432 = vadd.f32 %v431, %v351
    %v433 = vadd.f32 %v432, %v355
    %v434 = vadd.f32 %v433, %v359
    %v435 = vadd.f32 %v434, %v363
    %v436 = vadd.f32 %v435, %v367
    %v437 = vadd.f32 %v436, %v371
    %v438 = vadd.f32 %v437, %v375
    %v439 = vadd.f32 %v438, %v379
    %440 = vst [vmem:[#allocation9] sm:$0xff] %v394
    %441 = vst [vmem:[#allocation9 + $0x8] sm:$0xff] %v409
    %442 = vst [vmem:[#allocation9 + $0x10] sm:$0xff] %v424
    %443 = vst [vmem:[#allocation9 + $0x18] sm:$0xff] %v439
    %v444 = vmul.f32 %v284, %v196
    %v445 = vmul.f32 %v284, %v197
    %v446 = vmul.f32 %v284, %v198
    %v447 = vmul.f32 %v284, %v199
    %v448 = vmul.f32 %v285, %v196
    %v449 = vmul.f32 %v285, %v197
    %v450 = vmul.f32 %v285, %v198
    %v451 = vmul.f32 %v285, %v199
    %v452 = vmul.f32 %v286, %v196
    %v453 = vmul.f32 %v286, %v197
    %v454 = vmul.f32 %v286, %v198
    %v455 = vmul.f32 %v286, %v199
    %v456 = vmul.f32 %v287, %v196
    %v457 = vmul.f32 %v287, %v197
    %v458 = vmul.f32 %v287, %v198
    %v459 = vmul.f32 %v287, %v199
    %v460 = vmul.f32 %v288, %v196
    %v461 = vmul.f32 %v288, %v197
    %v462 = vmul.f32 %v288, %v198
    %v463 = vmul.f32 %v288, %v199
    %v464 = vmul.f32 %v289, %v196
    %v465 = vmul.f32 %v289, %v197
    %v466 = vmul.f32 %v289, %v198
    %v467 = vmul.f32 %v289, %v199
    %v468 = vmul.f32 %v290, %v196
    %v469 = vmul.f32 %v290, %v197
    %v470 = vmul.f32 %v290, %v198
    %v471 = vmul.f32 %v290, %v199
    %v472 = vmul.f32 %v291, %v196
    %v473 = vmul.f32 %v291, %v197
    %v474 = vmul.f32 %v291, %v198
    %v475 = vmul.f32 %v291, %v199
    %v476 = vmul.f32 %v292, %v196
    %v477 = vmul.f32 %v292, %v197
    %v478 = vmul.f32 %v292, %v198
    %v479 = vmul.f32 %v292, %v199
    %v480 = vmul.f32 %v293, %v196
    %v481 = vmul.f32 %v293, %v197
    %v482 = vmul.f32 %v293, %v198
    %v483 = vmul.f32 %v293, %v199
    %v484 = vmul.f32 %v294, %v196
    %v485 = vmul.f32 %v294, %v197
    %v486 = vmul.f32 %v294, %v198
    %v487 = vmul.f32 %v294, %v199
    %v488 = vmul.f32 %v295, %v196
    %v489 = vmul.f32 %v295, %v197
    %v490 = vmul.f32 %v295, %v198
    %v491 = vmul.f32 %v295, %v199
    %v492 = vmul.f32 %v296, %v196
    %v493 = vmul.f32 %v296, %v197
    %v494 = vmul.f32 %v296, %v198
    %v495 = vmul.f32 %v296, %v199
    %v496 = vmul.f32 %v297, %v196
    %v497 = vmul.f32 %v297, %v197
    %v498 = vmul.f32 %v297, %v198
    %v499 = vmul.f32 %v297, %v199
    %v500 = vmul.f32 %v298, %v196
    %v501 = vmul.f32 %v298, %v197
    %v502 = vmul.f32 %v298, %v198
    %v503 = vmul.f32 %v298, %v199
    %v504 = vmul.f32 %v299, %v196
    %v505 = vmul.f32 %v299, %v197
    %v506 = vmul.f32 %v299, %v198
    %v507 = vmul.f32 %v299, %v199
    %v508 = vsub.f32 1.0, %v444
    %v509 = vsub.f32 1.0, %v445
    %v510 = vsub.f32 1.0, %v446
    %v511 = vsub.f32 1.0, %v447
    %v512 = vsub.f32 1.0, %v448
    %v513 = vsub.f32 1.0, %v449
    %v514 = vsub.f32 1.0, %v450
    %v515 = vsub.f32 1.0, %v451
    %v516 = vsub.f32 1.0, %v452
    %v517 = vsub.f32 1.0, %v453
    %v518 = vsub.f32 1.0, %v454
    %v519 = vsub.f32 1.0, %v455
    %v520 = vsub.f32 1.0, %v456
    %v521 = vsub.f32 1.0, %v457
    %v522 = vsub.f32 1.0, %v458
    %v523 = vsub.f32 1.0, %v459
    %v524 = vsub.f32 1.0, %v460
    %v525 = vsub.f32 1.0, %v461
    %v526 = vsub.f32 1.0, %v462
    %v527 = vsub.f32 1.0, %v463
    %v528 = vsub.f32 1.0, %v464
    %v529 = vsub.f32 1.0, %v465
    %v530 = vsub.f32 1.0, %v466
    %v531 = vsub.f32 1.0, %v467
    %v532 = vsub.f32 1.0, %v468
    %v533 = vsub.f32 1.0, %v469
    %v534 = vsub.f32 1.0, %v470
    %v535 = vsub.f32 1.0, %v471
    %v536 = vsub.f32 1.0, %v472
    %v537 = vsub.f32 1.0, %v473
    %v538 = vsub.f32 1.0, %v474
    %v539 = vsub.f32 1.0, %v475
    %v540 = vsub.f32 1.0, %v476
    %v541 = vsub.f32 1.0, %v477
    %v542 = vsub.f32 1.0, %v478
    %v543 = vsub.f32 1.0, %v479
    %v544 = vsub.f32 1.0, %v480
    %v545 = vsub.f32 1.0, %v481
    %v546 = vsub.f32 1.0, %v482
    %v547 = vsub.f32 1.0, %v483
    %v548 = vsub.f32 1.0, %v484
    %v549 = vsub.f32 1.0, %v485
    %v550 = vsub.f32 1.0, %v486
    %v551 = vsub.f32 1.0, %v487
    %v552 = vsub.f32 1.0, %v488
    %v553 = vsub.f32 1.0, %v489
    %v554 = vsub.f32 1.0, %v490
    %v555 = vsub.f32 1.0, %v491
    %v556 = vsub.f32 1.0, %v492
    %v557 = vsub.f32 1.0, %v493
    %v558 = vsub.f32 1.0, %v494
    %v559 = vsub.f32 1.0, %v495
    %v560 = vsub.f32 1.0, %v496
    %v561 = vsub.f32 1.0, %v497
    %v562 = vsub.f32 1.0, %v498
    %v563 = vsub.f32 1.0, %v499
    %v564 = vsub.f32 1.0, %v500
    %v565 = vsub.f32 1.0, %v501
    %v566 = vsub.f32 1.0, %v502
    %v567 = vsub.f32 1.0, %v503
    %v568 = vsub.f32 1.0, %v504
    %v569 = vsub.f32 1.0, %v505
    %v570 = vsub.f32 1.0, %v506
    %v571 = vsub.f32 1.0, %v507
    %v572 = vmul.f32 %v204, %v508
    %v573 = vmul.f32 %v205, %v509
    %v574 = vmul.f32 %v206, %v510
    %v575 = vmul.f32 %v207, %v511
    %v576 = vmul.f32 %v208, %v512
    %v577 = vmul.f32 %v209, %v513
    %v578 = vmul.f32 %v210, %v514
    %v579 = vmul.f32 %v211, %v515
    %v580 = vmul.f32 %v212, %v516
    %v581 = vmul.f32 %v213, %v517
    %v582 = vmul.f32 %v214, %v518
    %v583 = vmul.f32 %v215, %v519
    %v584 = vmul.f32 %v216, %v520
    %v585 = vmul.f32 %v217, %v521
    %v586 = vmul.f32 %v218, %v522
    %v587 = vmul.f32 %v219, %v523
    %v588 = vmul.f32 %v220, %v524
    %v589 = vmul.f32 %v221, %v525
    %v590 = vmul.f32 %v222, %v526
    %v591 = vmul.f32 %v223, %v527
    %v592 = vmul.f32 %v224, %v528
    %v593 = vmul.f32 %v225, %v529
    %v594 = vmul.f32 %v226, %v530
    %v595 = vmul.f32 %v227, %v531
    %v596 = vmul.f32 %v228, %v532
    %v597 = vmul.f32 %v229, %v533
    %v598 = vmul.f32 %v230, %v534
    %v599 = vmul.f32 %v231, %v535
    %v600 = vmul.f32 %v232, %v536
    %v601 = vmul.f32 %v233, %v537
    %v602 = vmul.f32 %v234, %v538
    %v603 = vmul.f32 %v235, %v539
    %v604 = vmul.f32 %v236, %v540
    %v605 = vmul.f32 %v237, %v541
    %v606 = vmul.f32 %v238, %v542
    %v607 = vmul.f32 %v239, %v543
    %v608 = vmul.f32 %v240, %v544
    %v609 = vmul.f32 %v241, %v545
    %v610 = vmul.f32 %v242, %v546
    %v611 = vmul.f32 %v243, %v547
    %v612 = vmul.f32 %v244, %v548
    %v613 = vmul.f32 %v245, %v549
    %v614 = vmul.f32 %v246, %v550
    %v615 = vmul.f32 %v247, %v551
    %v616 = vmul.f32 %v248, %v552
    %v617 = vmul.f32 %v249, %v553
    %v618 = vmul.f32 %v250, %v554
    %v619 = vmul.f32 %v251, %v555
    %v620 = vmul.f32 %v252, %v556
    %v621 = vmul.f32 %v253, %v557
    %v622 = vmul.f32 %v254, %v558
    %v623 = vmul.f32 %v255, %v559
    %v624 = vmul.f32 %v256, %v560
    %v625 = vmul.f32 %v257, %v561
    %v626 = vmul.f32 %v258, %v562
    %v627 = vmul.f32 %v259, %v563
    %v628 = vmul.f32 %v260, %v564
    %v629 = vmul.f32 %v261, %v565
    %v630 = vmul.f32 %v262, %v566
    %v631 = vmul.f32 %v263, %v567
    %v632 = vmul.f32 %v264, %v568
    %v633 = vmul.f32 %v265, %v569
    %v634 = vmul.f32 %v266, %v570
    %v635 = vmul.f32 %v267, %v571
    %v636 = vmul.f32 %v284, %v200
    %v637 = vmul.f32 %v284, %v201
    %v638 = vmul.f32 %v284, %v202
    %v639 = vmul.f32 %v284, %v203
    %v640 = vmul.f32 %v285, %v200
    %v641 = vmul.f32 %v285, %v201
    %v642 = vmul.f32 %v285, %v202
    %v643 = vmul.f32 %v285, %v203
    %v644 = vmul.f32 %v286, %v200
    %v645 = vmul.f32 %v286, %v201
    %v646 = vmul.f32 %v286, %v202
    %v647 = vmul.f32 %v286, %v203
    %v648 = vmul.f32 %v287, %v200
    %v649 = vmul.f32 %v287, %v201
    %v650 = vmul.f32 %v287, %v202
    %v651 = vmul.f32 %v287, %v203
    %v652 = vmul.f32 %v288, %v200
    %v653 = vmul.f32 %v288, %v201
    %v654 = vmul.f32 %v288, %v202
    %v655 = vmul.f32 %v288, %v203
    %v656 = vmul.f32 %v289, %v200
    %v657 = vmul.f32 %v289, %v201
    %v658 = vmul.f32 %v289, %v202
    %v659 = vmul.f32 %v289, %v203
    %v660 = vmul.f32 %v290, %v200
    %v661 = vmul.f32 %v290, %v201
    %v662 = vmul.f32 %v290, %v202
    %v663 = vmul.f32 %v290, %v203
    %v664 = vmul.f32 %v291, %v200
    %v665 = vmul.f32 %v291, %v201
    %v666 = vmul.f32 %v291, %v202
    %v667 = vmul.f32 %v291, %v203
    %v668 = vmul.f32 %v292, %v200
    %v669 = vmul.f32 %v292, %v201
    %v670 = vmul.f32 %v292, %v202
    %v671 = vmul.f32 %v292, %v203
    %v672 = vmul.f32 %v293, %v200
    %v673 = vmul.f32 %v293, %v201
    %v674 = vmul.f32 %v293, %v202
    %v675 = vmul.f32 %v293, %v203
    %v676 = vmul.f32 %v294, %v200
    %v677 = vmul.f32 %v294, %v201
    %v678 = vmul.f32 %v294, %v202
    %v679 = vmul.f32 %v294, %v203
    %v680 = vmul.f32 %v295, %v200
    %v681 = vmul.f32 %v295, %v201
    %v682 = vmul.f32 %v295, %v202
    %v683 = vmul.f32 %v295, %v203
    %v684 = vmul.f32 %v296, %v200
    %v685 = vmul.f32 %v296, %v201
    %v686 = vmul.f32 %v296, %v202
    %v687 = vmul.f32 %v296, %v203
    %v688 = vmul.f32 %v297, %v200
    %v689 = vmul.f32 %v297, %v201
    %v690 = vmul.f32 %v297, %v202
    %v691 = vmul.f32 %v297, %v203
    %v692 = vmul.f32 %v298, %v200
    %v693 = vmul.f32 %v298, %v201
    %v694 = vmul.f32 %v298, %v202
    %v695 = vmul.f32 %v298, %v203
    %v696 = vmul.f32 %v299, %v200
    %v697 = vmul.f32 %v299, %v201
    %v698 = vmul.f32 %v299, %v202
    %v699 = vmul.f32 %v299, %v203
    %v700 = vadd.f32 %v572, %v636
    %v701 = vadd.f32 %v573, %v637
    %v702 = vadd.f32 %v574, %v638
    %v703 = vadd.f32 %v575, %v639
    %v704 = vadd.f32 %v576, %v640
    %v705 = vadd.f32 %v577, %v641
    %v706 = vadd.f32 %v578, %v642
    %v707 = vadd.f32 %v579, %v643
    %v708 = vadd.f32 %v580, %v644
    %v709 = vadd.f32 %v581, %v645
    %v710 = vadd.f32 %v582, %v646
    %v711 = vadd.f32 %v583, %v647
    %v712 = vadd.f32 %v584, %v648
    %v713 = vadd.f32 %v585, %v649
    %v714 = vadd.f32 %v586, %v650
    %v715 = vadd.f32 %v587, %v651
    %v716 = vadd.f32 %v588, %v652
    %v717 = vadd.f32 %v589, %v653
    %v718 = vadd.f32 %v590, %v654
    %v719 = vadd.f32 %v591, %v655
    %v720 = vadd.f32 %v592, %v656
    %v721 = vadd.f32 %v593, %v657
    %v722 = vadd.f32 %v594, %v658
    %v723 = vadd.f32 %v595, %v659
    %v724 = vadd.f32 %v596, %v660
    %v725 = vadd.f32 %v597, %v661
    %v726 = vadd.f32 %v598, %v662
    %v727 = vadd.f32 %v599, %v663
    %v728 = vadd.f32 %v600, %v664
    %v729 = vadd.f32 %v601, %v665
    %v730 = vadd.f32 %v602, %v666
    %v731 = vadd.f32 %v603, %v667
    %v732 = vadd.f32 %v604, %v668
    %v733 = vadd.f32 %v605, %v669
    %v734 = vadd.f32 %v606, %v670
    %v735 = vadd.f32 %v607, %v671
    %v736 = vadd.f32 %v608, %v672
    %v737 = vadd.f32 %v609, %v673
    %v738 = vadd.f32 %v610, %v674
    %v739 = vadd.f32 %v611, %v675
    %v740 = vadd.f32 %v612, %v676
    %v741 = vadd.f32 %v613, %v677
    %v742 = vadd.f32 %v614, %v678
    %v743 = vadd.f32 %v615, %v679
    %v744 = vadd.f32 %v616, %v680
    %v745 = vadd.f32 %v617, %v681
    %v746 = vadd.f32 %v618, %v682
    %v747 = vadd.f32 %v619, %v683
    %v748 = vadd.f32 %v620, %v684
    %v749 = vadd.f32 %v621, %v685
    %v750 = vadd.f32 %v622, %v686
    %v751 = vadd.f32 %v623, %v687
    %v752 = vadd.f32 %v624, %v688
    %v753 = vadd.f32 %v625, %v689
    %v754 = vadd.f32 %v626, %v690
    %v755 = vadd.f32 %v627, %v691
    %v756 = vadd.f32 %v628, %v692
    %v757 = vadd.f32 %v629, %v693
    %v758 = vadd.f32 %v630, %v694
    %v759 = vadd.f32 %v631, %v695
    %v760 = vadd.f32 %v632, %v696
    %v761 = vadd.f32 %v633, %v697
    %v762 = vadd.f32 %v634, %v698
    %v763 = vadd.f32 %v635, %v699
    %764 = vst [vmem:[#allocation2] sm:$0xff] %v700
    %765 = vst [vmem:[#allocation2 + $0x8] sm:$0xff] %v701
    %766 = vst [vmem:[#allocation2 + $0x10] sm:$0xff] %v702
    %767 = vst [vmem:[#allocation2 + $0x18] sm:$0xff] %v703
    %768 = vst [vmem:[#allocation2 + $0x20] sm:$0xff] %v704
    %769 = vst [vmem:[#allocation2 + $0x28] sm:$0xff] %v705
    %770 = vst [vmem:[#allocation2 + $0x30] sm:$0xff] %v706
    %771 = vst [vmem:[#allocation2 + $0x38] sm:$0xff] %v707
    %772 = vst [vmem:[#allocation2 + $0x40] sm:$0xff] %v708
    %773 = vst [vmem:[#allocation2 + $0x48] sm:$0xff] %v709
    %774 = vst [vmem:[#allocation2 + $0x50] sm:$0xff] %v710
    %775 = vst [vmem:[#allocation2 + $0x58] sm:$0xff] %v711
    %776 = vst [vmem:[#allocation2 + $0x60] sm:$0xff] %v712
    %777 = vst [vmem:[#allocation2 + $0x68] sm:$0xff] %v713
    %778 = vst [vmem:[#allocation2 + $0x70] sm:$0xff] %v714
    %779 = vst [vmem:[#allocation2 + $0x78] sm:$0xff] %v715
    %780 = vst [vmem:[#allocation2 + $0x80] sm:$0xff] %v716
    %781 = vst [vmem:[#allocation2 + $0x88] sm:$0xff] %v717
    %782 = vst [vmem:[#allocation2 + $0x90] sm:$0xff] %v718
    %783 = vst [vmem:[#allocation2 + $0x98] sm:$0xff] %v719
    %784 = vst [vmem:[#allocation2 + $0xa0] sm:$0xff] %v720
    %785 = vst [vmem:[#allocation2 + $0xa8] sm:$0xff] %v721
    %786 = vst [vmem:[#allocation2 + $0xb0] sm:$0xff] %v722
    %787 = vst [vmem:[#allocation2 + $0xb8] sm:$0xff] %v723
    %788 = vst [vmem:[#allocation2 + $0xc0] sm:$0xff] %v724
    %789 = vst [vmem:[#allocation2 + $0xc8] sm:$0xff] %v725
    %790 = vst [vmem:[#allocation2 + $0xd0] sm:$0xff] %v726
    %791 = vst [vmem:[#allocation2 + $0xd8] sm:$0xff] %v727
    %792 = vst [vmem:[#allocation2 + $0xe0] sm:$0xff] %v728
    %793 = vst [vmem:[#allocation2 + $0xe8] sm:$0xff] %v729
    %794 = vst [vmem:[#allocation2 + $0xf0] sm:$0xff] %v730
    %795 = vst [vmem:[#allocation2 + $0xf8] sm:$0xff] %v731
    %796 = vst [vmem:[#allocation2 + $0x100] sm:$0xff] %v732
    %797 = vst [vmem:[#allocation2 + $0x108] sm:$0xff] %v733
    %798 = vst [vmem:[#allocation2 + $0x110] sm:$0xff] %v734
    %799 = vst [vmem:[#allocation2 + $0x118] sm:$0xff] %v735
    %800 = vst [vmem:[#allocation2 + $0x120] sm:$0xff] %v736
    %801 = vst [vmem:[#allocation2 + $0x128] sm:$0xff] %v737
    %802 = vst [vmem:[#allocation2 + $0x130] sm:$0xff] %v738
    %803 = vst [vmem:[#allocation2 + $0x138] sm:$0xff] %v739
    %804 = vst [vmem:[#allocation2 + $0x140] sm:$0xff] %v740
    %805 = vst [vmem:[#allocation2 + $0x148] sm:$0xff] %v741
    %806 = vst [vmem:[#allocation2 + $0x150] sm:$0xff] %v742
    %807 = vst [vmem:[#allocation2 + $0x158] sm:$0xff] %v743
    %808 = vst [vmem:[#allocation2 + $0x160] sm:$0xff] %v744
    %809 = vst [vmem:[#allocation2 + $0x168] sm:$0xff] %v745
    %810 = vst [vmem:[#allocation2 + $0x170] sm:$0xff] %v746
    %811 = vst [vmem:[#allocation2 + $0x178] sm:$0xff] %v747
    %812 = vst [vmem:[#allocation2 + $0x180] sm:$0xff] %v748
    %813 = vst [vmem:[#allocation2 + $0x188] sm:$0xff] %v749
    %814 = vst [vmem:[#allocation2 + $0x190] sm:$0xff] %v750
    %815 = vst [vmem:[#allocation2 + $0x198] sm:$0xff] %v751
    %816 = vst [vmem:[#allocation2 + $0x1a0] sm:$0xff] %v752
    %817 = vst [vmem:[#allocation2 + $0x1a8] sm:$0xff] %v753
    %818 = vst [vmem:[#allocation2 + $0x1b0] sm:$0xff] %v754
    %819 = vst [vmem:[#allocation2 + $0x1b8] sm:$0xff] %v755
    %820 = vst [vmem:[#allocation2 + $0x1c0] sm:$0xff] %v756
    %821 = vst [vmem:[#allocation2 + $0x1c8] sm:$0xff] %v757
    %822 = vst [vmem:[#allocation2 + $0x1d0] sm:$0xff] %v758
    %823 = vst [vmem:[#allocation2 + $0x1d8] sm:$0xff] %v759
    %824 = vst [vmem:[#allocation2 + $0x1e0] sm:$0xff] %v760
    %825 = vst [vmem:[#allocation2 + $0x1e8] sm:$0xff] %v761
    %826 = vst [vmem:[#allocation2 + $0x1f0] sm:$0xff] %v762
    %827 = vst [vmem:[#allocation2 + $0x1f8] sm:$0xff] %v763
    %s828 = scalar_lea.vmem [#allocation3], 16
    %v829 = vld [vmem:[%s828] sm:$0xff]
    %v830 = vld [vmem:[%s828 + $0x8] sm:$0xff]
    %s831 = scalar_lea.vmem [#allocation6], 64
    %v832 = vld [vmem:[%s831] sm:$0xff]
    %v833 = vld [vmem:[%s831 + $0x8] sm:$0xff]
    %v834 = vld [vmem:[%s831 + $0x10] sm:$0xff]
    %v835 = vld [vmem:[%s831 + $0x18] sm:$0xff]
    %v836 = vld [vmem:[%s831 + $0x20] sm:$0xff]
    %v837 = vld [vmem:[%s831 + $0x28] sm:$0xff]
    %v838 = vld [vmem:[%s831 + $0x30] sm:$0xff]
    %v839 = vld [vmem:[%s831 + $0x38] sm:$0xff]
    %v840 = vld [vmem:[#allocation2] sm:$0xff]
    %v841 = vld [vmem:[#allocation2 + $0x8] sm:$0xff]
    %v842 = vld [vmem:[#allocation2 + $0x10] sm:$0xff]
    %v843 = vld [vmem:[#allocation2 + $0x18] sm:$0xff]
    %v844 = vld [vmem:[#allocation2 + $0x20] sm:$0xff]
    %v845 = vld [vmem:[#allocation2 + $0x28] sm:$0xff]
    %v846 = vld [vmem:[#allocation2 + $0x30] sm:$0xff]
    %v847 = vld [vmem:[#allocation2 + $0x38] sm:$0xff]
    %v848 = vld [vmem:[#allocation2 + $0x40] sm:$0xff]
    %v849 = vld [vmem:[#allocation2 + $0x48] sm:$0xff]
    %v850 = vld [vmem:[#allocation2 + $0x50] sm:$0xff]
    %v851 = vld [vmem:[#allocation2 + $0x58] sm:$0xff]
    %v852 = vld [vmem:[#allocation2 + $0x60] sm:$0xff]
    %v853 = vld [vmem:[#allocation2 + $0x68] sm:$0xff]
    %v854 = vld [vmem:[#allocation2 + $0x70] sm:$0xff]
    %v855 = vld [vmem:[#allocation2 + $0x78] sm:$0xff]
    %v856 = vld [vmem:[#allocation2 + $0x80] sm:$0xff]
    %v857 = vld [vmem:[#allocation2 + $0x88] sm:$0xff]
    %v858 = vld [vmem:[#allocation2 + $0x90] sm:$0xff]
    %v859 = vld [vmem:[#allocation2 + $0x98] sm:$0xff]
    %v860 = vld [vmem:[#allocation2 + $0xa0] sm:$0xff]
    %v861 = vld [vmem:[#allocation2 + $0xa8] sm:$0xff]
    %v862 = vld [vmem:[#allocation2 + $0xb0] sm:$0xff]
    %v863 = vld [vmem:[#allocation2 + $0xb8] sm:$0xff]
    %v864 = vld [vmem:[#allocation2 + $0xc0] sm:$0xff]
    %v865 = vld [vmem:[#allocation2 + $0xc8] sm:$0xff]
    %v866 = vld [vmem:[#allocation2 + $0xd0] sm:$0xff]
    %v867 = vld [vmem:[#allocation2 + $0xd8] sm:$0xff]
    %v868 = vld [vmem:[#allocation2 + $0xe0] sm:$0xff]
    %v869 = vld [vmem:[#allocation2 + $0xe8] sm:$0xff]
    %v870 = vld [vmem:[#allocation2 + $0xf0] sm:$0xff]
    %v871 = vld [vmem:[#allocation2 + $0xf8] sm:$0xff]
    %v872 = vld [vmem:[#allocation2 + $0x100] sm:$0xff]
    %v873 = vld [vmem:[#allocation2 + $0x108] sm:$0xff]
    %v874 = vld [vmem:[#allocation2 + $0x110] sm:$0xff]
    %v875 = vld [vmem:[#allocation2 + $0x118] sm:$0xff]
    %v876 = vld [vmem:[#allocation2 + $0x120] sm:$0xff]
    %v877 = vld [vmem:[#allocation2 + $0x128] sm:$0xff]
    %v878 = vld [vmem:[#allocation2 + $0x130] sm:$0xff]
    %v879 = vld [vmem:[#allocation2 + $0x138] sm:$0xff]
    %v880 = vld [vmem:[#allocation2 + $0x140] sm:$0xff]
    %v881 = vld [vmem:[#allocation2 + $0x148] sm:$0xff]
    %v882 = vld [vmem:[#allocation2 + $0x150] sm:$0xff]
    %v883 = vld [vmem:[#allocation2 + $0x158] sm:$0xff]
    %v884 = vld [vmem:[#allocation2 + $0x160] sm:$0xff]
    %v885 = vld [vmem:[#allocation2 + $0x168] sm:$0xff]
    %v886 = vld [vmem:[#allocation2 + $0x170] sm:$0xff]
    %v887 = vld [vmem:[#allocation2 + $0x178] sm:$0xff]
    %v888 = vld [vmem:[#allocation2 + $0x180] sm:$0xff]
    %v889 = vld [vmem:[#allocation2 + $0x188] sm:$0xff]
    %v890 = vld [vmem:[#allocation2 + $0x190] sm:$0xff]
    %v891 = vld [vmem:[#allocation2 + $0x198] sm:$0xff]
    %v892 = vld [vmem:[#allocation2 + $0x1a0] sm:$0xff]
    %v893 = vld [vmem:[#allocation2 + $0x1a8] sm:$0xff]
    %v894 = vld [vmem:[#allocation2 + $0x1b0] sm:$0xff]
    %v895 = vld [vmem:[#allocation2 + $0x1b8] sm:$0xff]
    %v896 = vld [vmem:[#allocation2 + $0x1c0] sm:$0xff]
    %v897 = vld [vmem:[#allocation2 + $0x1c8] sm:$0xff]
    %v898 = vld [vmem:[#allocation2 + $0x1d0] sm:$0xff]
    %v899 = vld [vmem:[#allocation2 + $0x1d8] sm:$0xff]
    %v900 = vld [vmem:[#allocation2 + $0x1e0] sm:$0xff]
    %v901 = vld [vmem:[#allocation2 + $0x1e8] sm:$0xff]
    %v902 = vld [vmem:[#allocation2 + $0x1f0] sm:$0xff]
    %v903 = vld [vmem:[#allocation2 + $0x1f8] sm:$0xff]
    %v906 = vrot.slane %v829, 1
    %v907 = vrot.slane %v829, 2
    %v908 = vrot.slane %v829, 3
    %v909 = vrot.slane %v829, 4
    %v910 = vrot.slane %v829, 5
    %v911 = vrot.slane %v829, 6
    %v912 = vrot.slane %v829, 7
    %v913 = vrot.slane %v830, 1
    %v914 = vrot.slane %v830, 2
    %v915 = vrot.slane %v830, 3
    %v916 = vrot.slane %v830, 4
    %v917 = vrot.slane %v830, 5
    %v918 = vrot.slane %v830, 6
    %v919 = vrot.slane %v830, 7
    %v920 = vperm.slane %v829, 0
    %v921 = vperm.slane %v906, 0
    %v922 = vperm.slane %v907, 0
    %v923 = vperm.slane %v908, 0
    %v924 = vperm.slane %v909, 0
    %v925 = vperm.slane %v910, 0
    %v926 = vperm.slane %v911, 0
    %v927 = vperm.slane %v912, 0
    %v928 = vperm.slane %v830, 0
    %v929 = vperm.slane %v913, 0
    %v930 = vperm.slane %v914, 0
    %v931 = vperm.slane %v915, 0
    %v932 = vperm.slane %v916, 0
    %v933 = vperm.slane %v917, 0
    %v934 = vperm.slane %v918, 0
    %v935 = vperm.slane %v919, 0
    %v952 = vmul.f32 %v920, %v840
    %v953 = vmul.f32 %v920, %v841
    %v954 = vmul.f32 %v920, %v842
    %v955 = vmul.f32 %v920, %v843
    %v956 = vmul.f32 %v921, %v844
    %v957 = vmul.f32 %v921, %v845
    %v958 = vmul.f32 %v921, %v846
    %v959 = vmul.f32 %v921, %v847
    %v960 = vmul.f32 %v922, %v848
    %v961 = vmul.f32 %v922, %v849
    %v962 = vmul.f32 %v922, %v850
    %v963 = vmul.f32 %v922, %v851
    %v964 = vmul.f32 %v923, %v852
    %v965 = vmul.f32 %v923, %v853
    %v966 = vmul.f32 %v923, %v854
    %v967 = vmul.f32 %v923, %v855
    %v968 = vmul.f32 %v924, %v856
    %v969 = vmul.f32 %v924, %v857
    %v970 = vmul.f32 %v924, %v858
    %v971 = vmul.f32 %v924, %v859
    %v972 = vmul.f32 %v925, %v860
    %v973 = vmul.f32 %v925, %v861
    %v974 = vmul.f32 %v925, %v862
    %v975 = vmul.f32 %v925, %v863
    %v976 = vmul.f32 %v926, %v864
    %v977 = vmul.f32 %v926, %v865
    %v978 = vmul.f32 %v926, %v866
    %v979 = vmul.f32 %v926, %v867
    %v980 = vmul.f32 %v927, %v868
    %v981 = vmul.f32 %v927, %v869
    %v982 = vmul.f32 %v927, %v870
    %v983 = vmul.f32 %v927, %v871
    %v984 = vmul.f32 %v928, %v872
    %v985 = vmul.f32 %v928, %v873
    %v986 = vmul.f32 %v928, %v874
    %v987 = vmul.f32 %v928, %v875
    %v988 = vmul.f32 %v929, %v876
    %v989 = vmul.f32 %v929, %v877
    %v990 = vmul.f32 %v929, %v878
    %v991 = vmul.f32 %v929, %v879
    %v992 = vmul.f32 %v930, %v880
    %v993 = vmul.f32 %v930, %v881
    %v994 = vmul.f32 %v930, %v882
    %v995 = vmul.f32 %v930, %v883
    %v996 = vmul.f32 %v931, %v884
    %v997 = vmul.f32 %v931, %v885
    %v998 = vmul.f32 %v931, %v886
    %v999 = vmul.f32 %v931, %v887
    %v1000 = vmul.f32 %v932, %v888
    %v1001 = vmul.f32 %v932, %v889
    %v1002 = vmul.f32 %v932, %v890
    %v1003 = vmul.f32 %v932, %v891
    %v1004 = vmul.f32 %v933, %v892
    %v1005 = vmul.f32 %v933, %v893
    %v1006 = vmul.f32 %v933, %v894
    %v1007 = vmul.f32 %v933, %v895
    %v1008 = vmul.f32 %v934, %v896
    %v1009 = vmul.f32 %v934, %v897
    %v1010 = vmul.f32 %v934, %v898
    %v1011 = vmul.f32 %v934, %v899
    %v1012 = vmul.f32 %v935, %v900
    %v1013 = vmul.f32 %v935, %v901
    %v1014 = vmul.f32 %v935, %v902
    %v1015 = vmul.f32 %v935, %v903
    %v1016 = vadd.f32 %v952, %v956
    %v1017 = vadd.f32 %v1016, %v960
    %v1018 = vadd.f32 %v1017, %v964
    %v1019 = vadd.f32 %v1018, %v968
    %v1020 = vadd.f32 %v1019, %v972
    %v1021 = vadd.f32 %v1020, %v976
    %v1022 = vadd.f32 %v1021, %v980
    %v1023 = vadd.f32 %v1022, %v984
    %v1024 = vadd.f32 %v1023, %v988
    %v1025 = vadd.f32 %v1024, %v992
    %v1026 = vadd.f32 %v1025, %v996
    %v1027 = vadd.f32 %v1026, %v1000
    %v1028 = vadd.f32 %v1027, %v1004
    %v1029 = vadd.f32 %v1028, %v1008
    %v1030 = vadd.f32 %v1029, %v1012
    %v1031 = vadd.f32 %v953, %v957
    %v1032 = vadd.f32 %v1031, %v961
    %v1033 = vadd.f32 %v1032, %v965
    %v1034 = vadd.f32 %v1033, %v969
    %v1035 = vadd.f32 %v1034, %v973
    %v1036 = vadd.f32 %v1035, %v977
    %v1037 = vadd.f32 %v1036, %v981
    %v1038 = vadd.f32 %v1037, %v985
    %v1039 = vadd.f32 %v1038, %v989
    %v1040 = vadd.f32 %v1039, %v993
    %v1041 = vadd.f32 %v1040, %v997
    %v1042 = vadd.f32 %v1041, %v1001
    %v1043 = vadd.f32 %v1042, %v1005
    %v1044 = vadd.f32 %v1043, %v1009
    %v1045 = vadd.f32 %v1044, %v1013
    %v1046 = vadd.f32 %v954, %v958
    %v1047 = vadd.f32 %v1046, %v962
    %v1048 = vadd.f32 %v1047, %v966
    %v1049 = vadd.f32 %v1048, %v970
    %v1050 = vadd.f32 %v1049, %v974
    %v1051 = vadd.f32 %v1050, %v978
    %v1052 = vadd.f32 %v1051, %v982
    %v1053 = vadd.f32 %v1052, %v986
    %v1054 = vadd.f32 %v1053, %v990
    %v1055 = vadd.f32 %v1054, %v994
    %v1056 = vadd.f32 %v1055, %v998
    %v1057 = vadd.f32 %v1056, %v1002
    %v1058 = vadd.f32 %v1057, %v1006
    %v1059 = vadd.f32 %v1058, %v1010
    %v1060 = vadd.f32 %v1059, %v1014
    %v1061 = vadd.f32 %v955, %v959
    %v1062 = vadd.f32 %v1061, %v963
    %v1063 = vadd.f32 %v1062, %v967
    %v1064 = vadd.f32 %v1063, %v971
    %v1065 = vadd.f32 %v1064, %v975
    %v1066 = vadd.f32 %v1065, %v979
    %v1067 = vadd.f32 %v1066, %v983
    %v1068 = vadd.f32 %v1067, %v987
    %v1069 = vadd.f32 %v1068, %v991
    %v1070 = vadd.f32 %v1069, %v995
    %v1071 = vadd.f32 %v1070, %v999
    %v1072 = vadd.f32 %v1071, %v1003
    %v1073 = vadd.f32 %v1072, %v1007
    %v1074 = vadd.f32 %v1073, %v1011
    %v1075 = vadd.f32 %v1074, %v1015
    %s1076 = scalar_lea.vmem [#allocation9], 32
    %1077 = vst [vmem:[%s1076] sm:$0xff] %v1030
    %1078 = vst [vmem:[%s1076 + $0x8] sm:$0xff] %v1045
    %1079 = vst [vmem:[%s1076 + $0x10] sm:$0xff] %v1060
    %1080 = vst [vmem:[%s1076 + $0x18] sm:$0xff] %v1075
    %v1081 = vmul.f32 %v920, %v832
    %v1082 = vmul.f32 %v920, %v833
    %v1083 = vmul.f32 %v920, %v834
    %v1084 = vmul.f32 %v920, %v835
    %v1085 = vmul.f32 %v921, %v832
    %v1086 = vmul.f32 %v921, %v833
    %v1087 = vmul.f32 %v921, %v834
    %v1088 = vmul.f32 %v921, %v835
    %v1089 = vmul.f32 %v922, %v832
    %v1090 = vmul.f32 %v922, %v833
    %v1091 = vmul.f32 %v922, %v834
    %v1092 = vmul.f32 %v922, %v835
    %v1093 = vmul.f32 %v923, %v832
    %v1094 = vmul.f32 %v923, %v833
    %v1095 = vmul.f32 %v923, %v834
    %v1096 = vmul.f32 %v923, %v835
    %v1097 = vmul.f32 %v924, %v832
    %v1098 = vmul.f32 %v924, %v833
    %v1099 = vmul.f32 %v924, %v834
    %v1100 = vmul.f32 %v924, %v835
    %v1101 = vmul.f32 %v925, %v832
    %v1102 = vmul.f32 %v925, %v833
    %v1103 = vmul.f32 %v925, %v834
    %v1104 = vmul.f32 %v925, %v835
    %v1105 = vmul.f32 %v926, %v832
    %v1106 = vmul.f32 %v926, %v833
    %v1107 = vmul.f32 %v926, %v834
    %v1108 = vmul.f32 %v926, %v835
    %v1109 = vmul.f32 %v927, %v832
    %v1110 = vmul.f32 %v927, %v833
    %v1111 = vmul.f32 %v927, %v834
    %v1112 = vmul.f32 %v927, %v835
    %v1113 = vmul.f32 %v928, %v832
    %v1114 = vmul.f32 %v928, %v833
    %v1115 = vmul.f32 %v928, %v834
    %v1116 = vmul.f32 %v928, %v835
    %v1117 = vmul.f32 %v929, %v832
    %v1118 = vmul.f32 %v929, %v833
    %v1119 = vmul.f32 %v929, %v834
    %v1120 = vmul.f32 %v929, %v835
    %v1121 = vmul.f32 %v930, %v832
    %v1122 = vmul.f32 %v930, %v833
    %v1123 = vmul.f32 %v930, %v834
    %v1124 = vmul.f32 %v930, %v835
    %v1125 = vmul.f32 %v931, %v832
    %v1126 = vmul.f32 %v931, %v833
    %v1127 = vmul.f32 %v931, %v834
    %v1128 = vmul.f32 %v931, %v835
    %v1129 = vmul.f32 %v932, %v832
    %v1130 = vmul.f32 %v932, %v833
    %v1131 = vmul.f32 %v932, %v834
    %v1132 = vmul.f32 %v932, %v835
    %v1133 = vmul.f32 %v933, %v832
    %v1134 = vmul.f32 %v933, %v833
    %v1135 = vmul.f32 %v933, %v834
    %v1136 = vmul.f32 %v933, %v835
    %v1137 = vmul.f32 %v934, %v832
    %v1138 = vmul.f32 %v934, %v833
    %v1139 = vmul.f32 %v934, %v834
    %v1140 = vmul.f32 %v934, %v835
    %v1141 = vmul.f32 %v935, %v832
    %v1142 = vmul.f32 %v935, %v833
    %v1143 = vmul.f32 %v935, %v834
    %v1144 = vmul.f32 %v935, %v835
    %v1145 = vsub.f32 1.0, %v1081
    %v1146 = vsub.f32 1.0, %v1082
    %v1147 = vsub.f32 1.0, %v1083
    %v1148 = vsub.f32 1.0, %v1084
    %v1149 = vsub.f32 1.0, %v1085
    %v1150 = vsub.f32 1.0, %v1086
    %v1151 = vsub.f32 1.0, %v1087
    %v1152 = vsub.f32 1.0, %v1088
    %v1153 = vsub.f32 1.0, %v1089
    %v1154 = vsub.f32 1.0, %v1090
    %v1155 = vsub.f32 1.0, %v1091
    %v1156 = vsub.f32 1.0, %v1092
    %v1157 = vsub.f32 1.0, %v1093
    %v1158 = vsub.f32 1.0, %v1094
    %v1159 = vsub.f32 1.0, %v1095
    %v1160 = vsub.f32 1.0, %v1096
    %v1161 = vsub.f32 1.0, %v1097
    %v1162 = vsub.f32 1.0, %v1098
    %v1163 = vsub.f32 1.0, %v1099
    %v1164 = vsub.f32 1.0, %v1100
    %v1165 = vsub.f32 1.0, %v1101
    %v1166 = vsub.f32 1.0, %v1102
    %v1167 = vsub.f32 1.0, %v1103
    %v1168 = vsub.f32 1.0, %v1104
    %v1169 = vsub.f32 1.0, %v1105
    %v1170 = vsub.f32 1.0, %v1106
    %v1171 = vsub.f32 1.0, %v1107
    %v1172 = vsub.f32 1.0, %v1108
    %v1173 = vsub.f32 1.0, %v1109
    %v1174 = vsub.f32 1.0, %v1110
    %v1175 = vsub.f32 1.0, %v1111
    %v1176 = vsub.f32 1.0, %v1112
    %v1177 = vsub.f32 1.0, %v1113
    %v1178 = vsub.f32 1.0, %v1114
    %v1179 = vsub.f32 1.0, %v1115
    %v1180 = vsub.f32 1.0, %v1116
    %v1181 = vsub.f32 1.0, %v1117
    %v1182 = vsub.f32 1.0, %v1118
    %v1183 = vsub.f32 1.0, %v1119
    %v1184 = vsub.f32 1.0, %v1120
    %v1185 = vsub.f32 1.0, %v1121
    %v1186 = vsub.f32 1.0, %v1122
    %v1187 = vsub.f32 1.0, %v1123
    %v1188 = vsub.f32 1.0, %v1124
    %v1189 = vsub.f32 1.0, %v1125
    %v1190 = vsub.f32 1.0, %v1126
    %v1191 = vsub.f32 1.0, %v1127
    %v1192 = vsub.f32 1.0, %v1128
    %v1193 = vsub.f32 1.0, %v1129
    %v1194 = vsub.f32 1.0, %v1130
    %v1195 = vsub.f32 1.0, %v1131
    %v1196 = vsub.f32 1.0, %v1132
    %v1197 = vsub.f32 1.0, %v1133
    %v1198 = vsub.f32 1.0, %v1134
    %v1199 = vsub.f32 1.0, %v1135
    %v1200 = vsub.f32 1.0, %v1136
    %v1201 = vsub.f32 1.0, %v1137
    %v1202 = vsub.f32 1.0, %v1138
    %v1203 = vsub.f32 1.0, %v1139
    %v1204 = vsub.f32 1.0, %v1140
    %v1205 = vsub.f32 1.0, %v1141
    %v1206 = vsub.f32 1.0, %v1142
    %v1207 = vsub.f32 1.0, %v1143
    %v1208 = vsub.f32 1.0, %v1144
    %v1209 = vmul.f32 %v840, %v1145
    %v1210 = vmul.f32 %v841, %v1146
    %v1211 = vmul.f32 %v842, %v1147
    %v1212 = vmul.f32 %v843, %v1148
    %v1213 = vmul.f32 %v844, %v1149
    %v1214 = vmul.f32 %v845, %v1150
    %v1215 = vmul.f32 %v846, %v1151
    %v1216 = vmul.f32 %v847, %v1152
    %v1217 = vmul.f32 %v848, %v1153
    %v1218 = vmul.f32 %v849, %v1154
    %v1219 = vmul.f32 %v850, %v1155
    %v1220 = vmul.f32 %v851, %v1156
    %v1221 = vmul.f32 %v852, %v1157
    %v1222 = vmul.f32 %v853, %v1158
    %v1223 = vmul.f32 %v854, %v1159
    %v1224 = vmul.f32 %v855, %v1160
    %v1225 = vmul.f32 %v856, %v1161
    %v1226 = vmul.f32 %v857, %v1162
    %v1227 = vmul.f32 %v858, %v1163
    %v1228 = vmul.f32 %v859, %v1164
    %v1229 = vmul.f32 %v860, %v1165
    %v1230 = vmul.f32 %v861, %v1166
    %v1231 = vmul.f32 %v862, %v1167
    %v1232 = vmul.f32 %v863, %v1168
    %v1233 = vmul.f32 %v864, %v1169
    %v1234 = vmul.f32 %v865, %v1170
    %v1235 = vmul.f32 %v866, %v1171
    %v1236 = vmul.f32 %v867, %v1172
    %v1237 = vmul.f32 %v868, %v1173
    %v1238 = vmul.f32 %v869, %v1174
    %v1239 = vmul.f32 %v870, %v1175
    %v1240 = vmul.f32 %v871, %v1176
    %v1241 = vmul.f32 %v872, %v1177
    %v1242 = vmul.f32 %v873, %v1178
    %v1243 = vmul.f32 %v874, %v1179
    %v1244 = vmul.f32 %v875, %v1180
    %v1245 = vmul.f32 %v876, %v1181
    %v1246 = vmul.f32 %v877, %v1182
    %v1247 = vmul.f32 %v878, %v1183
    %v1248 = vmul.f32 %v879, %v1184
    %v1249 = vmul.f32 %v880, %v1185
    %v1250 = vmul.f32 %v881, %v1186
    %v1251 = vmul.f32 %v882, %v1187
    %v1252 = vmul.f32 %v883, %v1188
    %v1253 = vmul.f32 %v884, %v1189
    %v1254 = vmul.f32 %v885, %v1190
    %v1255 = vmul.f32 %v886, %v1191
    %v1256 = vmul.f32 %v887, %v1192
    %v1257 = vmul.f32 %v888, %v1193
    %v1258 = vmul.f32 %v889, %v1194
    %v1259 = vmul.f32 %v890, %v1195
    %v1260 = vmul.f32 %v891, %v1196
    %v1261 = vmul.f32 %v892, %v1197
    %v1262 = vmul.f32 %v893, %v1198
    %v1263 = vmul.f32 %v894, %v1199
    %v1264 = vmul.f32 %v895, %v1200
    %v1265 = vmul.f32 %v896, %v1201
    %v1266 = vmul.f32 %v897, %v1202
    %v1267 = vmul.f32 %v898, %v1203
    %v1268 = vmul.f32 %v899, %v1204
    %v1269 = vmul.f32 %v900, %v1205
    %v1270 = vmul.f32 %v901, %v1206
    %v1271 = vmul.f32 %v902, %v1207
    %v1272 = vmul.f32 %v903, %v1208
    %v1273 = vmul.f32 %v920, %v836
    %v1274 = vmul.f32 %v920, %v837
    %v1275 = vmul.f32 %v920, %v838
    %v1276 = vmul.f32 %v920, %v839
    %v1277 = vmul.f32 %v921, %v836
    %v1278 = vmul.f32 %v921, %v837
    %v1279 = vmul.f32 %v921, %v838
    %v1280 = vmul.f32 %v921, %v839
    %v1281 = vmul.f32 %v922, %v836
    %v1282 = vmul.f32 %v922, %v837
    %v1283 = vmul.f32 %v922, %v838
    %v1284 = vmul.f32 %v922, %v839
    %v1285 = vmul.f32 %v923, %v836
    %v1286 = vmul.f32 %v923, %v837
    %v1287 = vmul.f32 %v923, %v838
    %v1288 = vmul.f32 %v923, %v839
    %v1289 = vmul.f32 %v924, %v836
    %v1290 = vmul.f32 %v924, %v837
    %v1291 = vmul.f32 %v924, %v838
    %v1292 = vmul.f32 %v924, %v839
    %v1293 = vmul.f32 %v925, %v836
    %v1294 = vmul.f32 %v925, %v837
    %v1295 = vmul.f32 %v925, %v838
    %v1296 = vmul.f32 %v925, %v839
    %v1297 = vmul.f32 %v926, %v836
    %v1298 = vmul.f32 %v926, %v837
    %v1299 = vmul.f32 %v926, %v838
    %v1300 = vmul.f32 %v926, %v839
    %v1301 = vmul.f32 %v927, %v836
    %v1302 = vmul.f32 %v927, %v837
    %v1303 = vmul.f32 %v927, %v838
    %v1304 = vmul.f32 %v927, %v839
    %v1305 = vmul.f32 %v928, %v836
    %v1306 = vmul.f32 %v928, %v837
    %v1307 = vmul.f32 %v928, %v838
    %v1308 = vmul.f32 %v928, %v839
    %v1309 = vmul.f32 %v929, %v836
    %v1310 = vmul.f32 %v929, %v837
    %v1311 = vmul.f32 %v929, %v838
    %v1312 = vmul.f32 %v929, %v839
    %v1313 = vmul.f32 %v930, %v836
    %v1314 = vmul.f32 %v930, %v837
    %v1315 = vmul.f32 %v930, %v838
    %v1316 = vmul.f32 %v930, %v839
    %v1317 = vmul.f32 %v931, %v836
    %v1318 = vmul.f32 %v931, %v837
    %v1319 = vmul.f32 %v931, %v838
    %v1320 = vmul.f32 %v931, %v839
    %v1321 = vmul.f32 %v932, %v836
    %v1322 = vmul.f32 %v932, %v837
    %v1323 = vmul.f32 %v932, %v838
    %v1324 = vmul.f32 %v932, %v839
    %v1325 = vmul.f32 %v933, %v836
    %v1326 = vmul.f32 %v933, %v837
    %v1327 = vmul.f32 %v933, %v838
    %v1328 = vmul.f32 %v933, %v839
    %v1329 = vmul.f32 %v934, %v836
    %v1330 = vmul.f32 %v934, %v837
    %v1331 = vmul.f32 %v934, %v838
    %v1332 = vmul.f32 %v934, %v839
    %v1333 = vmul.f32 %v935, %v836
    %v1334 = vmul.f32 %v935, %v837
    %v1335 = vmul.f32 %v935, %v838
    %v1336 = vmul.f32 %v935, %v839
    %v1337 = vadd.f32 %v1209, %v1273
    %v1338 = vadd.f32 %v1210, %v1274
    %v1339 = vadd.f32 %v1211, %v1275
    %v1340 = vadd.f32 %v1212, %v1276
    %v1341 = vadd.f32 %v1213, %v1277
    %v1342 = vadd.f32 %v1214, %v1278
    %v1343 = vadd.f32 %v1215, %v1279
    %v1344 = vadd.f32 %v1216, %v1280
    %v1345 = vadd.f32 %v1217, %v1281
    %v1346 = vadd.f32 %v1218, %v1282
    %v1347 = vadd.f32 %v1219, %v1283
    %v1348 = vadd.f32 %v1220, %v1284
    %v1349 = vadd.f32 %v1221, %v1285
    %v1350 = vadd.f32 %v1222, %v1286
    %v1351 = vadd.f32 %v1223, %v1287
    %v1352 = vadd.f32 %v1224, %v1288
    %v1353 = vadd.f32 %v1225, %v1289
    %v1354 = vadd.f32 %v1226, %v1290
    %v1355 = vadd.f32 %v1227, %v1291
    %v1356 = vadd.f32 %v1228, %v1292
    %v1357 = vadd.f32 %v1229, %v1293
    %v1358 = vadd.f32 %v1230, %v1294
    %v1359 = vadd.f32 %v1231, %v1295
    %v1360 = vadd.f32 %v1232, %v1296
    %v1361 = vadd.f32 %v1233, %v1297
    %v1362 = vadd.f32 %v1234, %v1298
    %v1363 = vadd.f32 %v1235, %v1299
    %v1364 = vadd.f32 %v1236, %v1300
    %v1365 = vadd.f32 %v1237, %v1301
    %v1366 = vadd.f32 %v1238, %v1302
    %v1367 = vadd.f32 %v1239, %v1303
    %v1368 = vadd.f32 %v1240, %v1304
    %v1369 = vadd.f32 %v1241, %v1305
    %v1370 = vadd.f32 %v1242, %v1306
    %v1371 = vadd.f32 %v1243, %v1307
    %v1372 = vadd.f32 %v1244, %v1308
    %v1373 = vadd.f32 %v1245, %v1309
    %v1374 = vadd.f32 %v1246, %v1310
    %v1375 = vadd.f32 %v1247, %v1311
    %v1376 = vadd.f32 %v1248, %v1312
    %v1377 = vadd.f32 %v1249, %v1313
    %v1378 = vadd.f32 %v1250, %v1314
    %v1379 = vadd.f32 %v1251, %v1315
    %v1380 = vadd.f32 %v1252, %v1316
    %v1381 = vadd.f32 %v1253, %v1317
    %v1382 = vadd.f32 %v1254, %v1318
    %v1383 = vadd.f32 %v1255, %v1319
    %v1384 = vadd.f32 %v1256, %v1320
    %v1385 = vadd.f32 %v1257, %v1321
    %v1386 = vadd.f32 %v1258, %v1322
    %v1387 = vadd.f32 %v1259, %v1323
    %v1388 = vadd.f32 %v1260, %v1324
    %v1389 = vadd.f32 %v1261, %v1325
    %v1390 = vadd.f32 %v1262, %v1326
    %v1391 = vadd.f32 %v1263, %v1327
    %v1392 = vadd.f32 %v1264, %v1328
    %v1393 = vadd.f32 %v1265, %v1329
    %v1394 = vadd.f32 %v1266, %v1330
    %v1395 = vadd.f32 %v1267, %v1331
    %v1396 = vadd.f32 %v1268, %v1332
    %v1397 = vadd.f32 %v1269, %v1333
    %v1398 = vadd.f32 %v1270, %v1334
    %v1399 = vadd.f32 %v1271, %v1335
    %v1400 = vadd.f32 %v1272, %v1336
    %1401 = vst [vmem:[#allocation2] sm:$0xff] %v1337
    %1402 = vst [vmem:[#allocation2 + $0x8] sm:$0xff] %v1338
    %1403 = vst [vmem:[#allocation2 + $0x10] sm:$0xff] %v1339
    %1404 = vst [vmem:[#allocation2 + $0x18] sm:$0xff] %v1340
    %1405 = vst [vmem:[#allocation2 + $0x20] sm:$0xff] %v1341
    %1406 = vst [vmem:[#allocation2 + $0x28] sm:$0xff] %v1342
    %1407 = vst [vmem:[#allocation2 + $0x30] sm:$0xff] %v1343
    %1408 = vst [vmem:[#allocation2 + $0x38] sm:$0xff] %v1344
    %1409 = vst [vmem:[#allocation2 + $0x40] sm:$0xff] %v1345
    %1410 = vst [vmem:[#allocation2 + $0x48] sm:$0xff] %v1346
    %1411 = vst [vmem:[#allocation2 + $0x50] sm:$0xff] %v1347
    %1412 = vst [vmem:[#allocation2 + $0x58] sm:$0xff] %v1348
    %1413 = vst [vmem:[#allocation2 + $0x60] sm:$0xff] %v1349
    %1414 = vst [vmem:[#allocation2 + $0x68] sm:$0xff] %v1350
    %1415 = vst [vmem:[#allocation2 + $0x70] sm:$0xff] %v1351
    %1416 = vst [vmem:[#allocation2 + $0x78] sm:$0xff] %v1352
    %1417 = vst [vmem:[#allocation2 + $0x80] sm:$0xff] %v1353
    %1418 = vst [vmem:[#allocation2 + $0x88] sm:$0xff] %v1354
    %1419 = vst [vmem:[#allocation2 + $0x90] sm:$0xff] %v1355
    %1420 = vst [vmem:[#allocation2 + $0x98] sm:$0xff] %v1356
    %1421 = vst [vmem:[#allocation2 + $0xa0] sm:$0xff] %v1357
    %1422 = vst [vmem:[#allocation2 + $0xa8] sm:$0xff] %v1358
    %1423 = vst [vmem:[#allocation2 + $0xb0] sm:$0xff] %v1359
    %1424 = vst [vmem:[#allocation2 + $0xb8] sm:$0xff] %v1360
    %1425 = vst [vmem:[#allocation2 + $0xc0] sm:$0xff] %v1361
    %1426 = vst [vmem:[#allocation2 + $0xc8] sm:$0xff] %v1362
    %1427 = vst [vmem:[#allocation2 + $0xd0] sm:$0xff] %v1363
    %1428 = vst [vmem:[#allocation2 + $0xd8] sm:$0xff] %v1364
    %1429 = vst [vmem:[#allocation2 + $0xe0] sm:$0xff] %v1365
    %1430 = vst [vmem:[#allocation2 + $0xe8] sm:$0xff] %v1366
    %1431 = vst [vmem:[#allocation2 + $0xf0] sm:$0xff] %v1367
    %1432 = vst [vmem:[#allocation2 + $0xf8] sm:$0xff] %v1368
    %1433 = vst [vmem:[#allocation2 + $0x100] sm:$0xff] %v1369
    %1434 = vst [vmem:[#allocation2 + $0x108] sm:$0xff] %v1370
    %1435 = vst [vmem:[#allocation2 + $0x110] sm:$0xff] %v1371
    %1436 = vst [vmem:[#allocation2 + $0x118] sm:$0xff] %v1372
    %1437 = vst [vmem:[#allocation2 + $0x120] sm:$0xff] %v1373
    %1438 = vst [vmem:[#allocation2 + $0x128] sm:$0xff] %v1374
    %1439 = vst [vmem:[#allocation2 + $0x130] sm:$0xff] %v1375
    %1440 = vst [vmem:[#allocation2 + $0x138] sm:$0xff] %v1376
    %1441 = vst [vmem:[#allocation2 + $0x140] sm:$0xff] %v1377
    %1442 = vst [vmem:[#allocation2 + $0x148] sm:$0xff] %v1378
    %1443 = vst [vmem:[#allocation2 + $0x150] sm:$0xff] %v1379
    %1444 = vst [vmem:[#allocation2 + $0x158] sm:$0xff] %v1380
    %1445 = vst [vmem:[#allocation2 + $0x160] sm:$0xff] %v1381
    %1446 = vst [vmem:[#allocation2 + $0x168] sm:$0xff] %v1382
    %1447 = vst [vmem:[#allocation2 + $0x170] sm:$0xff] %v1383
    %1448 = vst [vmem:[#allocation2 + $0x178] sm:$0xff] %v1384
    %1449 = vst [vmem:[#allocation2 + $0x180] sm:$0xff] %v1385
    %1450 = vst [vmem:[#allocation2 + $0x188] sm:$0xff] %v1386
    %1451 = vst [vmem:[#allocation2 + $0x190] sm:$0xff] %v1387
    %1452 = vst [vmem:[#allocation2 + $0x198] sm:$0xff] %v1388
    %1453 = vst [vmem:[#allocation2 + $0x1a0] sm:$0xff] %v1389
    %1454 = vst [vmem:[#allocation2 + $0x1a8] sm:$0xff] %v1390
    %1455 = vst [vmem:[#allocation2 + $0x1b0] sm:$0xff] %v1391
    %1456 = vst [vmem:[#allocation2 + $0x1b8] sm:$0xff] %v1392
    %1457 = vst [vmem:[#allocation2 + $0x1c0] sm:$0xff] %v1393
    %1458 = vst [vmem:[#allocation2 + $0x1c8] sm:$0xff] %v1394
    %1459 = vst [vmem:[#allocation2 + $0x1d0] sm:$0xff] %v1395
    %1460 = vst [vmem:[#allocation2 + $0x1d8] sm:$0xff] %v1396
    %1461 = vst [vmem:[#allocation2 + $0x1e0] sm:$0xff] %v1397
    %1462 = vst [vmem:[#allocation2 + $0x1e8] sm:$0xff] %v1398
    %1463 = vst [vmem:[#allocation2 + $0x1f0] sm:$0xff] %v1399
    %1464 = vst [vmem:[#allocation2 + $0x1f8] sm:$0xff] %v1400
    %s1465 = scalar_lea.vmem [#allocation3], 32
    %v1466 = vld [vmem:[%s1465] sm:$0xff]
    %v1467 = vld [vmem:[%s1465 + $0x8] sm:$0xff]
    %s1468 = scalar_lea.vmem [#allocation6], 128
    %v1469 = vld [vmem:[%s1468] sm:$0xff]
    %v1470 = vld [vmem:[%s1468 + $0x8] sm:$0xff]
    %v1471 = vld [vmem:[%s1468 + $0x10] sm:$0xff]
    %v1472 = vld [vmem:[%s1468 + $0x18] sm:$0xff]
    %v1473 = vld [vmem:[%s1468 + $0x20] sm:$0xff]
    %v1474 = vld [vmem:[%s1468 + $0x28] sm:$0xff]
    %v1475 = vld [vmem:[%s1468 + $0x30] sm:$0xff]
    %v1476 = vld [vmem:[%s1468 + $0x38] sm:$0xff]
    %v1477 = vld [vmem:[#allocation2] sm:$0xff]
    %v1478 = vld [vmem:[#allocation2 + $0x8] sm:$0xff]
    %v1479 = vld [vmem:[#allocation2 + $0x10] sm:$0xff]
    %v1480 = vld [vmem:[#allocation2 + $0x18] sm:$0xff]
    %v1481 = vld [vmem:[#allocation2 + $0x20] sm:$0xff]
    %v1482 = vld [vmem:[#allocation2 + $0x28] sm:$0xff]
    %v1483 = vld [vmem:[#allocation2 + $0x30] sm:$0xff]
    %v1484 = vld [vmem:[#allocation2 + $0x38] sm:$0xff]
    %v1485 = vld [vmem:[#allocation2 + $0x40] sm:$0xff]
    %v1486 = vld [vmem:[#allocation2 + $0x48] sm:$0xff]
    %v1487 = vld [vmem:[#allocation2 + $0x50] sm:$0xff]
    %v1488 = vld [vmem:[#allocation2 + $0x58] sm:$0xff]
    %v1489 = vld [vmem:[#allocation2 + $0x60] sm:$0xff]
    %v1490 = vld [vmem:[#allocation2 + $0x68] sm:$0xff]
    %v1491 = vld [vmem:[#allocation2 + $0x70] sm:$0xff]
    %v1492 = vld [vmem:[#allocation2 + $0x78] sm:$0xff]
    %v1493 = vld [vmem:[#allocation2 + $0x80] sm:$0xff]
    %v1494 = vld [vmem:[#allocation2 + $0x88] sm:$0xff]
    %v1495 = vld [vmem:[#allocation2 + $0x90] sm:$0xff]
    %v1496 = vld [vmem:[#allocation2 + $0x98] sm:$0xff]
    %v1497 = vld [vmem:[#allocation2 + $0xa0] sm:$0xff]
    %v1498 = vld [vmem:[#allocation2 + $0xa8] sm:$0xff]
    %v1499 = vld [vmem:[#allocation2 + $0xb0] sm:$0xff]
    %v1500 = vld [vmem:[#allocation2 + $0xb8] sm:$0xff]
    %v1501 = vld [vmem:[#allocation2 + $0xc0] sm:$0xff]
    %v1502 = vld [vmem:[#allocation2 + $0xc8] sm:$0xff]
    %v1503 = vld [vmem:[#allocation2 + $0xd0] sm:$0xff]
    %v1504 = vld [vmem:[#allocation2 + $0xd8] sm:$0xff]
    %v1505 = vld [vmem:[#allocation2 + $0xe0] sm:$0xff]
    %v1506 = vld [vmem:[#allocation2 + $0xe8] sm:$0xff]
    %v1507 = vld [vmem:[#allocation2 + $0xf0] sm:$0xff]
    %v1508 = vld [vmem:[#allocation2 + $0xf8] sm:$0xff]
    %v1509 = vld [vmem:[#allocation2 + $0x100] sm:$0xff]
    %v1510 = vld [vmem:[#allocation2 + $0x108] sm:$0xff]
    %v1511 = vld [vmem:[#allocation2 + $0x110] sm:$0xff]
    %v1512 = vld [vmem:[#allocation2 + $0x118] sm:$0xff]
    %v1513 = vld [vmem:[#allocation2 + $0x120] sm:$0xff]
    %v1514 = vld [vmem:[#allocation2 + $0x128] sm:$0xff]
    %v1515 = vld [vmem:[#allocation2 + $0x130] sm:$0xff]
    %v1516 = vld [vmem:[#allocation2 + $0x138] sm:$0xff]
    %v1517 = vld [vmem:[#allocation2 + $0x140] sm:$0xff]
    %v1518 = vld [vmem:[#allocation2 + $0x148] sm:$0xff]
    %v1519 = vld [vmem:[#allocation2 + $0x150] sm:$0xff]
    %v1520 = vld [vmem:[#allocation2 + $0x158] sm:$0xff]
    %v1521 = vld [vmem:[#allocation2 + $0x160] sm:$0xff]
    %v1522 = vld [vmem:[#allocation2 + $0x168] sm:$0xff]
    %v1523 = vld [vmem:[#allocation2 + $0x170] sm:$0xff]
    %v1524 = vld [vmem:[#allocation2 + $0x178] sm:$0xff]
    %v1525 = vld [vmem:[#allocation2 + $0x180] sm:$0xff]
    %v1526 = vld [vmem:[#allocation2 + $0x188] sm:$0xff]
    %v1527 = vld [vmem:[#allocation2 + $0x190] sm:$0xff]
    %v1528 = vld [vmem:[#allocation2 + $0x198] sm:$0xff]
    %v1529 = vld [vmem:[#allocation2 + $0x1a0] sm:$0xff]
    %v1530 = vld [vmem:[#allocation2 + $0x1a8] sm:$0xff]
    %v1531 = vld [vmem:[#allocation2 + $0x1b0] sm:$0xff]
    %v1532 = vld [vmem:[#allocation2 + $0x1b8] sm:$0xff]
    %v1533 = vld [vmem:[#allocation2 + $0x1c0] sm:$0xff]
    %v1534 = vld [vmem:[#allocation2 + $0x1c8] sm:$0xff]
    %v1535 = vld [vmem:[#allocation2 + $0x1d0] sm:$0xff]
    %v1536 = vld [vmem:[#allocation2 + $0x1d8] sm:$0xff]
    %v1537 = vld [vmem:[#allocation2 + $0x1e0] sm:$0xff]
    %v1538 = vld [vmem:[#allocation2 + $0x1e8] sm:$0xff]
    %v1539 = vld [vmem:[#allocation2 + $0x1f0] sm:$0xff]
    %v1540 = vld [vmem:[#allocation2 + $0x1f8] sm:$0xff]
    %v1543 = vrot.slane %v1466, 1
    %v1544 = vrot.slane %v1466, 2
    %v1545 = vrot.slane %v1466, 3
    %v1546 = vrot.slane %v1466, 4
    %v1547 = vrot.slane %v1466, 5
    %v1548 = vrot.slane %v1466, 6
    %v1549 = vrot.slane %v1466, 7
    %v1550 = vrot.slane %v1467, 1
    %v1551 = vrot.slane %v1467, 2
    %v1552 = vrot.slane %v1467, 3
    %v1553 = vrot.slane %v1467, 4
    %v1554 = vrot.slane %v1467, 5
    %v1555 = vrot.slane %v1467, 6
    %v1556 = vrot.slane %v1467, 7
    %v1557 = vperm.slane %v1466, 0
    %v1558 = vperm.slane %v1543, 0
    %v1559 = vperm.slane %v1544, 0
    %v1560 = vperm.slane %v1545, 0
    %v1561 = vperm.slane %v1546, 0
    %v1562 = vperm.slane %v1547, 0
    %v1563 = vperm.slane %v1548, 0
    %v1564 = vperm.slane %v1549, 0
    %v1565 = vperm.slane %v1467, 0
    %v1566 = vperm.slane %v1550, 0
    %v1567 = vperm.slane %v1551, 0
    %v1568 = vperm.slane %v1552, 0
    %v1569 = vperm.slane %v1553, 0
    %v1570 = vperm.slane %v1554, 0
    %v1571 = vperm.slane %v1555, 0
    %v1572 = vperm.slane %v1556, 0
    %v1589 = vmul.f32 %v1557, %v1477
    %v1590 = vmul.f32 %v1557, %v1478
    %v1591 = vmul.f32 %v1557, %v1479
    %v1592 = vmul.f32 %v1557, %v1480
    %v1593 = vmul.f32 %v1558, %v1481
    %v1594 = vmul.f32 %v1558, %v1482
    %v1595 = vmul.f32 %v1558, %v1483
    %v1596 = vmul.f32 %v1558, %v1484
    %v1597 = vmul.f32 %v1559, %v1485
    %v1598 = vmul.f32 %v1559, %v1486
    %v1599 = vmul.f32 %v1559, %v1487
    %v1600 = vmul.f32 %v1559, %v1488
    %v1601 = vmul.f32 %v1560, %v1489
    %v1602 = vmul.f32 %v1560, %v1490
    %v1603 = vmul.f32 %v1560, %v1491
    %v1604 = vmul.f32 %v1560, %v1492
    %v1605 = vmul.f32 %v1561, %v1493
    %v1606 = vmul.f32 %v1561, %v1494
    %v1607 = vmul.f32 %v1561, %v1495
    %v1608 = vmul.f32 %v1561, %v1496
    %v1609 = vmul.f32 %v1562, %v1497
    %v1610 = vmul.f32 %v1562, %v1498
    %v1611 = vmul.f32 %v1562, %v1499
    %v1612 = vmul.f32 %v1562, %v1500
    %v1613 = vmul.f32 %v1563, %v1501
    %v1614 = vmul.f32 %v1563, %v1502
    %v1615 = vmul.f32 %v1563, %v1503
    %v1616 = vmul.f32 %v1563, %v1504
    %v1617 = vmul.f32 %v1564, %v1505
    %v1618 = vmul.f32 %v1564, %v1506
    %v1619 = vmul.f32 %v1564, %v1507
    %v1620 = vmul.f32 %v1564, %v1508
    %v1621 = vmul.f32 %v1565, %v1509
    %v1622 = vmul.f32 %v1565, %v1510
    %v1623 = vmul.f32 %v1565, %v1511
    %v1624 = vmul.f32 %v1565, %v1512
    %v1625 = vmul.f32 %v1566, %v1513
    %v1626 = vmul.f32 %v1566, %v1514
    %v1627 = vmul.f32 %v1566, %v1515
    %v1628 = vmul.f32 %v1566, %v1516
    %v1629 = vmul.f32 %v1567, %v1517
    %v1630 = vmul.f32 %v1567, %v1518
    %v1631 = vmul.f32 %v1567, %v1519
    %v1632 = vmul.f32 %v1567, %v1520
    %v1633 = vmul.f32 %v1568, %v1521
    %v1634 = vmul.f32 %v1568, %v1522
    %v1635 = vmul.f32 %v1568, %v1523
    %v1636 = vmul.f32 %v1568, %v1524
    %v1637 = vmul.f32 %v1569, %v1525
    %v1638 = vmul.f32 %v1569, %v1526
    %v1639 = vmul.f32 %v1569, %v1527
    %v1640 = vmul.f32 %v1569, %v1528
    %v1641 = vmul.f32 %v1570, %v1529
    %v1642 = vmul.f32 %v1570, %v1530
    %v1643 = vmul.f32 %v1570, %v1531
    %v1644 = vmul.f32 %v1570, %v1532
    %v1645 = vmul.f32 %v1571, %v1533
    %v1646 = vmul.f32 %v1571, %v1534
    %v1647 = vmul.f32 %v1571, %v1535
    %v1648 = vmul.f32 %v1571, %v1536
    %v1649 = vmul.f32 %v1572, %v1537
    %v1650 = vmul.f32 %v1572, %v1538
    %v1651 = vmul.f32 %v1572, %v1539
    %v1652 = vmul.f32 %v1572, %v1540
    %v1653 = vadd.f32 %v1589, %v1593
    %v1654 = vadd.f32 %v1653, %v1597
    %v1655 = vadd.f32 %v1654, %v1601
    %v1656 = vadd.f32 %v1655, %v1605
    %v1657 = vadd.f32 %v1656, %v1609
    %v1658 = vadd.f32 %v1657, %v1613
    %v1659 = vadd.f32 %v1658, %v1617
    %v1660 = vadd.f32 %v1659, %v1621
    %v1661 = vadd.f32 %v1660, %v1625
    %v1662 = vadd.f32 %v1661, %v1629
    %v1663 = vadd.f32 %v1662, %v1633
    %v1664 = vadd.f32 %v1663, %v1637
    %v1665 = vadd.f32 %v1664, %v1641
    %v1666 = vadd.f32 %v1665, %v1645
    %v1667 = vadd.f32 %v1666, %v1649
    %v1668 = vadd.f32 %v1590, %v1594
    %v1669 = vadd.f32 %v1668, %v1598
    %v1670 = vadd.f32 %v1669, %v1602
    %v1671 = vadd.f32 %v1670, %v1606
    %v1672 = vadd.f32 %v1671, %v1610
    %v1673 = vadd.f32 %v1672, %v1614
    %v1674 = vadd.f32 %v1673, %v1618
    %v1675 = vadd.f32 %v1674, %v1622
    %v1676 = vadd.f32 %v1675, %v1626
    %v1677 = vadd.f32 %v1676, %v1630
    %v1678 = vadd.f32 %v1677, %v1634
    %v1679 = vadd.f32 %v1678, %v1638
    %v1680 = vadd.f32 %v1679, %v1642
    %v1681 = vadd.f32 %v1680, %v1646
    %v1682 = vadd.f32 %v1681, %v1650
    %v1683 = vadd.f32 %v1591, %v1595
    %v1684 = vadd.f32 %v1683, %v1599
    %v1685 = vadd.f32 %v1684, %v1603
    %v1686 = vadd.f32 %v1685, %v1607
    %v1687 = vadd.f32 %v1686, %v1611
    %v1688 = vadd.f32 %v1687, %v1615
    %v1689 = vadd.f32 %v1688, %v1619
    %v1690 = vadd.f32 %v1689, %v1623
    %v1691 = vadd.f32 %v1690, %v1627
    %v1692 = vadd.f32 %v1691, %v1631
    %v1693 = vadd.f32 %v1692, %v1635
    %v1694 = vadd.f32 %v1693, %v1639
    %v1695 = vadd.f32 %v1694, %v1643
    %v1696 = vadd.f32 %v1695, %v1647
    %v1697 = vadd.f32 %v1696, %v1651
    %v1698 = vadd.f32 %v1592, %v1596
    %v1699 = vadd.f32 %v1698, %v1600
    %v1700 = vadd.f32 %v1699, %v1604
    %v1701 = vadd.f32 %v1700, %v1608
    %v1702 = vadd.f32 %v1701, %v1612
    %v1703 = vadd.f32 %v1702, %v1616
    %v1704 = vadd.f32 %v1703, %v1620
    %v1705 = vadd.f32 %v1704, %v1624
    %v1706 = vadd.f32 %v1705, %v1628
    %v1707 = vadd.f32 %v1706, %v1632
    %v1708 = vadd.f32 %v1707, %v1636
    %v1709 = vadd.f32 %v1708, %v1640
    %v1710 = vadd.f32 %v1709, %v1644
    %v1711 = vadd.f32 %v1710, %v1648
    %v1712 = vadd.f32 %v1711, %v1652
    %s1713 = scalar_lea.vmem [#allocation9], 64
    %1714 = vst [vmem:[%s1713] sm:$0xff] %v1667
    %1715 = vst [vmem:[%s1713 + $0x8] sm:$0xff] %v1682
    %1716 = vst [vmem:[%s1713 + $0x10] sm:$0xff] %v1697
    %1717 = vst [vmem:[%s1713 + $0x18] sm:$0xff] %v1712
    %v1718 = vmul.f32 %v1557, %v1469
    %v1719 = vmul.f32 %v1557, %v1470
    %v1720 = vmul.f32 %v1557, %v1471
    %v1721 = vmul.f32 %v1557, %v1472
    %v1722 = vmul.f32 %v1558, %v1469
    %v1723 = vmul.f32 %v1558, %v1470
    %v1724 = vmul.f32 %v1558, %v1471
    %v1725 = vmul.f32 %v1558, %v1472
    %v1726 = vmul.f32 %v1559, %v1469
    %v1727 = vmul.f32 %v1559, %v1470
    %v1728 = vmul.f32 %v1559, %v1471
    %v1729 = vmul.f32 %v1559, %v1472
    %v1730 = vmul.f32 %v1560, %v1469
    %v1731 = vmul.f32 %v1560, %v1470
    %v1732 = vmul.f32 %v1560, %v1471
    %v1733 = vmul.f32 %v1560, %v1472
    %v1734 = vmul.f32 %v1561, %v1469
    %v1735 = vmul.f32 %v1561, %v1470
    %v1736 = vmul.f32 %v1561, %v1471
    %v1737 = vmul.f32 %v1561, %v1472
    %v1738 = vmul.f32 %v1562, %v1469
    %v1739 = vmul.f32 %v1562, %v1470
    %v1740 = vmul.f32 %v1562, %v1471
    %v1741 = vmul.f32 %v1562, %v1472
    %v1742 = vmul.f32 %v1563, %v1469
    %v1743 = vmul.f32 %v1563, %v1470
    %v1744 = vmul.f32 %v1563, %v1471
    %v1745 = vmul.f32 %v1563, %v1472
    %v1746 = vmul.f32 %v1564, %v1469
    %v1747 = vmul.f32 %v1564, %v1470
    %v1748 = vmul.f32 %v1564, %v1471
    %v1749 = vmul.f32 %v1564, %v1472
    %v1750 = vmul.f32 %v1565, %v1469
    %v1751 = vmul.f32 %v1565, %v1470
    %v1752 = vmul.f32 %v1565, %v1471
    %v1753 = vmul.f32 %v1565, %v1472
    %v1754 = vmul.f32 %v1566, %v1469
    %v1755 = vmul.f32 %v1566, %v1470
    %v1756 = vmul.f32 %v1566, %v1471
    %v1757 = vmul.f32 %v1566, %v1472
    %v1758 = vmul.f32 %v1567, %v1469
    %v1759 = vmul.f32 %v1567, %v1470
    %v1760 = vmul.f32 %v1567, %v1471
    %v1761 = vmul.f32 %v1567, %v1472
    %v1762 = vmul.f32 %v1568, %v1469
    %v1763 = vmul.f32 %v1568, %v1470
    %v1764 = vmul.f32 %v1568, %v1471
    %v1765 = vmul.f32 %v1568, %v1472
    %v1766 = vmul.f32 %v1569, %v1469
    %v1767 = vmul.f32 %v1569, %v1470
    %v1768 = vmul.f32 %v1569, %v1471
    %v1769 = vmul.f32 %v1569, %v1472
    %v1770 = vmul.f32 %v1570, %v1469
    %v1771 = vmul.f32 %v1570, %v1470
    %v1772 = vmul.f32 %v1570, %v1471
    %v1773 = vmul.f32 %v1570, %v1472
    %v1774 = vmul.f32 %v1571, %v1469
    %v1775 = vmul.f32 %v1571, %v1470
    %v1776 = vmul.f32 %v1571, %v1471
    %v1777 = vmul.f32 %v1571, %v1472
    %v1778 = vmul.f32 %v1572, %v1469
    %v1779 = vmul.f32 %v1572, %v1470
    %v1780 = vmul.f32 %v1572, %v1471
    %v1781 = vmul.f32 %v1572, %v1472
    %v1782 = vsub.f32 1.0, %v1718
    %v1783 = vsub.f32 1.0, %v1719
    %v1784 = vsub.f32 1.0, %v1720
    %v1785 = vsub.f32 1.0, %v1721
    %v1786 = vsub.f32 1.0, %v1722
    %v1787 = vsub.f32 1.0, %v1723
    %v1788 = vsub.f32 1.0, %v1724
    %v1789 = vsub.f32 1.0, %v1725
    %v1790 = vsub.f32 1.0, %v1726
    %v1791 = vsub.f32 1.0, %v1727
    %v1792 = vsub.f32 1.0, %v1728
    %v1793 = vsub.f32 1.0, %v1729
    %v1794 = vsub.f32 1.0, %v1730
    %v1795 = vsub.f32 1.0, %v1731
    %v1796 = vsub.f32 1.0, %v1732
    %v1797 = vsub.f32 1.0, %v1733
    %v1798 = vsub.f32 1.0, %v1734
    %v1799 = vsub.f32 1.0, %v1735
    %v1800 = vsub.f32 1.0, %v1736
    %v1801 = vsub.f32 1.0, %v1737
    %v1802 = vsub.f32 1.0, %v1738
    %v1803 = vsub.f32 1.0, %v1739
    %v1804 = vsub.f32 1.0, %v1740
    %v1805 = vsub.f32 1.0, %v1741
    %v1806 = vsub.f32 1.0, %v1742
    %v1807 = vsub.f32 1.0, %v1743
    %v1808 = vsub.f32 1.0, %v1744
    %v1809 = vsub.f32 1.0, %v1745
    %v1810 = vsub.f32 1.0, %v1746
    %v1811 = vsub.f32 1.0, %v1747
    %v1812 = vsub.f32 1.0, %v1748
    %v1813 = vsub.f32 1.0, %v1749
    %v1814 = vsub.f32 1.0, %v1750
    %v1815 = vsub.f32 1.0, %v1751
    %v1816 = vsub.f32 1.0, %v1752
    %v1817 = vsub.f32 1.0, %v1753
    %v1818 = vsub.f32 1.0, %v1754
    %v1819 = vsub.f32 1.0, %v1755
    %v1820 = vsub.f32 1.0, %v1756
    %v1821 = vsub.f32 1.0, %v1757
    %v1822 = vsub.f32 1.0, %v1758
    %v1823 = vsub.f32 1.0, %v1759
    %v1824 = vsub.f32 1.0, %v1760
    %v1825 = vsub.f32 1.0, %v1761
    %v1826 = vsub.f32 1.0, %v1762
    %v1827 = vsub.f32 1.0, %v1763
    %v1828 = vsub.f32 1.0, %v1764
    %v1829 = vsub.f32 1.0, %v1765
    %v1830 = vsub.f32 1.0, %v1766
    %v1831 = vsub.f32 1.0, %v1767
    %v1832 = vsub.f32 1.0, %v1768
    %v1833 = vsub.f32 1.0, %v1769
    %v1834 = vsub.f32 1.0, %v1770
    %v1835 = vsub.f32 1.0, %v1771
    %v1836 = vsub.f32 1.0, %v1772
    %v1837 = vsub.f32 1.0, %v1773
    %v1838 = vsub.f32 1.0, %v1774
    %v1839 = vsub.f32 1.0, %v1775
    %v1840 = vsub.f32 1.0, %v1776
    %v1841 = vsub.f32 1.0, %v1777
    %v1842 = vsub.f32 1.0, %v1778
    %v1843 = vsub.f32 1.0, %v1779
    %v1844 = vsub.f32 1.0, %v1780
    %v1845 = vsub.f32 1.0, %v1781
    %v1846 = vmul.f32 %v1477, %v1782
    %v1847 = vmul.f32 %v1478, %v1783
    %v1848 = vmul.f32 %v1479, %v1784
    %v1849 = vmul.f32 %v1480, %v1785
    %v1850 = vmul.f32 %v1481, %v1786
    %v1851 = vmul.f32 %v1482, %v1787
    %v1852 = vmul.f32 %v1483, %v1788
    %v1853 = vmul.f32 %v1484, %v1789
    %v1854 = vmul.f32 %v1485, %v1790
    %v1855 = vmul.f32 %v1486, %v1791
    %v1856 = vmul.f32 %v1487, %v1792
    %v1857 = vmul.f32 %v1488, %v1793
    %v1858 = vmul.f32 %v1489, %v1794
    %v1859 = vmul.f32 %v1490, %v1795
    %v1860 = vmul.f32 %v1491, %v1796
    %v1861 = vmul.f32 %v1492, %v1797
    %v1862 = vmul.f32 %v1493, %v1798
    %v1863 = vmul.f32 %v1494, %v1799
    %v1864 = vmul.f32 %v1495, %v1800
    %v1865 = vmul.f32 %v1496, %v1801
    %v1866 = vmul.f32 %v1497, %v1802
    %v1867 = vmul.f32 %v1498, %v1803
    %v1868 = vmul.f32 %v1499, %v1804
    %v1869 = vmul.f32 %v1500, %v1805
    %v1870 = vmul.f32 %v1501, %v1806
    %v1871 = vmul.f32 %v1502, %v1807
    %v1872 = vmul.f32 %v1503, %v1808
    %v1873 = vmul.f32 %v1504, %v1809
    %v1874 = vmul.f32 %v1505, %v1810
    %v1875 = vmul.f32 %v1506, %v1811
    %v1876 = vmul.f32 %v1507, %v1812
    %v1877 = vmul.f32 %v1508, %v1813
    %v1878 = vmul.f32 %v1509, %v1814
    %v1879 = vmul.f32 %v1510, %v1815
    %v1880 = vmul.f32 %v1511, %v1816
    %v1881 = vmul.f32 %v1512, %v1817
    %v1882 = vmul.f32 %v1513, %v1818
    %v1883 = vmul.f32 %v1514, %v1819
    %v1884 = vmul.f32 %v1515, %v1820
    %v1885 = vmul.f32 %v1516, %v1821
    %v1886 = vmul.f32 %v1517, %v1822
    %v1887 = vmul.f32 %v1518, %v1823
    %v1888 = vmul.f32 %v1519, %v1824
    %v1889 = vmul.f32 %v1520, %v1825
    %v1890 = vmul.f32 %v1521, %v1826
    %v1891 = vmul.f32 %v1522, %v1827
    %v1892 = vmul.f32 %v1523, %v1828
    %v1893 = vmul.f32 %v1524, %v1829
    %v1894 = vmul.f32 %v1525, %v1830
    %v1895 = vmul.f32 %v1526, %v1831
    %v1896 = vmul.f32 %v1527, %v1832
    %v1897 = vmul.f32 %v1528, %v1833
    %v1898 = vmul.f32 %v1529, %v1834
    %v1899 = vmul.f32 %v1530, %v1835
    %v1900 = vmul.f32 %v1531, %v1836
    %v1901 = vmul.f32 %v1532, %v1837
    %v1902 = vmul.f32 %v1533, %v1838
    %v1903 = vmul.f32 %v1534, %v1839
    %v1904 = vmul.f32 %v1535, %v1840
    %v1905 = vmul.f32 %v1536, %v1841
    %v1906 = vmul.f32 %v1537, %v1842
    %v1907 = vmul.f32 %v1538, %v1843
    %v1908 = vmul.f32 %v1539, %v1844
    %v1909 = vmul.f32 %v1540, %v1845
    %v1910 = vmul.f32 %v1557, %v1473
    %v1911 = vmul.f32 %v1557, %v1474
    %v1912 = vmul.f32 %v1557, %v1475
    %v1913 = vmul.f32 %v1557, %v1476
    %v1914 = vmul.f32 %v1558, %v1473
    %v1915 = vmul.f32 %v1558, %v1474
    %v1916 = vmul.f32 %v1558, %v1475
    %v1917 = vmul.f32 %v1558, %v1476
    %v1918 = vmul.f32 %v1559, %v1473
    %v1919 = vmul.f32 %v1559, %v1474
    %v1920 = vmul.f32 %v1559, %v1475
    %v1921 = vmul.f32 %v1559, %v1476
    %v1922 = vmul.f32 %v1560, %v1473
    %v1923 = vmul.f32 %v1560, %v1474
    %v1924 = vmul.f32 %v1560, %v1475
    %v1925 = vmul.f32 %v1560, %v1476
    %v1926 = vmul.f32 %v1561, %v1473
    %v1927 = vmul.f32 %v1561, %v1474
    %v1928 = vmul.f32 %v1561, %v1475
    %v1929 = vmul.f32 %v1561, %v1476
    %v1930 = vmul.f32 %v1562, %v1473
    %v1931 = vmul.f32 %v1562, %v1474
    %v1932 = vmul.f32 %v1562, %v1475
    %v1933 = vmul.f32 %v1562, %v1476
    %v1934 = vmul.f32 %v1563, %v1473
    %v1935 = vmul.f32 %v1563, %v1474
    %v1936 = vmul.f32 %v1563, %v1475
    %v1937 = vmul.f32 %v1563, %v1476
    %v1938 = vmul.f32 %v1564, %v1473
    %v1939 = vmul.f32 %v1564, %v1474
    %v1940 = vmul.f32 %v1564, %v1475
    %v1941 = vmul.f32 %v1564, %v1476
    %v1942 = vmul.f32 %v1565, %v1473
    %v1943 = vmul.f32 %v1565, %v1474
    %v1944 = vmul.f32 %v1565, %v1475
    %v1945 = vmul.f32 %v1565, %v1476
    %v1946 = vmul.f32 %v1566, %v1473
    %v1947 = vmul.f32 %v1566, %v1474
    %v1948 = vmul.f32 %v1566, %v1475
    %v1949 = vmul.f32 %v1566, %v1476
    %v1950 = vmul.f32 %v1567, %v1473
    %v1951 = vmul.f32 %v1567, %v1474
    %v1952 = vmul.f32 %v1567, %v1475
    %v1953 = vmul.f32 %v1567, %v1476
    %v1954 = vmul.f32 %v1568, %v1473
    %v1955 = vmul.f32 %v1568, %v1474
    %v1956 = vmul.f32 %v1568, %v1475
    %v1957 = vmul.f32 %v1568, %v1476
    %v1958 = vmul.f32 %v1569, %v1473
    %v1959 = vmul.f32 %v1569, %v1474
    %v1960 = vmul.f32 %v1569, %v1475
    %v1961 = vmul.f32 %v1569, %v1476
    %v1962 = vmul.f32 %v1570, %v1473
    %v1963 = vmul.f32 %v1570, %v1474
    %v1964 = vmul.f32 %v1570, %v1475
    %v1965 = vmul.f32 %v1570, %v1476
    %v1966 = vmul.f32 %v1571, %v1473
    %v1967 = vmul.f32 %v1571, %v1474
    %v1968 = vmul.f32 %v1571, %v1475
    %v1969 = vmul.f32 %v1571, %v1476
    %v1970 = vmul.f32 %v1572, %v1473
    %v1971 = vmul.f32 %v1572, %v1474
    %v1972 = vmul.f32 %v1572, %v1475
    %v1973 = vmul.f32 %v1572, %v1476
    %v1974 = vadd.f32 %v1846, %v1910
    %v1975 = vadd.f32 %v1847, %v1911
    %v1976 = vadd.f32 %v1848, %v1912
    %v1977 = vadd.f32 %v1849, %v1913
    %v1978 = vadd.f32 %v1850, %v1914
    %v1979 = vadd.f32 %v1851, %v1915
    %v1980 = vadd.f32 %v1852, %v1916
    %v1981 = vadd.f32 %v1853, %v1917
    %v1982 = vadd.f32 %v1854, %v1918
    %v1983 = vadd.f32 %v1855, %v1919
    %v1984 = vadd.f32 %v1856, %v1920
    %v1985 = vadd.f32 %v1857, %v1921
    %v1986 = vadd.f32 %v1858, %v1922
    %v1987 = vadd.f32 %v1859, %v1923
    %v1988 = vadd.f32 %v1860, %v1924
    %v1989 = vadd.f32 %v1861, %v1925
    %v1990 = vadd.f32 %v1862, %v1926
    %v1991 = vadd.f32 %v1863, %v1927
    %v1992 = vadd.f32 %v1864, %v1928
    %v1993 = vadd.f32 %v1865, %v1929
    %v1994 = vadd.f32 %v1866, %v1930
    %v1995 = vadd.f32 %v1867, %v1931
    %v1996 = vadd.f32 %v1868, %v1932
    %v1997 = vadd.f32 %v1869, %v1933
    %v1998 = vadd.f32 %v1870, %v1934
    %v1999 = vadd.f32 %v1871, %v1935
    %v2000 = vadd.f32 %v1872, %v1936
    %v2001 = vadd.f32 %v1873, %v1937
    %v2002 = vadd.f32 %v1874, %v1938
    %v2003 = vadd.f32 %v1875, %v1939
    %v2004 = vadd.f32 %v1876, %v1940
    %v2005 = vadd.f32 %v1877, %v1941
    %v2006 = vadd.f32 %v1878, %v1942
    %v2007 = vadd.f32 %v1879, %v1943
    %v2008 = vadd.f32 %v1880, %v1944
    %v2009 = vadd.f32 %v1881, %v1945
    %v2010 = vadd.f32 %v1882, %v1946
    %v2011 = vadd.f32 %v1883, %v1947
    %v2012 = vadd.f32 %v1884, %v1948
    %v2013 = vadd.f32 %v1885, %v1949
    %v2014 = vadd.f32 %v1886, %v1950
    %v2015 = vadd.f32 %v1887, %v1951
    %v2016 = vadd.f32 %v1888, %v1952
    %v2017 = vadd.f32 %v1889, %v1953
    %v2018 = vadd.f32 %v1890, %v1954
    %v2019 = vadd.f32 %v1891, %v1955
    %v2020 = vadd.f32 %v1892, %v1956
    %v2021 = vadd.f32 %v1893, %v1957
    %v2022 = vadd.f32 %v1894, %v1958
    %v2023 = vadd.f32 %v1895, %v1959
    %v2024 = vadd.f32 %v1896, %v1960
    %v2025 = vadd.f32 %v1897, %v1961
    %v2026 = vadd.f32 %v1898, %v1962
    %v2027 = vadd.f32 %v1899, %v1963
    %v2028 = vadd.f32 %v1900, %v1964
    %v2029 = vadd.f32 %v1901, %v1965
    %v2030 = vadd.f32 %v1902, %v1966
    %v2031 = vadd.f32 %v1903, %v1967
    %v2032 = vadd.f32 %v1904, %v1968
    %v2033 = vadd.f32 %v1905, %v1969
    %v2034 = vadd.f32 %v1906, %v1970
    %v2035 = vadd.f32 %v1907, %v1971
    %v2036 = vadd.f32 %v1908, %v1972
    %v2037 = vadd.f32 %v1909, %v1973
    %2038 = vst [vmem:[#allocation2] sm:$0xff] %v1974
    %2039 = vst [vmem:[#allocation2 + $0x8] sm:$0xff] %v1975
    %2040 = vst [vmem:[#allocation2 + $0x10] sm:$0xff] %v1976
    %2041 = vst [vmem:[#allocation2 + $0x18] sm:$0xff] %v1977
    %2042 = vst [vmem:[#allocation2 + $0x20] sm:$0xff] %v1978
    %2043 = vst [vmem:[#allocation2 + $0x28] sm:$0xff] %v1979
    %2044 = vst [vmem:[#allocation2 + $0x30] sm:$0xff] %v1980
    %2045 = vst [vmem:[#allocation2 + $0x38] sm:$0xff] %v1981
    %2046 = vst [vmem:[#allocation2 + $0x40] sm:$0xff] %v1982
    %2047 = vst [vmem:[#allocation2 + $0x48] sm:$0xff] %v1983
    %2048 = vst [vmem:[#allocation2 + $0x50] sm:$0xff] %v1984
    %2049 = vst [vmem:[#allocation2 + $0x58] sm:$0xff] %v1985
    %2050 = vst [vmem:[#allocation2 + $0x60] sm:$0xff] %v1986
    %2051 = vst [vmem:[#allocation2 + $0x68] sm:$0xff] %v1987
    %2052 = vst [vmem:[#allocation2 + $0x70] sm:$0xff] %v1988
    %2053 = vst [vmem:[#allocation2 + $0x78] sm:$0xff] %v1989
    %2054 = vst [vmem:[#allocation2 + $0x80] sm:$0xff] %v1990
    %2055 = vst [vmem:[#allocation2 + $0x88] sm:$0xff] %v1991
    %2056 = vst [vmem:[#allocation2 + $0x90] sm:$0xff] %v1992
    %2057 = vst [vmem:[#allocation2 + $0x98] sm:$0xff] %v1993
    %2058 = vst [vmem:[#allocation2 + $0xa0] sm:$0xff] %v1994
    %2059 = vst [vmem:[#allocation2 + $0xa8] sm:$0xff] %v1995
    %2060 = vst [vmem:[#allocation2 + $0xb0] sm:$0xff] %v1996
    %2061 = vst [vmem:[#allocation2 + $0xb8] sm:$0xff] %v1997
    %2062 = vst [vmem:[#allocation2 + $0xc0] sm:$0xff] %v1998
    %2063 = vst [vmem:[#allocation2 + $0xc8] sm:$0xff] %v1999
    %2064 = vst [vmem:[#allocation2 + $0xd0] sm:$0xff] %v2000
    %2065 = vst [vmem:[#allocation2 + $0xd8] sm:$0xff] %v2001
    %2066 = vst [vmem:[#allocation2 + $0xe0] sm:$0xff] %v2002
    %2067 = vst [vmem:[#allocation2 + $0xe8] sm:$0xff] %v2003
    %2068 = vst [vmem:[#allocation2 + $0xf0] sm:$0xff] %v2004
    %2069 = vst [vmem:[#allocation2 + $0xf8] sm:$0xff] %v2005
    %2070 = vst [vmem:[#allocation2 + $0x100] sm:$0xff] %v2006
    %2071 = vst [vmem:[#allocation2 + $0x108] sm:$0xff] %v2007
    %2072 = vst [vmem:[#allocation2 + $0x110] sm:$0xff] %v2008
    %2073 = vst [vmem:[#allocation2 + $0x118] sm:$0xff] %v2009
    %2074 = vst [vmem:[#allocation2 + $0x120] sm:$0xff] %v2010
    %2075 = vst [vmem:[#allocation2 + $0x128] sm:$0xff] %v2011
    %2076 = vst [vmem:[#allocation2 + $0x130] sm:$0xff] %v2012
    %2077 = vst [vmem:[#allocation2 + $0x138] sm:$0xff] %v2013
    %2078 = vst [vmem:[#allocation2 + $0x140] sm:$0xff] %v2014
    %2079 = vst [vmem:[#allocation2 + $0x148] sm:$0xff] %v2015
    %2080 = vst [vmem:[#allocation2 + $0x150] sm:$0xff] %v2016
    %2081 = vst [vmem:[#allocation2 + $0x158] sm:$0xff] %v2017
    %2082 = vst [vmem:[#allocation2 + $0x160] sm:$0xff] %v2018
    %2083 = vst [vmem:[#allocation2 + $0x168] sm:$0xff] %v2019
    %2084 = vst [vmem:[#allocation2 + $0x170] sm:$0xff] %v2020
    %2085 = vst [vmem:[#allocation2 + $0x178] sm:$0xff] %v2021
    %2086 = vst [vmem:[#allocation2 + $0x180] sm:$0xff] %v2022
    %2087 = vst [vmem:[#allocation2 + $0x188] sm:$0xff] %v2023
    %2088 = vst [vmem:[#allocation2 + $0x190] sm:$0xff] %v2024
    %2089 = vst [vmem:[#allocation2 + $0x198] sm:$0xff] %v2025
    %2090 = vst [vmem:[#allocation2 + $0x1a0] sm:$0xff] %v2026
    %2091 = vst [vmem:[#allocation2 + $0x1a8] sm:$0xff] %v2027
    %2092 = vst [vmem:[#allocation2 + $0x1b0] sm:$0xff] %v2028
    %2093 = vst [vmem:[#allocation2 + $0x1b8] sm:$0xff] %v2029
    %2094 = vst [vmem:[#allocation2 + $0x1c0] sm:$0xff] %v2030
    %2095 = vst [vmem:[#allocation2 + $0x1c8] sm:$0xff] %v2031
    %2096 = vst [vmem:[#allocation2 + $0x1d0] sm:$0xff] %v2032
    %2097 = vst [vmem:[#allocation2 + $0x1d8] sm:$0xff] %v2033
    %2098 = vst [vmem:[#allocation2 + $0x1e0] sm:$0xff] %v2034
    %2099 = vst [vmem:[#allocation2 + $0x1e8] sm:$0xff] %v2035
    %2100 = vst [vmem:[#allocation2 + $0x1f0] sm:$0xff] %v2036
    %2101 = vst [vmem:[#allocation2 + $0x1f8] sm:$0xff] %v2037
    %s2102 = scalar_lea.vmem [#allocation3], 48
    %v2103 = vld [vmem:[%s2102] sm:$0xff]
    %v2104 = vld [vmem:[%s2102 + $0x8] sm:$0xff]
    %s2105 = scalar_lea.vmem [#allocation6], 192
    %v2106 = vld [vmem:[%s2105] sm:$0xff]
    %v2107 = vld [vmem:[%s2105 + $0x8] sm:$0xff]
    %v2108 = vld [vmem:[%s2105 + $0x10] sm:$0xff]
    %v2109 = vld [vmem:[%s2105 + $0x18] sm:$0xff]
    %v2110 = vld [vmem:[%s2105 + $0x20] sm:$0xff]
    %v2111 = vld [vmem:[%s2105 + $0x28] sm:$0xff]
    %v2112 = vld [vmem:[%s2105 + $0x30] sm:$0xff]
    %v2113 = vld [vmem:[%s2105 + $0x38] sm:$0xff]
    %v2114 = vld [vmem:[#allocation2] sm:$0xff]
    %v2115 = vld [vmem:[#allocation2 + $0x8] sm:$0xff]
    %v2116 = vld [vmem:[#allocation2 + $0x10] sm:$0xff]
    %v2117 = vld [vmem:[#allocation2 + $0x18] sm:$0xff]
    %v2118 = vld [vmem:[#allocation2 + $0x20] sm:$0xff]
    %v2119 = vld [vmem:[#allocation2 + $0x28] sm:$0xff]
    %v2120 = vld [vmem:[#allocation2 + $0x30] sm:$0xff]
    %v2121 = vld [vmem:[#allocation2 + $0x38] sm:$0xff]
    %v2122 = vld [vmem:[#allocation2 + $0x40] sm:$0xff]
    %v2123 = vld [vmem:[#allocation2 + $0x48] sm:$0xff]
    %v2124 = vld [vmem:[#allocation2 + $0x50] sm:$0xff]
    %v2125 = vld [vmem:[#allocation2 + $0x58] sm:$0xff]
    %v2126 = vld [vmem:[#allocation2 + $0x60] sm:$0xff]
    %v2127 = vld [vmem:[#allocation2 + $0x68] sm:$0xff]
    %v2128 = vld [vmem:[#allocation2 + $0x70] sm:$0xff]
    %v2129 = vld [vmem:[#allocation2 + $0x78] sm:$0xff]
    %v2130 = vld [vmem:[#allocation2 + $0x80] sm:$0xff]
    %v2131 = vld [vmem:[#allocation2 + $0x88] sm:$0xff]
    %v2132 = vld [vmem:[#allocation2 + $0x90] sm:$0xff]
    %v2133 = vld [vmem:[#allocation2 + $0x98] sm:$0xff]
    %v2134 = vld [vmem:[#allocation2 + $0xa0] sm:$0xff]
    %v2135 = vld [vmem:[#allocation2 + $0xa8] sm:$0xff]
    %v2136 = vld [vmem:[#allocation2 + $0xb0] sm:$0xff]
    %v2137 = vld [vmem:[#allocation2 + $0xb8] sm:$0xff]
    %v2138 = vld [vmem:[#allocation2 + $0xc0] sm:$0xff]
    %v2139 = vld [vmem:[#allocation2 + $0xc8] sm:$0xff]
    %v2140 = vld [vmem:[#allocation2 + $0xd0] sm:$0xff]
    %v2141 = vld [vmem:[#allocation2 + $0xd8] sm:$0xff]
    %v2142 = vld [vmem:[#allocation2 + $0xe0] sm:$0xff]
    %v2143 = vld [vmem:[#allocation2 + $0xe8] sm:$0xff]
    %v2144 = vld [vmem:[#allocation2 + $0xf0] sm:$0xff]
    %v2145 = vld [vmem:[#allocation2 + $0xf8] sm:$0xff]
    %v2146 = vld [vmem:[#allocation2 + $0x100] sm:$0xff]
    %v2147 = vld [vmem:[#allocation2 + $0x108] sm:$0xff]
    %v2148 = vld [vmem:[#allocation2 + $0x110] sm:$0xff]
    %v2149 = vld [vmem:[#allocation2 + $0x118] sm:$0xff]
    %v2150 = vld [vmem:[#allocation2 + $0x120] sm:$0xff]
    %v2151 = vld [vmem:[#allocation2 + $0x128] sm:$0xff]
    %v2152 = vld [vmem:[#allocation2 + $0x130] sm:$0xff]
    %v2153 = vld [vmem:[#allocation2 + $0x138] sm:$0xff]
    %v2154 = vld [vmem:[#allocation2 + $0x140] sm:$0xff]
    %v2155 = vld [vmem:[#allocation2 + $0x148] sm:$0xff]
    %v2156 = vld [vmem:[#allocation2 + $0x150] sm:$0xff]
    %v2157 = vld [vmem:[#allocation2 + $0x158] sm:$0xff]
    %v2158 = vld [vmem:[#allocation2 + $0x160] sm:$0xff]
    %v2159 = vld [vmem:[#allocation2 + $0x168] sm:$0xff]
    %v2160 = vld [vmem:[#allocation2 + $0x170] sm:$0xff]
    %v2161 = vld [vmem:[#allocation2 + $0x178] sm:$0xff]
    %v2162 = vld [vmem:[#allocation2 + $0x180] sm:$0xff]
    %v2163 = vld [vmem:[#allocation2 + $0x188] sm:$0xff]
    %v2164 = vld [vmem:[#allocation2 + $0x190] sm:$0xff]
    %v2165 = vld [vmem:[#allocation2 + $0x198] sm:$0xff]
    %v2166 = vld [vmem:[#allocation2 + $0x1a0] sm:$0xff]
    %v2167 = vld [vmem:[#allocation2 + $0x1a8] sm:$0xff]
    %v2168 = vld [vmem:[#allocation2 + $0x1b0] sm:$0xff]
    %v2169 = vld [vmem:[#allocation2 + $0x1b8] sm:$0xff]
    %v2170 = vld [vmem:[#allocation2 + $0x1c0] sm:$0xff]
    %v2171 = vld [vmem:[#allocation2 + $0x1c8] sm:$0xff]
    %v2172 = vld [vmem:[#allocation2 + $0x1d0] sm:$0xff]
    %v2173 = vld [vmem:[#allocation2 + $0x1d8] sm:$0xff]
    %v2174 = vld [vmem:[#allocation2 + $0x1e0] sm:$0xff]
    %v2175 = vld [vmem:[#allocation2 + $0x1e8] sm:$0xff]
    %v2176 = vld [vmem:[#allocation2 + $0x1f0] sm:$0xff]
    %v2177 = vld [vmem:[#allocation2 + $0x1f8] sm:$0xff]
    %v2180 = vrot.slane %v2103, 1
    %v2181 = vrot.slane %v2103, 2
    %v2182 = vrot.slane %v2103, 3
    %v2183 = vrot.slane %v2103, 4
    %v2184 = vrot.slane %v2103, 5
    %v2185 = vrot.slane %v2103, 6
    %v2186 = vrot.slane %v2103, 7
    %v2187 = vrot.slane %v2104, 1
    %v2188 = vrot.slane %v2104, 2
    %v2189 = vrot.slane %v2104, 3
    %v2190 = vrot.slane %v2104, 4
    %v2191 = vrot.slane %v2104, 5
    %v2192 = vrot.slane %v2104, 6
    %v2193 = vrot.slane %v2104, 7
    %v2194 = vperm.slane %v2103, 0
    %v2195 = vperm.slane %v2180, 0
    %v2196 = vperm.slane %v2181, 0
    %v2197 = vperm.slane %v2182, 0
    %v2198 = vperm.slane %v2183, 0
    %v2199 = vperm.slane %v2184, 0
    %v2200 = vperm.slane %v2185, 0
    %v2201 = vperm.slane %v2186, 0
    %v2202 = vperm.slane %v2104, 0
    %v2203 = vperm.slane %v2187, 0
    %v2204 = vperm.slane %v2188, 0
    %v2205 = vperm.slane %v2189, 0
    %v2206 = vperm.slane %v2190, 0
    %v2207 = vperm.slane %v2191, 0
    %v2208 = vperm.slane %v2192, 0
    %v2209 = vperm.slane %v2193, 0
    %v2226 = vmul.f32 %v2194, %v2114
    %v2227 = vmul.f32 %v2194, %v2115
    %v2228 = vmul.f32 %v2194, %v2116
    %v2229 = vmul.f32 %v2194, %v2117
    %v2230 = vmul.f32 %v2195, %v2118
    %v2231 = vmul.f32 %v2195, %v2119
    %v2232 = vmul.f32 %v2195, %v2120
    %v2233 = vmul.f32 %v2195, %v2121
    %v2234 = vmul.f32 %v2196, %v2122
    %v2235 = vmul.f32 %v2196, %v2123
    %v2236 = vmul.f32 %v2196, %v2124
    %v2237 = vmul.f32 %v2196, %v2125
    %v2238 = vmul.f32 %v2197, %v2126
    %v2239 = vmul.f32 %v2197, %v2127
    %v2240 = vmul.f32 %v2197, %v2128
    %v2241 = vmul.f32 %v2197, %v2129
    %v2242 = vmul.f32 %v2198, %v2130
    %v2243 = vmul.f32 %v2198, %v2131
    %v2244 = vmul.f32 %v2198, %v2132
    %v2245 = vmul.f32 %v2198, %v2133
    %v2246 = vmul.f32 %v2199, %v2134
    %v2247 = vmul.f32 %v2199, %v2135
    %v2248 = vmul.f32 %v2199, %v2136
    %v2249 = vmul.f32 %v2199, %v2137
    %v2250 = vmul.f32 %v2200, %v2138
    %v2251 = vmul.f32 %v2200, %v2139
    %v2252 = vmul.f32 %v2200, %v2140
    %v2253 = vmul.f32 %v2200, %v2141
    %v2254 = vmul.f32 %v2201, %v2142
    %v2255 = vmul.f32 %v2201, %v2143
    %v2256 = vmul.f32 %v2201, %v2144
    %v2257 = vmul.f32 %v2201, %v2145
    %v2258 = vmul.f32 %v2202, %v2146
    %v2259 = vmul.f32 %v2202, %v2147
    %v2260 = vmul.f32 %v2202, %v2148
    %v2261 = vmul.f32 %v2202, %v2149
    %v2262 = vmul.f32 %v2203, %v2150
    %v2263 = vmul.f32 %v2203, %v2151
    %v2264 = vmul.f32 %v2203, %v2152
    %v2265 = vmul.f32 %v2203, %v2153
    %v2266 = vmul.f32 %v2204, %v2154
    %v2267 = vmul.f32 %v2204, %v2155
    %v2268 = vmul.f32 %v2204, %v2156
    %v2269 = vmul.f32 %v2204, %v2157
    %v2270 = vmul.f32 %v2205, %v2158
    %v2271 = vmul.f32 %v2205, %v2159
    %v2272 = vmul.f32 %v2205, %v2160
    %v2273 = vmul.f32 %v2205, %v2161
    %v2274 = vmul.f32 %v2206, %v2162
    %v2275 = vmul.f32 %v2206, %v2163
    %v2276 = vmul.f32 %v2206, %v2164
    %v2277 = vmul.f32 %v2206, %v2165
    %v2278 = vmul.f32 %v2207, %v2166
    %v2279 = vmul.f32 %v2207, %v2167
    %v2280 = vmul.f32 %v2207, %v2168
    %v2281 = vmul.f32 %v2207, %v2169
    %v2282 = vmul.f32 %v2208, %v2170
    %v2283 = vmul.f32 %v2208, %v2171
    %v2284 = vmul.f32 %v2208, %v2172
    %v2285 = vmul.f32 %v2208, %v2173
    %v2286 = vmul.f32 %v2209, %v2174
    %v2287 = vmul.f32 %v2209, %v2175
    %v2288 = vmul.f32 %v2209, %v2176
    %v2289 = vmul.f32 %v2209, %v2177
    %v2290 = vadd.f32 %v2226, %v2230
    %v2291 = vadd.f32 %v2290, %v2234
    %v2292 = vadd.f32 %v2291, %v2238
    %v2293 = vadd.f32 %v2292, %v2242
    %v2294 = vadd.f32 %v2293, %v2246
    %v2295 = vadd.f32 %v2294, %v2250
    %v2296 = vadd.f32 %v2295, %v2254
    %v2297 = vadd.f32 %v2296, %v2258
    %v2298 = vadd.f32 %v2297, %v2262
    %v2299 = vadd.f32 %v2298, %v2266
    %v2300 = vadd.f32 %v2299, %v2270
    %v2301 = vadd.f32 %v2300, %v2274
    %v2302 = vadd.f32 %v2301, %v2278
    %v2303 = vadd.f32 %v2302, %v2282
    %v2304 = vadd.f32 %v2303, %v2286
    %v2305 = vadd.f32 %v2227, %v2231
    %v2306 = vadd.f32 %v2305, %v2235
    %v2307 = vadd.f32 %v2306, %v2239
    %v2308 = vadd.f32 %v2307, %v2243
    %v2309 = vadd.f32 %v2308, %v2247
    %v2310 = vadd.f32 %v2309, %v2251
    %v2311 = vadd.f32 %v2310, %v2255
    %v2312 = vadd.f32 %v2311, %v2259
    %v2313 = vadd.f32 %v2312, %v2263
    %v2314 = vadd.f32 %v2313, %v2267
    %v2315 = vadd.f32 %v2314, %v2271
    %v2316 = vadd.f32 %v2315, %v2275
    %v2317 = vadd.f32 %v2316, %v2279
    %v2318 = vadd.f32 %v2317, %v2283
    %v2319 = vadd.f32 %v2318, %v2287
    %v2320 = vadd.f32 %v2228, %v2232
    %v2321 = vadd.f32 %v2320, %v2236
    %v2322 = vadd.f32 %v2321, %v2240
    %v2323 = vadd.f32 %v2322, %v2244
    %v2324 = vadd.f32 %v2323, %v2248
    %v2325 = vadd.f32 %v2324, %v2252
    %v2326 = vadd.f32 %v2325, %v2256
    %v2327 = vadd.f32 %v2326, %v2260
    %v2328 = vadd.f32 %v2327, %v2264
    %v2329 = vadd.f32 %v2328, %v2268
    %v2330 = vadd.f32 %v2329, %v2272
    %v2331 = vadd.f32 %v2330, %v2276
    %v2332 = vadd.f32 %v2331, %v2280
    %v2333 = vadd.f32 %v2332, %v2284
    %v2334 = vadd.f32 %v2333, %v2288
    %v2335 = vadd.f32 %v2229, %v2233
    %v2336 = vadd.f32 %v2335, %v2237
    %v2337 = vadd.f32 %v2336, %v2241
    %v2338 = vadd.f32 %v2337, %v2245
    %v2339 = vadd.f32 %v2338, %v2249
    %v2340 = vadd.f32 %v2339, %v2253
    %v2341 = vadd.f32 %v2340, %v2257
    %v2342 = vadd.f32 %v2341, %v2261
    %v2343 = vadd.f32 %v2342, %v2265
    %v2344 = vadd.f32 %v2343, %v2269
    %v2345 = vadd.f32 %v2344, %v2273
    %v2346 = vadd.f32 %v2345, %v2277
    %v2347 = vadd.f32 %v2346, %v2281
    %v2348 = vadd.f32 %v2347, %v2285
    %v2349 = vadd.f32 %v2348, %v2289
    %s2350 = scalar_lea.vmem [#allocation9], 96
    %2351 = vst [vmem:[%s2350] sm:$0xff] %v2304
    %2352 = vst [vmem:[%s2350 + $0x8] sm:$0xff] %v2319
    %2353 = vst [vmem:[%s2350 + $0x10] sm:$0xff] %v2334
    %2354 = vst [vmem:[%s2350 + $0x18] sm:$0xff] %v2349
    %v2355 = vmul.f32 %v2194, %v2106
    %v2356 = vmul.f32 %v2194, %v2107
    %v2357 = vmul.f32 %v2194, %v2108
    %v2358 = vmul.f32 %v2194, %v2109
    %v2359 = vmul.f32 %v2195, %v2106
    %v2360 = vmul.f32 %v2195, %v2107
    %v2361 = vmul.f32 %v2195, %v2108
    %v2362 = vmul.f32 %v2195, %v2109
    %v2363 = vmul.f32 %v2196, %v2106
    %v2364 = vmul.f32 %v2196, %v2107
    %v2365 = vmul.f32 %v2196, %v2108
    %v2366 = vmul.f32 %v2196, %v2109
    %v2367 = vmul.f32 %v2197, %v2106
    %v2368 = vmul.f32 %v2197, %v2107
    %v2369 = vmul.f32 %v2197, %v2108
    %v2370 = vmul.f32 %v2197, %v2109
    %v2371 = vmul.f32 %v2198, %v2106
    %v2372 = vmul.f32 %v2198, %v2107
    %v2373 = vmul.f32 %v2198, %v2108
    %v2374 = vmul.f32 %v2198, %v2109
    %v2375 = vmul.f32 %v2199, %v2106
    %v2376 = vmul.f32 %v2199, %v2107
    %v2377 = vmul.f32 %v2199, %v2108
    %v2378 = vmul.f32 %v2199, %v2109
    %v2379 = vmul.f32 %v2200, %v2106
    %v2380 = vmul.f32 %v2200, %v2107
    %v2381 = vmul.f32 %v2200, %v2108
    %v2382 = vmul.f32 %v2200, %v2109
    %v2383 = vmul.f32 %v2201, %v2106
    %v2384 = vmul.f32 %v2201, %v2107
    %v2385 = vmul.f32 %v2201, %v2108
    %v2386 = vmul.f32 %v2201, %v2109
    %v2387 = vmul.f32 %v2202, %v2106
    %v2388 = vmul.f32 %v2202, %v2107
    %v2389 = vmul.f32 %v2202, %v2108
    %v2390 = vmul.f32 %v2202, %v2109
    %v2391 = vmul.f32 %v2203, %v2106
    %v2392 = vmul.f32 %v2203, %v2107
    %v2393 = vmul.f32 %v2203, %v2108
    %v2394 = vmul.f32 %v2203, %v2109
    %v2395 = vmul.f32 %v2204, %v2106
    %v2396 = vmul.f32 %v2204, %v2107
    %v2397 = vmul.f32 %v2204, %v2108
    %v2398 = vmul.f32 %v2204, %v2109
    %v2399 = vmul.f32 %v2205, %v2106
    %v2400 = vmul.f32 %v2205, %v2107
    %v2401 = vmul.f32 %v2205, %v2108
    %v2402 = vmul.f32 %v2205, %v2109
    %v2403 = vmul.f32 %v2206, %v2106
    %v2404 = vmul.f32 %v2206, %v2107
    %v2405 = vmul.f32 %v2206, %v2108
    %v2406 = vmul.f32 %v2206, %v2109
    %v2407 = vmul.f32 %v2207, %v2106
    %v2408 = vmul.f32 %v2207, %v2107
    %v2409 = vmul.f32 %v2207, %v2108
    %v2410 = vmul.f32 %v2207, %v2109
    %v2411 = vmul.f32 %v2208, %v2106
    %v2412 = vmul.f32 %v2208, %v2107
    %v2413 = vmul.f32 %v2208, %v2108
    %v2414 = vmul.f32 %v2208, %v2109
    %v2415 = vmul.f32 %v2209, %v2106
    %v2416 = vmul.f32 %v2209, %v2107
    %v2417 = vmul.f32 %v2209, %v2108
    %v2418 = vmul.f32 %v2209, %v2109
    %v2419 = vsub.f32 1.0, %v2355
    %v2420 = vsub.f32 1.0, %v2356
    %v2421 = vsub.f32 1.0, %v2357
    %v2422 = vsub.f32 1.0, %v2358
    %v2423 = vsub.f32 1.0, %v2359
    %v2424 = vsub.f32 1.0, %v2360
    %v2425 = vsub.f32 1.0, %v2361
    %v2426 = vsub.f32 1.0, %v2362
    %v2427 = vsub.f32 1.0, %v2363
    %v2428 = vsub.f32 1.0, %v2364
    %v2429 = vsub.f32 1.0, %v2365
    %v2430 = vsub.f32 1.0, %v2366
    %v2431 = vsub.f32 1.0, %v2367
    %v2432 = vsub.f32 1.0, %v2368
    %v2433 = vsub.f32 1.0, %v2369
    %v2434 = vsub.f32 1.0, %v2370
    %v2435 = vsub.f32 1.0, %v2371
    %v2436 = vsub.f32 1.0, %v2372
    %v2437 = vsub.f32 1.0, %v2373
    %v2438 = vsub.f32 1.0, %v2374
    %v2439 = vsub.f32 1.0, %v2375
    %v2440 = vsub.f32 1.0, %v2376
    %v2441 = vsub.f32 1.0, %v2377
    %v2442 = vsub.f32 1.0, %v2378
    %v2443 = vsub.f32 1.0, %v2379
    %v2444 = vsub.f32 1.0, %v2380
    %v2445 = vsub.f32 1.0, %v2381
    %v2446 = vsub.f32 1.0, %v2382
    %v2447 = vsub.f32 1.0, %v2383
    %v2448 = vsub.f32 1.0, %v2384
    %v2449 = vsub.f32 1.0, %v2385
    %v2450 = vsub.f32 1.0, %v2386
    %v2451 = vsub.f32 1.0, %v2387
    %v2452 = vsub.f32 1.0, %v2388
    %v2453 = vsub.f32 1.0, %v2389
    %v2454 = vsub.f32 1.0, %v2390
    %v2455 = vsub.f32 1.0, %v2391
    %v2456 = vsub.f32 1.0, %v2392
    %v2457 = vsub.f32 1.0, %v2393
    %v2458 = vsub.f32 1.0, %v2394
    %v2459 = vsub.f32 1.0, %v2395
    %v2460 = vsub.f32 1.0, %v2396
    %v2461 = vsub.f32 1.0, %v2397
    %v2462 = vsub.f32 1.0, %v2398
    %v2463 = vsub.f32 1.0, %v2399
    %v2464 = vsub.f32 1.0, %v2400
    %v2465 = vsub.f32 1.0, %v2401
    %v2466 = vsub.f32 1.0, %v2402
    %v2467 = vsub.f32 1.0, %v2403
    %v2468 = vsub.f32 1.0, %v2404
    %v2469 = vsub.f32 1.0, %v2405
    %v2470 = vsub.f32 1.0, %v2406
    %v2471 = vsub.f32 1.0, %v2407
    %v2472 = vsub.f32 1.0, %v2408
    %v2473 = vsub.f32 1.0, %v2409
    %v2474 = vsub.f32 1.0, %v2410
    %v2475 = vsub.f32 1.0, %v2411
    %v2476 = vsub.f32 1.0, %v2412
    %v2477 = vsub.f32 1.0, %v2413
    %v2478 = vsub.f32 1.0, %v2414
    %v2479 = vsub.f32 1.0, %v2415
    %v2480 = vsub.f32 1.0, %v2416
    %v2481 = vsub.f32 1.0, %v2417
    %v2482 = vsub.f32 1.0, %v2418
    %v2483 = vmul.f32 %v2114, %v2419
    %v2484 = vmul.f32 %v2115, %v2420
    %v2485 = vmul.f32 %v2116, %v2421
    %v2486 = vmul.f32 %v2117, %v2422
    %v2487 = vmul.f32 %v2118, %v2423
    %v2488 = vmul.f32 %v2119, %v2424
    %v2489 = vmul.f32 %v2120, %v2425
    %v2490 = vmul.f32 %v2121, %v2426
    %v2491 = vmul.f32 %v2122, %v2427
    %v2492 = vmul.f32 %v2123, %v2428
    %v2493 = vmul.f32 %v2124, %v2429
    %v2494 = vmul.f32 %v2125, %v2430
    %v2495 = vmul.f32 %v2126, %v2431
    %v2496 = vmul.f32 %v2127, %v2432
    %v2497 = vmul.f32 %v2128, %v2433
    %v2498 = vmul.f32 %v2129, %v2434
    %v2499 = vmul.f32 %v2130, %v2435
    %v2500 = vmul.f32 %v2131, %v2436
    %v2501 = vmul.f32 %v2132, %v2437
    %v2502 = vmul.f32 %v2133, %v2438
    %v2503 = vmul.f32 %v2134, %v2439
    %v2504 = vmul.f32 %v2135, %v2440
    %v2505 = vmul.f32 %v2136, %v2441
    %v2506 = vmul.f32 %v2137, %v2442
    %v2507 = vmul.f32 %v2138, %v2443
    %v2508 = vmul.f32 %v2139, %v2444
    %v2509 = vmul.f32 %v2140, %v2445
    %v2510 = vmul.f32 %v2141, %v2446
    %v2511 = vmul.f32 %v2142, %v2447
    %v2512 = vmul.f32 %v2143, %v2448
    %v2513 = vmul.f32 %v2144, %v2449
    %v2514 = vmul.f32 %v2145, %v2450
    %v2515 = vmul.f32 %v2146, %v2451
    %v2516 = vmul.f32 %v2147, %v2452
    %v2517 = vmul.f32 %v2148, %v2453
    %v2518 = vmul.f32 %v2149, %v2454
    %v2519 = vmul.f32 %v2150, %v2455
    %v2520 = vmul.f32 %v2151, %v2456
    %v2521 = vmul.f32 %v2152, %v2457
    %v2522 = vmul.f32 %v2153, %v2458
    %v2523 = vmul.f32 %v2154, %v2459
    %v2524 = vmul.f32 %v2155, %v2460
    %v2525 = vmul.f32 %v2156, %v2461
    %v2526 = vmul.f32 %v2157, %v2462
    %v2527 = vmul.f32 %v2158, %v2463
    %v2528 = vmul.f32 %v2159, %v2464
    %v2529 = vmul.f32 %v2160, %v2465
    %v2530 = vmul.f32 %v2161, %v2466
    %v2531 = vmul.f32 %v2162, %v2467
    %v2532 = vmul.f32 %v2163, %v2468
    %v2533 = vmul.f32 %v2164, %v2469
    %v2534 = vmul.f32 %v2165, %v2470
    %v2535 = vmul.f32 %v2166, %v2471
    %v2536 = vmul.f32 %v2167, %v2472
    %v2537 = vmul.f32 %v2168, %v2473
    %v2538 = vmul.f32 %v2169, %v2474
    %v2539 = vmul.f32 %v2170, %v2475
    %v2540 = vmul.f32 %v2171, %v2476
    %v2541 = vmul.f32 %v2172, %v2477
    %v2542 = vmul.f32 %v2173, %v2478
    %v2543 = vmul.f32 %v2174, %v2479
    %v2544 = vmul.f32 %v2175, %v2480
    %v2545 = vmul.f32 %v2176, %v2481
    %v2546 = vmul.f32 %v2177, %v2482
    %v2547 = vmul.f32 %v2194, %v2110
    %v2548 = vmul.f32 %v2194, %v2111
    %v2549 = vmul.f32 %v2194, %v2112
    %v2550 = vmul.f32 %v2194, %v2113
    %v2551 = vmul.f32 %v2195, %v2110
    %v2552 = vmul.f32 %v2195, %v2111
    %v2553 = vmul.f32 %v2195, %v2112
    %v2554 = vmul.f32 %v2195, %v2113
    %v2555 = vmul.f32 %v2196, %v2110
    %v2556 = vmul.f32 %v2196, %v2111
    %v2557 = vmul.f32 %v2196, %v2112
    %v2558 = vmul.f32 %v2196, %v2113
    %v2559 = vmul.f32 %v2197, %v2110
    %v2560 = vmul.f32 %v2197, %v2111
    %v2561 = vmul.f32 %v2197, %v2112
    %v2562 = vmul.f32 %v2197, %v2113
    %v2563 = vmul.f32 %v2198, %v2110
    %v2564 = vmul.f32 %v2198, %v2111
    %v2565 = vmul.f32 %v2198, %v2112
    %v2566 = vmul.f32 %v2198, %v2113
    %v2567 = vmul.f32 %v2199, %v2110
    %v2568 = vmul.f32 %v2199, %v2111
    %v2569 = vmul.f32 %v2199, %v2112
    %v2570 = vmul.f32 %v2199, %v2113
    %v2571 = vmul.f32 %v2200, %v2110
    %v2572 = vmul.f32 %v2200, %v2111
    %v2573 = vmul.f32 %v2200, %v2112
    %v2574 = vmul.f32 %v2200, %v2113
    %v2575 = vmul.f32 %v2201, %v2110
    %v2576 = vmul.f32 %v2201, %v2111
    %v2577 = vmul.f32 %v2201, %v2112
    %v2578 = vmul.f32 %v2201, %v2113
    %v2579 = vmul.f32 %v2202, %v2110
    %v2580 = vmul.f32 %v2202, %v2111
    %v2581 = vmul.f32 %v2202, %v2112
    %v2582 = vmul.f32 %v2202, %v2113
    %v2583 = vmul.f32 %v2203, %v2110
    %v2584 = vmul.f32 %v2203, %v2111
    %v2585 = vmul.f32 %v2203, %v2112
    %v2586 = vmul.f32 %v2203, %v2113
    %v2587 = vmul.f32 %v2204, %v2110
    %v2588 = vmul.f32 %v2204, %v2111
    %v2589 = vmul.f32 %v2204, %v2112
    %v2590 = vmul.f32 %v2204, %v2113
    %v2591 = vmul.f32 %v2205, %v2110
    %v2592 = vmul.f32 %v2205, %v2111
    %v2593 = vmul.f32 %v2205, %v2112
    %v2594 = vmul.f32 %v2205, %v2113
    %v2595 = vmul.f32 %v2206, %v2110
    %v2596 = vmul.f32 %v2206, %v2111
    %v2597 = vmul.f32 %v2206, %v2112
    %v2598 = vmul.f32 %v2206, %v2113
    %v2599 = vmul.f32 %v2207, %v2110
    %v2600 = vmul.f32 %v2207, %v2111
    %v2601 = vmul.f32 %v2207, %v2112
    %v2602 = vmul.f32 %v2207, %v2113
    %v2603 = vmul.f32 %v2208, %v2110
    %v2604 = vmul.f32 %v2208, %v2111
    %v2605 = vmul.f32 %v2208, %v2112
    %v2606 = vmul.f32 %v2208, %v2113
    %v2607 = vmul.f32 %v2209, %v2110
    %v2608 = vmul.f32 %v2209, %v2111
    %v2609 = vmul.f32 %v2209, %v2112
    %v2610 = vmul.f32 %v2209, %v2113
    %v2611 = vadd.f32 %v2483, %v2547
    %v2612 = vadd.f32 %v2484, %v2548
    %v2613 = vadd.f32 %v2485, %v2549
    %v2614 = vadd.f32 %v2486, %v2550
    %v2615 = vadd.f32 %v2487, %v2551
    %v2616 = vadd.f32 %v2488, %v2552
    %v2617 = vadd.f32 %v2489, %v2553
    %v2618 = vadd.f32 %v2490, %v2554
    %v2619 = vadd.f32 %v2491, %v2555
    %v2620 = vadd.f32 %v2492, %v2556
    %v2621 = vadd.f32 %v2493, %v2557
    %v2622 = vadd.f32 %v2494, %v2558
    %v2623 = vadd.f32 %v2495, %v2559
    %v2624 = vadd.f32 %v2496, %v2560
    %v2625 = vadd.f32 %v2497, %v2561
    %v2626 = vadd.f32 %v2498, %v2562
    %v2627 = vadd.f32 %v2499, %v2563
    %v2628 = vadd.f32 %v2500, %v2564
    %v2629 = vadd.f32 %v2501, %v2565
    %v2630 = vadd.f32 %v2502, %v2566
    %v2631 = vadd.f32 %v2503, %v2567
    %v2632 = vadd.f32 %v2504, %v2568
    %v2633 = vadd.f32 %v2505, %v2569
    %v2634 = vadd.f32 %v2506, %v2570
    %v2635 = vadd.f32 %v2507, %v2571
    %v2636 = vadd.f32 %v2508, %v2572
    %v2637 = vadd.f32 %v2509, %v2573
    %v2638 = vadd.f32 %v2510, %v2574
    %v2639 = vadd.f32 %v2511, %v2575
    %v2640 = vadd.f32 %v2512, %v2576
    %v2641 = vadd.f32 %v2513, %v2577
    %v2642 = vadd.f32 %v2514, %v2578
    %v2643 = vadd.f32 %v2515, %v2579
    %v2644 = vadd.f32 %v2516, %v2580
    %v2645 = vadd.f32 %v2517, %v2581
    %v2646 = vadd.f32 %v2518, %v2582
    %v2647 = vadd.f32 %v2519, %v2583
    %v2648 = vadd.f32 %v2520, %v2584
    %v2649 = vadd.f32 %v2521, %v2585
    %v2650 = vadd.f32 %v2522, %v2586
    %v2651 = vadd.f32 %v2523, %v2587
    %v2652 = vadd.f32 %v2524, %v2588
    %v2653 = vadd.f32 %v2525, %v2589
    %v2654 = vadd.f32 %v2526, %v2590
    %v2655 = vadd.f32 %v2527, %v2591
    %v2656 = vadd.f32 %v2528, %v2592
    %v2657 = vadd.f32 %v2529, %v2593
    %v2658 = vadd.f32 %v2530, %v2594
    %v2659 = vadd.f32 %v2531, %v2595
    %v2660 = vadd.f32 %v2532, %v2596
    %v2661 = vadd.f32 %v2533, %v2597
    %v2662 = vadd.f32 %v2534, %v2598
    %v2663 = vadd.f32 %v2535, %v2599
    %v2664 = vadd.f32 %v2536, %v2600
    %v2665 = vadd.f32 %v2537, %v2601
    %v2666 = vadd.f32 %v2538, %v2602
    %v2667 = vadd.f32 %v2539, %v2603
    %v2668 = vadd.f32 %v2540, %v2604
    %v2669 = vadd.f32 %v2541, %v2605
    %v2670 = vadd.f32 %v2542, %v2606
    %v2671 = vadd.f32 %v2543, %v2607
    %v2672 = vadd.f32 %v2544, %v2608
    %v2673 = vadd.f32 %v2545, %v2609
    %v2674 = vadd.f32 %v2546, %v2610
    %2675 = vst [vmem:[#allocation2] sm:$0xff] %v2611
    %2676 = vst [vmem:[#allocation2 + $0x8] sm:$0xff] %v2612
    %2677 = vst [vmem:[#allocation2 + $0x10] sm:$0xff] %v2613
    %2678 = vst [vmem:[#allocation2 + $0x18] sm:$0xff] %v2614
    %2679 = vst [vmem:[#allocation2 + $0x20] sm:$0xff] %v2615
    %2680 = vst [vmem:[#allocation2 + $0x28] sm:$0xff] %v2616
    %2681 = vst [vmem:[#allocation2 + $0x30] sm:$0xff] %v2617
    %2682 = vst [vmem:[#allocation2 + $0x38] sm:$0xff] %v2618
    %2683 = vst [vmem:[#allocation2 + $0x40] sm:$0xff] %v2619
    %2684 = vst [vmem:[#allocation2 + $0x48] sm:$0xff] %v2620
    %2685 = vst [vmem:[#allocation2 + $0x50] sm:$0xff] %v2621
    %2686 = vst [vmem:[#allocation2 + $0x58] sm:$0xff] %v2622
    %2687 = vst [vmem:[#allocation2 + $0x60] sm:$0xff] %v2623
    %2688 = vst [vmem:[#allocation2 + $0x68] sm:$0xff] %v2624
    %2689 = vst [vmem:[#allocation2 + $0x70] sm:$0xff] %v2625
    %2690 = vst [vmem:[#allocation2 + $0x78] sm:$0xff] %v2626
    %2691 = vst [vmem:[#allocation2 + $0x80] sm:$0xff] %v2627
    %2692 = vst [vmem:[#allocation2 + $0x88] sm:$0xff] %v2628
    %2693 = vst [vmem:[#allocation2 + $0x90] sm:$0xff] %v2629
    %2694 = vst [vmem:[#allocation2 + $0x98] sm:$0xff] %v2630
    %2695 = vst [vmem:[#allocation2 + $0xa0] sm:$0xff] %v2631
    %2696 = vst [vmem:[#allocation2 + $0xa8] sm:$0xff] %v2632
    %2697 = vst [vmem:[#allocation2 + $0xb0] sm:$0xff] %v2633
    %2698 = vst [vmem:[#allocation2 + $0xb8] sm:$0xff] %v2634
    %2699 = vst [vmem:[#allocation2 + $0xc0] sm:$0xff] %v2635
    %2700 = vst [vmem:[#allocation2 + $0xc8] sm:$0xff] %v2636
    %2701 = vst [vmem:[#allocation2 + $0xd0] sm:$0xff] %v2637
    %2702 = vst [vmem:[#allocation2 + $0xd8] sm:$0xff] %v2638
    %2703 = vst [vmem:[#allocation2 + $0xe0] sm:$0xff] %v2639
    %2704 = vst [vmem:[#allocation2 + $0xe8] sm:$0xff] %v2640
    %2705 = vst [vmem:[#allocation2 + $0xf0] sm:$0xff] %v2641
    %2706 = vst [vmem:[#allocation2 + $0xf8] sm:$0xff] %v2642
    %2707 = vst [vmem:[#allocation2 + $0x100] sm:$0xff] %v2643
    %2708 = vst [vmem:[#allocation2 + $0x108] sm:$0xff] %v2644
    %2709 = vst [vmem:[#allocation2 + $0x110] sm:$0xff] %v2645
    %2710 = vst [vmem:[#allocation2 + $0x118] sm:$0xff] %v2646
    %2711 = vst [vmem:[#allocation2 + $0x120] sm:$0xff] %v2647
    %2712 = vst [vmem:[#allocation2 + $0x128] sm:$0xff] %v2648
    %2713 = vst [vmem:[#allocation2 + $0x130] sm:$0xff] %v2649
    %2714 = vst [vmem:[#allocation2 + $0x138] sm:$0xff] %v2650
    %2715 = vst [vmem:[#allocation2 + $0x140] sm:$0xff] %v2651
    %2716 = vst [vmem:[#allocation2 + $0x148] sm:$0xff] %v2652
    %2717 = vst [vmem:[#allocation2 + $0x150] sm:$0xff] %v2653
    %2718 = vst [vmem:[#allocation2 + $0x158] sm:$0xff] %v2654
    %2719 = vst [vmem:[#allocation2 + $0x160] sm:$0xff] %v2655
    %2720 = vst [vmem:[#allocation2 + $0x168] sm:$0xff] %v2656
    %2721 = vst [vmem:[#allocation2 + $0x170] sm:$0xff] %v2657
    %2722 = vst [vmem:[#allocation2 + $0x178] sm:$0xff] %v2658
    %2723 = vst [vmem:[#allocation2 + $0x180] sm:$0xff] %v2659
    %2724 = vst [vmem:[#allocation2 + $0x188] sm:$0xff] %v2660
    %2725 = vst [vmem:[#allocation2 + $0x190] sm:$0xff] %v2661
    %2726 = vst [vmem:[#allocation2 + $0x198] sm:$0xff] %v2662
    %2727 = vst [vmem:[#allocation2 + $0x1a0] sm:$0xff] %v2663
    %2728 = vst [vmem:[#allocation2 + $0x1a8] sm:$0xff] %v2664
    %2729 = vst [vmem:[#allocation2 + $0x1b0] sm:$0xff] %v2665
    %2730 = vst [vmem:[#allocation2 + $0x1b8] sm:$0xff] %v2666
    %2731 = vst [vmem:[#allocation2 + $0x1c0] sm:$0xff] %v2667
    %2732 = vst [vmem:[#allocation2 + $0x1c8] sm:$0xff] %v2668
    %2733 = vst [vmem:[#allocation2 + $0x1d0] sm:$0xff] %v2669
    %2734 = vst [vmem:[#allocation2 + $0x1d8] sm:$0xff] %v2670
    %2735 = vst [vmem:[#allocation2 + $0x1e0] sm:$0xff] %v2671
    %2736 = vst [vmem:[#allocation2 + $0x1e8] sm:$0xff] %v2672
    %2737 = vst [vmem:[#allocation2 + $0x1f0] sm:$0xff] %v2673
    %2738 = vst [vmem:[#allocation2 + $0x1f8] sm:$0xff] %v2674
    %s2739 = scalar_lea.vmem [#allocation3], 64
    %v2740 = vld [vmem:[%s2739] sm:$0xff]
    %v2741 = vld [vmem:[%s2739 + $0x8] sm:$0xff]
    %s2742 = scalar_lea.vmem [#allocation6], 256
    %v2743 = vld [vmem:[%s2742] sm:$0xff]
    %v2744 = vld [vmem:[%s2742 + $0x8] sm:$0xff]
    %v2745 = vld [vmem:[%s2742 + $0x10] sm:$0xff]
    %v2746 = vld [vmem:[%s2742 + $0x18] sm:$0xff]
    %v2747 = vld [vmem:[%s2742 + $0x20] sm:$0xff]
    %v2748 = vld [vmem:[%s2742 + $0x28] sm:$0xff]
    %v2749 = vld [vmem:[%s2742 + $0x30] sm:$0xff]
    %v2750 = vld [vmem:[%s2742 + $0x38] sm:$0xff]
    %v2751 = vld [vmem:[#allocation2] sm:$0xff]
    %v2752 = vld [vmem:[#allocation2 + $0x8] sm:$0xff]
    %v2753 = vld [vmem:[#allocation2 + $0x10] sm:$0xff]
    %v2754 = vld [vmem:[#allocation2 + $0x18] sm:$0xff]
    %v2755 = vld [vmem:[#allocation2 + $0x20] sm:$0xff]
    %v2756 = vld [vmem:[#allocation2 + $0x28] sm:$0xff]
    %v2757 = vld [vmem:[#allocation2 + $0x30] sm:$0xff]
    %v2758 = vld [vmem:[#allocation2 + $0x38] sm:$0xff]
    %v2759 = vld [vmem:[#allocation2 + $0x40] sm:$0xff]
    %v2760 = vld [vmem:[#allocation2 + $0x48] sm:$0xff]
    %v2761 = vld [vmem:[#allocation2 + $0x50] sm:$0xff]
    %v2762 = vld [vmem:[#allocation2 + $0x58] sm:$0xff]
    %v2763 = vld [vmem:[#allocation2 + $0x60] sm:$0xff]
    %v2764 = vld [vmem:[#allocation2 + $0x68] sm:$0xff]
    %v2765 = vld [vmem:[#allocation2 + $0x70] sm:$0xff]
    %v2766 = vld [vmem:[#allocation2 + $0x78] sm:$0xff]
    %v2767 = vld [vmem:[#allocation2 + $0x80] sm:$0xff]
    %v2768 = vld [vmem:[#allocation2 + $0x88] sm:$0xff]
    %v2769 = vld [vmem:[#allocation2 + $0x90] sm:$0xff]
    %v2770 = vld [vmem:[#allocation2 + $0x98] sm:$0xff]
    %v2771 = vld [vmem:[#allocation2 + $0xa0] sm:$0xff]
    %v2772 = vld [vmem:[#allocation2 + $0xa8] sm:$0xff]
    %v2773 = vld [vmem:[#allocation2 + $0xb0] sm:$0xff]
    %v2774 = vld [vmem:[#allocation2 + $0xb8] sm:$0xff]
    %v2775 = vld [vmem:[#allocation2 + $0xc0] sm:$0xff]
    %v2776 = vld [vmem:[#allocation2 + $0xc8] sm:$0xff]
    %v2777 = vld [vmem:[#allocation2 + $0xd0] sm:$0xff]
    %v2778 = vld [vmem:[#allocation2 + $0xd8] sm:$0xff]
    %v2779 = vld [vmem:[#allocation2 + $0xe0] sm:$0xff]
    %v2780 = vld [vmem:[#allocation2 + $0xe8] sm:$0xff]
    %v2781 = vld [vmem:[#allocation2 + $0xf0] sm:$0xff]
    %v2782 = vld [vmem:[#allocation2 + $0xf8] sm:$0xff]
    %v2783 = vld [vmem:[#allocation2 + $0x100] sm:$0xff]
    %v2784 = vld [vmem:[#allocation2 + $0x108] sm:$0xff]
    %v2785 = vld [vmem:[#allocation2 + $0x110] sm:$0xff]
    %v2786 = vld [vmem:[#allocation2 + $0x118] sm:$0xff]
    %v2787 = vld [vmem:[#allocation2 + $0x120] sm:$0xff]
    %v2788 = vld [vmem:[#allocation2 + $0x128] sm:$0xff]
    %v2789 = vld [vmem:[#allocation2 + $0x130] sm:$0xff]
    %v2790 = vld [vmem:[#allocation2 + $0x138] sm:$0xff]
    %v2791 = vld [vmem:[#allocation2 + $0x140] sm:$0xff]
    %v2792 = vld [vmem:[#allocation2 + $0x148] sm:$0xff]
    %v2793 = vld [vmem:[#allocation2 + $0x150] sm:$0xff]
    %v2794 = vld [vmem:[#allocation2 + $0x158] sm:$0xff]
    %v2795 = vld [vmem:[#allocation2 + $0x160] sm:$0xff]
    %v2796 = vld [vmem:[#allocation2 + $0x168] sm:$0xff]
    %v2797 = vld [vmem:[#allocation2 + $0x170] sm:$0xff]
    %v2798 = vld [vmem:[#allocation2 + $0x178] sm:$0xff]
    %v2799 = vld [vmem:[#allocation2 + $0x180] sm:$0xff]
    %v2800 = vld [vmem:[#allocation2 + $0x188] sm:$0xff]
    %v2801 = vld [vmem:[#allocation2 + $0x190] sm:$0xff]
    %v2802 = vld [vmem:[#allocation2 + $0x198] sm:$0xff]
    %v2803 = vld [vmem:[#allocation2 + $0x1a0] sm:$0xff]
    %v2804 = vld [vmem:[#allocation2 + $0x1a8] sm:$0xff]
    %v2805 = vld [vmem:[#allocation2 + $0x1b0] sm:$0xff]
    %v2806 = vld [vmem:[#allocation2 + $0x1b8] sm:$0xff]
    %v2807 = vld [vmem:[#allocation2 + $0x1c0] sm:$0xff]
    %v2808 = vld [vmem:[#allocation2 + $0x1c8] sm:$0xff]
    %v2809 = vld [vmem:[#allocation2 + $0x1d0] sm:$0xff]
    %v2810 = vld [vmem:[#allocation2 + $0x1d8] sm:$0xff]
    %v2811 = vld [vmem:[#allocation2 + $0x1e0] sm:$0xff]
    %v2812 = vld [vmem:[#allocation2 + $0x1e8] sm:$0xff]
    %v2813 = vld [vmem:[#allocation2 + $0x1f0] sm:$0xff]
    %v2814 = vld [vmem:[#allocation2 + $0x1f8] sm:$0xff]
    %v2817 = vrot.slane %v2740, 1
    %v2818 = vrot.slane %v2740, 2
    %v2819 = vrot.slane %v2740, 3
    %v2820 = vrot.slane %v2740, 4
    %v2821 = vrot.slane %v2740, 5
    %v2822 = vrot.slane %v2740, 6
    %v2823 = vrot.slane %v2740, 7
    %v2824 = vrot.slane %v2741, 1
    %v2825 = vrot.slane %v2741, 2
    %v2826 = vrot.slane %v2741, 3
    %v2827 = vrot.slane %v2741, 4
    %v2828 = vrot.slane %v2741, 5
    %v2829 = vrot.slane %v2741, 6
    %v2830 = vrot.slane %v2741, 7
    %v2831 = vperm.slane %v2740, 0
    %v2832 = vperm.slane %v2817, 0
    %v2833 = vperm.slane %v2818, 0
    %v2834 = vperm.slane %v2819, 0
    %v2835 = vperm.slane %v2820, 0
    %v2836 = vperm.slane %v2821, 0
    %v2837 = vperm.slane %v2822, 0
    %v2838 = vperm.slane %v2823, 0
    %v2839 = vperm.slane %v2741, 0
    %v2840 = vperm.slane %v2824, 0
    %v2841 = vperm.slane %v2825, 0
    %v2842 = vperm.slane %v2826, 0
    %v2843 = vperm.slane %v2827, 0
    %v2844 = vperm.slane %v2828, 0
    %v2845 = vperm.slane %v2829, 0
    %v2846 = vperm.slane %v2830, 0
    %v2863 = vmul.f32 %v2831, %v2751
    %v2864 = vmul.f32 %v2831, %v2752
    %v2865 = vmul.f32 %v2831, %v2753
    %v2866 = vmul.f32 %v2831, %v2754
    %v2867 = vmul.f32 %v2832, %v2755
    %v2868 = vmul.f32 %v2832, %v2756
    %v2869 = vmul.f32 %v2832, %v2757
    %v2870 = vmul.f32 %v2832, %v2758
    %v2871 = vmul.f32 %v2833, %v2759
    %v2872 = vmul.f32 %v2833, %v2760
    %v2873 = vmul.f32 %v2833, %v2761
    %v2874 = vmul.f32 %v2833, %v2762
    %v2875 = vmul.f32 %v2834, %v2763
    %v2876 = vmul.f32 %v2834, %v2764
    %v2877 = vmul.f32 %v2834, %v2765
    %v2878 = vmul.f32 %v2834, %v2766
    %v2879 = vmul.f32 %v2835, %v2767
    %v2880 = vmul.f32 %v2835, %v2768
    %v2881 = vmul.f32 %v2835, %v2769
    %v2882 = vmul.f32 %v2835, %v2770
    %v2883 = vmul.f32 %v2836, %v2771
    %v2884 = vmul.f32 %v2836, %v2772
    %v2885 = vmul.f32 %v2836, %v2773
    %v2886 = vmul.f32 %v2836, %v2774
    %v2887 = vmul.f32 %v2837, %v2775
    %v2888 = vmul.f32 %v2837, %v2776
    %v2889 = vmul.f32 %v2837, %v2777
    %v2890 = vmul.f32 %v2837, %v2778
    %v2891 = vmul.f32 %v2838, %v2779
    %v2892 = vmul.f32 %v2838, %v2780
    %v2893 = vmul.f32 %v2838, %v2781
    %v2894 = vmul.f32 %v2838, %v2782
    %v2895 = vmul.f32 %v2839, %v2783
    %v2896 = vmul.f32 %v2839, %v2784
    %v2897 = vmul.f32 %v2839, %v2785
    %v2898 = vmul.f32 %v2839, %v2786
    %v2899 = vmul.f32 %v2840, %v2787
    %v2900 = vmul.f32 %v2840, %v2788
    %v2901 = vmul.f32 %v2840, %v2789
    %v2902 = vmul.f32 %v2840, %v2790
    %v2903 = vmul.f32 %v2841, %v2791
    %v2904 = vmul.f32 %v2841, %v2792
    %v2905 = vmul.f32 %v2841, %v2793
    %v2906 = vmul.f32 %v2841, %v2794
    %v2907 = vmul.f32 %v2842, %v2795
    %v2908 = vmul.f32 %v2842, %v2796
    %v2909 = vmul.f32 %v2842, %v2797
    %v2910 = vmul.f32 %v2842, %v2798
    %v2911 = vmul.f32 %v2843, %v2799
    %v2912 = vmul.f32 %v2843, %v2800
    %v2913 = vmul.f32 %v2843, %v2801
    %v2914 = vmul.f32 %v2843, %v2802
    %v2915 = vmul.f32 %v2844, %v2803
    %v2916 = vmul.f32 %v2844, %v2804
    %v2917 = vmul.f32 %v2844, %v2805
    %v2918 = vmul.f32 %v2844, %v2806
    %v2919 = vmul.f32 %v2845, %v2807
    %v2920 = vmul.f32 %v2845, %v2808
    %v2921 = vmul.f32 %v2845, %v2809
    %v2922 = vmul.f32 %v2845, %v2810
    %v2923 = vmul.f32 %v2846, %v2811
    %v2924 = vmul.f32 %v2846, %v2812
    %v2925 = vmul.f32 %v2846, %v2813
    %v2926 = vmul.f32 %v2846, %v2814
    %v2927 = vadd.f32 %v2863, %v2867
    %v2928 = vadd.f32 %v2927, %v2871
    %v2929 = vadd.f32 %v2928, %v2875
    %v2930 = vadd.f32 %v2929, %v2879
    %v2931 = vadd.f32 %v2930, %v2883
    %v2932 = vadd.f32 %v2931, %v2887
    %v2933 = vadd.f32 %v2932, %v2891
    %v2934 = vadd.f32 %v2933, %v2895
    %v2935 = vadd.f32 %v2934, %v2899
    %v2936 = vadd.f32 %v2935, %v2903
    %v2937 = vadd.f32 %v2936, %v2907
    %v2938 = vadd.f32 %v2937, %v2911
    %v2939 = vadd.f32 %v2938, %v2915
    %v2940 = vadd.f32 %v2939, %v2919
    %v2941 = vadd.f32 %v2940, %v2923
    %v2942 = vadd.f32 %v2864, %v2868
    %v2943 = vadd.f32 %v2942, %v2872
    %v2944 = vadd.f32 %v2943, %v2876
    %v2945 = vadd.f32 %v2944, %v2880
    %v2946 = vadd.f32 %v2945, %v2884
    %v2947 = vadd.f32 %v2946, %v2888
    %v2948 = vadd.f32 %v2947, %v2892
    %v2949 = vadd.f32 %v2948, %v2896
    %v2950 = vadd.f32 %v2949, %v2900
    %v2951 = vadd.f32 %v2950, %v2904
    %v2952 = vadd.f32 %v2951, %v2908
    %v2953 = vadd.f32 %v2952, %v2912
    %v2954 = vadd.f32 %v2953, %v2916
    %v2955 = vadd.f32 %v2954, %v2920
    %v2956 = vadd.f32 %v2955, %v2924
    %v2957 = vadd.f32 %v2865, %v2869
    %v2958 = vadd.f32 %v2957, %v2873
    %v2959 = vadd.f32 %v2958, %v2877
    %v2960 = vadd.f32 %v2959, %v2881
    %v2961 = vadd.f32 %v2960, %v2885
    %v2962 = vadd.f32 %v2961, %v2889
    %v2963 = vadd.f32 %v2962, %v2893
    %v2964 = vadd.f32 %v2963, %v2897
    %v2965 = vadd.f32 %v2964, %v2901
    %v2966 = vadd.f32 %v2965, %v2905
    %v2967 = vadd.f32 %v2966, %v2909
    %v2968 = vadd.f32 %v2967, %v2913
    %v2969 = vadd.f32 %v2968, %v2917
    %v2970 = vadd.f32 %v2969, %v2921
    %v2971 = vadd.f32 %v2970, %v2925
    %v2972 = vadd.f32 %v2866, %v2870
    %v2973 = vadd.f32 %v2972, %v2874
    %v2974 = vadd.f32 %v2973, %v2878
    %v2975 = vadd.f32 %v2974, %v2882
    %v2976 = vadd.f32 %v2975, %v2886
    %v2977 = vadd.f32 %v2976, %v2890
    %v2978 = vadd.f32 %v2977, %v2894
    %v2979 = vadd.f32 %v2978, %v2898
    %v2980 = vadd.f32 %v2979, %v2902
    %v2981 = vadd.f32 %v2980, %v2906
    %v2982 = vadd.f32 %v2981, %v2910
    %v2983 = vadd.f32 %v2982, %v2914
    %v2984 = vadd.f32 %v2983, %v2918
    %v2985 = vadd.f32 %v2984, %v2922
    %v2986 = vadd.f32 %v2985, %v2926
    %s2987 = scalar_lea.vmem [#allocation9], 128
    %2988 = vst [vmem:[%s2987] sm:$0xff] %v2941
    %2989 = vst [vmem:[%s2987 + $0x8] sm:$0xff] %v2956
    %2990 = vst [vmem:[%s2987 + $0x10] sm:$0xff] %v2971
    %2991 = vst [vmem:[%s2987 + $0x18] sm:$0xff] %v2986
    %v2992 = vmul.f32 %v2831, %v2743
    %v2993 = vmul.f32 %v2831, %v2744
    %v2994 = vmul.f32 %v2831, %v2745
    %v2995 = vmul.f32 %v2831, %v2746
    %v2996 = vmul.f32 %v2832, %v2743
    %v2997 = vmul.f32 %v2832, %v2744
    %v2998 = vmul.f32 %v2832, %v2745
    %v2999 = vmul.f32 %v2832, %v2746
    %v3000 = vmul.f32 %v2833, %v2743
    %v3001 = vmul.f32 %v2833, %v2744
    %v3002 = vmul.f32 %v2833, %v2745
    %v3003 = vmul.f32 %v2833, %v2746
    %v3004 = vmul.f32 %v2834, %v2743
    %v3005 = vmul.f32 %v2834, %v2744
    %v3006 = vmul.f32 %v2834, %v2745
    %v3007 = vmul.f32 %v2834, %v2746
    %v3008 = vmul.f32 %v2835, %v2743
    %v3009 = vmul.f32 %v2835, %v2744
    %v3010 = vmul.f32 %v2835, %v2745
    %v3011 = vmul.f32 %v2835, %v2746
    %v3012 = vmul.f32 %v2836, %v2743
    %v3013 = vmul.f32 %v2836, %v2744
    %v3014 = vmul.f32 %v2836, %v2745
    %v3015 = vmul.f32 %v2836, %v2746
    %v3016 = vmul.f32 %v2837, %v2743
    %v3017 = vmul.f32 %v2837, %v2744
    %v3018 = vmul.f32 %v2837, %v2745
    %v3019 = vmul.f32 %v2837, %v2746
    %v3020 = vmul.f32 %v2838, %v2743
    %v3021 = vmul.f32 %v2838, %v2744
    %v3022 = vmul.f32 %v2838, %v2745
    %v3023 = vmul.f32 %v2838, %v2746
    %v3024 = vmul.f32 %v2839, %v2743
    %v3025 = vmul.f32 %v2839, %v2744
    %v3026 = vmul.f32 %v2839, %v2745
    %v3027 = vmul.f32 %v2839, %v2746
    %v3028 = vmul.f32 %v2840, %v2743
    %v3029 = vmul.f32 %v2840, %v2744
    %v3030 = vmul.f32 %v2840, %v2745
    %v3031 = vmul.f32 %v2840, %v2746
    %v3032 = vmul.f32 %v2841, %v2743
    %v3033 = vmul.f32 %v2841, %v2744
    %v3034 = vmul.f32 %v2841, %v2745
    %v3035 = vmul.f32 %v2841, %v2746
    %v3036 = vmul.f32 %v2842, %v2743
    %v3037 = vmul.f32 %v2842, %v2744
    %v3038 = vmul.f32 %v2842, %v2745
    %v3039 = vmul.f32 %v2842, %v2746
    %v3040 = vmul.f32 %v2843, %v2743
    %v3041 = vmul.f32 %v2843, %v2744
    %v3042 = vmul.f32 %v2843, %v2745
    %v3043 = vmul.f32 %v2843, %v2746
    %v3044 = vmul.f32 %v2844, %v2743
    %v3045 = vmul.f32 %v2844, %v2744
    %v3046 = vmul.f32 %v2844, %v2745
    %v3047 = vmul.f32 %v2844, %v2746
    %v3048 = vmul.f32 %v2845, %v2743
    %v3049 = vmul.f32 %v2845, %v2744
    %v3050 = vmul.f32 %v2845, %v2745
    %v3051 = vmul.f32 %v2845, %v2746
    %v3052 = vmul.f32 %v2846, %v2743
    %v3053 = vmul.f32 %v2846, %v2744
    %v3054 = vmul.f32 %v2846, %v2745
    %v3055 = vmul.f32 %v2846, %v2746
    %v3056 = vsub.f32 1.0, %v2992
    %v3057 = vsub.f32 1.0, %v2993
    %v3058 = vsub.f32 1.0, %v2994
    %v3059 = vsub.f32 1.0, %v2995
    %v3060 = vsub.f32 1.0, %v2996
    %v3061 = vsub.f32 1.0, %v2997
    %v3062 = vsub.f32 1.0, %v2998
    %v3063 = vsub.f32 1.0, %v2999
    %v3064 = vsub.f32 1.0, %v3000
    %v3065 = vsub.f32 1.0, %v3001
    %v3066 = vsub.f32 1.0, %v3002
    %v3067 = vsub.f32 1.0, %v3003
    %v3068 = vsub.f32 1.0, %v3004
    %v3069 = vsub.f32 1.0, %v3005
    %v3070 = vsub.f32 1.0, %v3006
    %v3071 = vsub.f32 1.0, %v3007
    %v3072 = vsub.f32 1.0, %v3008
    %v3073 = vsub.f32 1.0, %v3009
    %v3074 = vsub.f32 1.0, %v3010
    %v3075 = vsub.f32 1.0, %v3011
    %v3076 = vsub.f32 1.0, %v3012
    %v3077 = vsub.f32 1.0, %v3013
    %v3078 = vsub.f32 1.0, %v3014
    %v3079 = vsub.f32 1.0, %v3015
    %v3080 = vsub.f32 1.0, %v3016
    %v3081 = vsub.f32 1.0, %v3017
    %v3082 = vsub.f32 1.0, %v3018
    %v3083 = vsub.f32 1.0, %v3019
    %v3084 = vsub.f32 1.0, %v3020
    %v3085 = vsub.f32 1.0, %v3021
    %v3086 = vsub.f32 1.0, %v3022
    %v3087 = vsub.f32 1.0, %v3023
    %v3088 = vsub.f32 1.0, %v3024
    %v3089 = vsub.f32 1.0, %v3025
    %v3090 = vsub.f32 1.0, %v3026
    %v3091 = vsub.f32 1.0, %v3027
    %v3092 = vsub.f32 1.0, %v3028
    %v3093 = vsub.f32 1.0, %v3029
    %v3094 = vsub.f32 1.0, %v3030
    %v3095 = vsub.f32 1.0, %v3031
    %v3096 = vsub.f32 1.0, %v3032
    %v3097 = vsub.f32 1.0, %v3033
    %v3098 = vsub.f32 1.0, %v3034
    %v3099 = vsub.f32 1.0, %v3035
    %v3100 = vsub.f32 1.0, %v3036
    %v3101 = vsub.f32 1.0, %v3037
    %v3102 = vsub.f32 1.0, %v3038
    %v3103 = vsub.f32 1.0, %v3039
    %v3104 = vsub.f32 1.0, %v3040
    %v3105 = vsub.f32 1.0, %v3041
    %v3106 = vsub.f32 1.0, %v3042
    %v3107 = vsub.f32 1.0, %v3043
    %v3108 = vsub.f32 1.0, %v3044
    %v3109 = vsub.f32 1.0, %v3045
    %v3110 = vsub.f32 1.0, %v3046
    %v3111 = vsub.f32 1.0, %v3047
    %v3112 = vsub.f32 1.0, %v3048
    %v3113 = vsub.f32 1.0, %v3049
    %v3114 = vsub.f32 1.0, %v3050
    %v3115 = vsub.f32 1.0, %v3051
    %v3116 = vsub.f32 1.0, %v3052
    %v3117 = vsub.f32 1.0, %v3053
    %v3118 = vsub.f32 1.0, %v3054
    %v3119 = vsub.f32 1.0, %v3055
    %v3120 = vmul.f32 %v2751, %v3056
    %v3121 = vmul.f32 %v2752, %v3057
    %v3122 = vmul.f32 %v2753, %v3058
    %v3123 = vmul.f32 %v2754, %v3059
    %v3124 = vmul.f32 %v2755, %v3060
    %v3125 = vmul.f32 %v2756, %v3061
    %v3126 = vmul.f32 %v2757, %v3062
    %v3127 = vmul.f32 %v2758, %v3063
    %v3128 = vmul.f32 %v2759, %v3064
    %v3129 = vmul.f32 %v2760, %v3065
    %v3130 = vmul.f32 %v2761, %v3066
    %v3131 = vmul.f32 %v2762, %v3067
    %v3132 = vmul.f32 %v2763, %v3068
    %v3133 = vmul.f32 %v2764, %v3069
    %v3134 = vmul.f32 %v2765, %v3070
    %v3135 = vmul.f32 %v2766, %v3071
    %v3136 = vmul.f32 %v2767, %v3072
    %v3137 = vmul.f32 %v2768, %v3073
    %v3138 = vmul.f32 %v2769, %v3074
    %v3139 = vmul.f32 %v2770, %v3075
    %v3140 = vmul.f32 %v2771, %v3076
    %v3141 = vmul.f32 %v2772, %v3077
    %v3142 = vmul.f32 %v2773, %v3078
    %v3143 = vmul.f32 %v2774, %v3079
    %v3144 = vmul.f32 %v2775, %v3080
    %v3145 = vmul.f32 %v2776, %v3081
    %v3146 = vmul.f32 %v2777, %v3082
    %v3147 = vmul.f32 %v2778, %v3083
    %v3148 = vmul.f32 %v2779, %v3084
    %v3149 = vmul.f32 %v2780, %v3085
    %v3150 = vmul.f32 %v2781, %v3086
    %v3151 = vmul.f32 %v2782, %v3087
    %v3152 = vmul.f32 %v2783, %v3088
    %v3153 = vmul.f32 %v2784, %v3089
    %v3154 = vmul.f32 %v2785, %v3090
    %v3155 = vmul.f32 %v2786, %v3091
    %v3156 = vmul.f32 %v2787, %v3092
    %v3157 = vmul.f32 %v2788, %v3093
    %v3158 = vmul.f32 %v2789, %v3094
    %v3159 = vmul.f32 %v2790, %v3095
    %v3160 = vmul.f32 %v2791, %v3096
    %v3161 = vmul.f32 %v2792, %v3097
    %v3162 = vmul.f32 %v2793, %v3098
    %v3163 = vmul.f32 %v2794, %v3099
    %v3164 = vmul.f32 %v2795, %v3100
    %v3165 = vmul.f32 %v2796, %v3101
    %v3166 = vmul.f32 %v2797, %v3102
    %v3167 = vmul.f32 %v2798, %v3103
    %v3168 = vmul.f32 %v2799, %v3104
    %v3169 = vmul.f32 %v2800, %v3105
    %v3170 = vmul.f32 %v2801, %v3106
    %v3171 = vmul.f32 %v2802, %v3107
    %v3172 = vmul.f32 %v2803, %v3108
    %v3173 = vmul.f32 %v2804, %v3109
    %v3174 = vmul.f32 %v2805, %v3110
    %v3175 = vmul.f32 %v2806, %v3111
    %v3176 = vmul.f32 %v2807, %v3112
    %v3177 = vmul.f32 %v2808, %v3113
    %v3178 = vmul.f32 %v2809, %v3114
    %v3179 = vmul.f32 %v2810, %v3115
    %v3180 = vmul.f32 %v2811, %v3116
    %v3181 = vmul.f32 %v2812, %v3117
    %v3182 = vmul.f32 %v2813, %v3118
    %v3183 = vmul.f32 %v2814, %v3119
    %v3184 = vmul.f32 %v2831, %v2747
    %v3185 = vmul.f32 %v2831, %v2748
    %v3186 = vmul.f32 %v2831, %v2749
    %v3187 = vmul.f32 %v2831, %v2750
    %v3188 = vmul.f32 %v2832, %v2747
    %v3189 = vmul.f32 %v2832, %v2748
    %v3190 = vmul.f32 %v2832, %v2749
    %v3191 = vmul.f32 %v2832, %v2750
    %v3192 = vmul.f32 %v2833, %v2747
    %v3193 = vmul.f32 %v2833, %v2748
    %v3194 = vmul.f32 %v2833, %v2749
    %v3195 = vmul.f32 %v2833, %v2750
    %v3196 = vmul.f32 %v2834, %v2747
    %v3197 = vmul.f32 %v2834, %v2748
    %v3198 = vmul.f32 %v2834, %v2749
    %v3199 = vmul.f32 %v2834, %v2750
    %v3200 = vmul.f32 %v2835, %v2747
    %v3201 = vmul.f32 %v2835, %v2748
    %v3202 = vmul.f32 %v2835, %v2749
    %v3203 = vmul.f32 %v2835, %v2750
    %v3204 = vmul.f32 %v2836, %v2747
    %v3205 = vmul.f32 %v2836, %v2748
    %v3206 = vmul.f32 %v2836, %v2749
    %v3207 = vmul.f32 %v2836, %v2750
    %v3208 = vmul.f32 %v2837, %v2747
    %v3209 = vmul.f32 %v2837, %v2748
    %v3210 = vmul.f32 %v2837, %v2749
    %v3211 = vmul.f32 %v2837, %v2750
    %v3212 = vmul.f32 %v2838, %v2747
    %v3213 = vmul.f32 %v2838, %v2748
    %v3214 = vmul.f32 %v2838, %v2749
    %v3215 = vmul.f32 %v2838, %v2750
    %v3216 = vmul.f32 %v2839, %v2747
    %v3217 = vmul.f32 %v2839, %v2748
    %v3218 = vmul.f32 %v2839, %v2749
    %v3219 = vmul.f32 %v2839, %v2750
    %v3220 = vmul.f32 %v2840, %v2747
    %v3221 = vmul.f32 %v2840, %v2748
    %v3222 = vmul.f32 %v2840, %v2749
    %v3223 = vmul.f32 %v2840, %v2750
    %v3224 = vmul.f32 %v2841, %v2747
    %v3225 = vmul.f32 %v2841, %v2748
    %v3226 = vmul.f32 %v2841, %v2749
    %v3227 = vmul.f32 %v2841, %v2750
    %v3228 = vmul.f32 %v2842, %v2747
    %v3229 = vmul.f32 %v2842, %v2748
    %v3230 = vmul.f32 %v2842, %v2749
    %v3231 = vmul.f32 %v2842, %v2750
    %v3232 = vmul.f32 %v2843, %v2747
    %v3233 = vmul.f32 %v2843, %v2748
    %v3234 = vmul.f32 %v2843, %v2749
    %v3235 = vmul.f32 %v2843, %v2750
    %v3236 = vmul.f32 %v2844, %v2747
    %v3237 = vmul.f32 %v2844, %v2748
    %v3238 = vmul.f32 %v2844, %v2749
    %v3239 = vmul.f32 %v2844, %v2750
    %v3240 = vmul.f32 %v2845, %v2747
    %v3241 = vmul.f32 %v2845, %v2748
    %v3242 = vmul.f32 %v2845, %v2749
    %v3243 = vmul.f32 %v2845, %v2750
    %v3244 = vmul.f32 %v2846, %v2747
    %v3245 = vmul.f32 %v2846, %v2748
    %v3246 = vmul.f32 %v2846, %v2749
    %v3247 = vmul.f32 %v2846, %v2750
    %v3248 = vadd.f32 %v3120, %v3184
    %v3249 = vadd.f32 %v3121, %v3185
    %v3250 = vadd.f32 %v3122, %v3186
    %v3251 = vadd.f32 %v3123, %v3187
    %v3252 = vadd.f32 %v3124, %v3188
    %v3253 = vadd.f32 %v3125, %v3189
    %v3254 = vadd.f32 %v3126, %v3190
    %v3255 = vadd.f32 %v3127, %v3191
    %v3256 = vadd.f32 %v3128, %v3192
    %v3257 = vadd.f32 %v3129, %v3193
    %v3258 = vadd.f32 %v3130, %v3194
    %v3259 = vadd.f32 %v3131, %v3195
    %v3260 = vadd.f32 %v3132, %v3196
    %v3261 = vadd.f32 %v3133, %v3197
    %v3262 = vadd.f32 %v3134, %v3198
    %v3263 = vadd.f32 %v3135, %v3199
    %v3264 = vadd.f32 %v3136, %v3200
    %v3265 = vadd.f32 %v3137, %v3201
    %v3266 = vadd.f32 %v3138, %v3202
    %v3267 = vadd.f32 %v3139, %v3203
    %v3268 = vadd.f32 %v3140, %v3204
    %v3269 = vadd.f32 %v3141, %v3205
    %v3270 = vadd.f32 %v3142, %v3206
    %v3271 = vadd.f32 %v3143, %v3207
    %v3272 = vadd.f32 %v3144, %v3208
    %v3273 = vadd.f32 %v3145, %v3209
    %v3274 = vadd.f32 %v3146, %v3210
    %v3275 = vadd.f32 %v3147, %v3211
    %v3276 = vadd.f32 %v3148, %v3212
    %v3277 = vadd.f32 %v3149, %v3213
    %v3278 = vadd.f32 %v3150, %v3214
    %v3279 = vadd.f32 %v3151, %v3215
    %v3280 = vadd.f32 %v3152, %v3216
    %v3281 = vadd.f32 %v3153, %v3217
    %v3282 = vadd.f32 %v3154, %v3218
    %v3283 = vadd.f32 %v3155, %v3219
    %v3284 = vadd.f32 %v3156, %v3220
    %v3285 = vadd.f32 %v3157, %v3221
    %v3286 = vadd.f32 %v3158, %v3222
    %v3287 = vadd.f32 %v3159, %v3223
    %v3288 = vadd.f32 %v3160, %v3224
    %v3289 = vadd.f32 %v3161, %v3225
    %v3290 = vadd.f32 %v3162, %v3226
    %v3291 = vadd.f32 %v3163, %v3227
    %v3292 = vadd.f32 %v3164, %v3228
    %v3293 = vadd.f32 %v3165, %v3229
    %v3294 = vadd.f32 %v3166, %v3230
    %v3295 = vadd.f32 %v3167, %v3231
    %v3296 = vadd.f32 %v3168, %v3232
    %v3297 = vadd.f32 %v3169, %v3233
    %v3298 = vadd.f32 %v3170, %v3234
    %v3299 = vadd.f32 %v3171, %v3235
    %v3300 = vadd.f32 %v3172, %v3236
    %v3301 = vadd.f32 %v3173, %v3237
    %v3302 = vadd.f32 %v3174, %v3238
    %v3303 = vadd.f32 %v3175, %v3239
    %v3304 = vadd.f32 %v3176, %v3240
    %v3305 = vadd.f32 %v3177, %v3241
    %v3306 = vadd.f32 %v3178, %v3242
    %v3307 = vadd.f32 %v3179, %v3243
    %v3308 = vadd.f32 %v3180, %v3244
    %v3309 = vadd.f32 %v3181, %v3245
    %v3310 = vadd.f32 %v3182, %v3246
    %v3311 = vadd.f32 %v3183, %v3247
    %3312 = vst [vmem:[#allocation2] sm:$0xff] %v3248
    %3313 = vst [vmem:[#allocation2 + $0x8] sm:$0xff] %v3249
    %3314 = vst [vmem:[#allocation2 + $0x10] sm:$0xff] %v3250
    %3315 = vst [vmem:[#allocation2 + $0x18] sm:$0xff] %v3251
    %3316 = vst [vmem:[#allocation2 + $0x20] sm:$0xff] %v3252
    %3317 = vst [vmem:[#allocation2 + $0x28] sm:$0xff] %v3253
    %3318 = vst [vmem:[#allocation2 + $0x30] sm:$0xff] %v3254
    %3319 = vst [vmem:[#allocation2 + $0x38] sm:$0xff] %v3255
    %3320 = vst [vmem:[#allocation2 + $0x40] sm:$0xff] %v3256
    %3321 = vst [vmem:[#allocation2 + $0x48] sm:$0xff] %v3257
    %3322 = vst [vmem:[#allocation2 + $0x50] sm:$0xff] %v3258
    %3323 = vst [vmem:[#allocation2 + $0x58] sm:$0xff] %v3259
    %3324 = vst [vmem:[#allocation2 + $0x60] sm:$0xff] %v3260
    %3325 = vst [vmem:[#allocation2 + $0x68] sm:$0xff] %v3261
    %3326 = vst [vmem:[#allocation2 + $0x70] sm:$0xff] %v3262
    %3327 = vst [vmem:[#allocation2 + $0x78] sm:$0xff] %v3263
    %3328 = vst [vmem:[#allocation2 + $0x80] sm:$0xff] %v3264
    %3329 = vst [vmem:[#allocation2 + $0x88] sm:$0xff] %v3265
    %3330 = vst [vmem:[#allocation2 + $0x90] sm:$0xff] %v3266
    %3331 = vst [vmem:[#allocation2 + $0x98] sm:$0xff] %v3267
    %3332 = vst [vmem:[#allocation2 + $0xa0] sm:$0xff] %v3268
    %3333 = vst [vmem:[#allocation2 + $0xa8] sm:$0xff] %v3269
    %3334 = vst [vmem:[#allocation2 + $0xb0] sm:$0xff] %v3270
    %3335 = vst [vmem:[#allocation2 + $0xb8] sm:$0xff] %v3271
    %3336 = vst [vmem:[#allocation2 + $0xc0] sm:$0xff] %v3272
    %3337 = vst [vmem:[#allocation2 + $0xc8] sm:$0xff] %v3273
    %3338 = vst [vmem:[#allocation2 + $0xd0] sm:$0xff] %v3274
    %3339 = vst [vmem:[#allocation2 + $0xd8] sm:$0xff] %v3275
    %3340 = vst [vmem:[#allocation2 + $0xe0] sm:$0xff] %v3276
    %3341 = vst [vmem:[#allocation2 + $0xe8] sm:$0xff] %v3277
    %3342 = vst [vmem:[#allocation2 + $0xf0] sm:$0xff] %v3278
    %3343 = vst [vmem:[#allocation2 + $0xf8] sm:$0xff] %v3279
    %3344 = vst [vmem:[#allocation2 + $0x100] sm:$0xff] %v3280
    %3345 = vst [vmem:[#allocation2 + $0x108] sm:$0xff] %v3281
    %3346 = vst [vmem:[#allocation2 + $0x110] sm:$0xff] %v3282
    %3347 = vst [vmem:[#allocation2 + $0x118] sm:$0xff] %v3283
    %3348 = vst [vmem:[#allocation2 + $0x120] sm:$0xff] %v3284
    %3349 = vst [vmem:[#allocation2 + $0x128] sm:$0xff] %v3285
    %3350 = vst [vmem:[#allocation2 + $0x130] sm:$0xff] %v3286
    %3351 = vst [vmem:[#allocation2 + $0x138] sm:$0xff] %v3287
    %3352 = vst [vmem:[#allocation2 + $0x140] sm:$0xff] %v3288
    %3353 = vst [vmem:[#allocation2 + $0x148] sm:$0xff] %v3289
    %3354 = vst [vmem:[#allocation2 + $0x150] sm:$0xff] %v3290
    %3355 = vst [vmem:[#allocation2 + $0x158] sm:$0xff] %v3291
    %3356 = vst [vmem:[#allocation2 + $0x160] sm:$0xff] %v3292
    %3357 = vst [vmem:[#allocation2 + $0x168] sm:$0xff] %v3293
    %3358 = vst [vmem:[#allocation2 + $0x170] sm:$0xff] %v3294
    %3359 = vst [vmem:[#allocation2 + $0x178] sm:$0xff] %v3295
    %3360 = vst [vmem:[#allocation2 + $0x180] sm:$0xff] %v3296
    %3361 = vst [vmem:[#allocation2 + $0x188] sm:$0xff] %v3297
    %3362 = vst [vmem:[#allocation2 + $0x190] sm:$0xff] %v3298
    %3363 = vst [vmem:[#allocation2 + $0x198] sm:$0xff] %v3299
    %3364 = vst [vmem:[#allocation2 + $0x1a0] sm:$0xff] %v3300
    %3365 = vst [vmem:[#allocation2 + $0x1a8] sm:$0xff] %v3301
    %3366 = vst [vmem:[#allocation2 + $0x1b0] sm:$0xff] %v3302
    %3367 = vst [vmem:[#allocation2 + $0x1b8] sm:$0xff] %v3303
    %3368 = vst [vmem:[#allocation2 + $0x1c0] sm:$0xff] %v3304
    %3369 = vst [vmem:[#allocation2 + $0x1c8] sm:$0xff] %v3305
    %3370 = vst [vmem:[#allocation2 + $0x1d0] sm:$0xff] %v3306
    %3371 = vst [vmem:[#allocation2 + $0x1d8] sm:$0xff] %v3307
    %3372 = vst [vmem:[#allocation2 + $0x1e0] sm:$0xff] %v3308
    %3373 = vst [vmem:[#allocation2 + $0x1e8] sm:$0xff] %v3309
    %3374 = vst [vmem:[#allocation2 + $0x1f0] sm:$0xff] %v3310
    %3375 = vst [vmem:[#allocation2 + $0x1f8] sm:$0xff] %v3311
    %s3376 = scalar_lea.vmem [#allocation3], 80
    %v3377 = vld [vmem:[%s3376] sm:$0xff]
    %v3378 = vld [vmem:[%s3376 + $0x8] sm:$0xff]
    %s3379 = scalar_lea.vmem [#allocation6], 320
    %v3380 = vld [vmem:[%s3379] sm:$0xff]
    %v3381 = vld [vmem:[%s3379 + $0x8] sm:$0xff]
    %v3382 = vld [vmem:[%s3379 + $0x10] sm:$0xff]
    %v3383 = vld [vmem:[%s3379 + $0x18] sm:$0xff]
    %v3384 = vld [vmem:[%s3379 + $0x20] sm:$0xff]
    %v3385 = vld [vmem:[%s3379 + $0x28] sm:$0xff]
    %v3386 = vld [vmem:[%s3379 + $0x30] sm:$0xff]
    %v3387 = vld [vmem:[%s3379 + $0x38] sm:$0xff]
    %v3388 = vld [vmem:[#allocation2] sm:$0xff]
    %v3389 = vld [vmem:[#allocation2 + $0x8] sm:$0xff]
    %v3390 = vld [vmem:[#allocation2 + $0x10] sm:$0xff]
    %v3391 = vld [vmem:[#allocation2 + $0x18] sm:$0xff]
    %v3392 = vld [vmem:[#allocation2 + $0x20] sm:$0xff]
    %v3393 = vld [vmem:[#allocation2 + $0x28] sm:$0xff]
    %v3394 = vld [vmem:[#allocation2 + $0x30] sm:$0xff]
    %v3395 = vld [vmem:[#allocation2 + $0x38] sm:$0xff]
    %v3396 = vld [vmem:[#allocation2 + $0x40] sm:$0xff]
    %v3397 = vld [vmem:[#allocation2 + $0x48] sm:$0xff]
    %v3398 = vld [vmem:[#allocation2 + $0x50] sm:$0xff]
    %v3399 = vld [vmem:[#allocation2 + $0x58] sm:$0xff]
    %v3400 = vld [vmem:[#allocation2 + $0x60] sm:$0xff]
    %v3401 = vld [vmem:[#allocation2 + $0x68] sm:$0xff]
    %v3402 = vld [vmem:[#allocation2 + $0x70] sm:$0xff]
    %v3403 = vld [vmem:[#allocation2 + $0x78] sm:$0xff]
    %v3404 = vld [vmem:[#allocation2 + $0x80] sm:$0xff]
    %v3405 = vld [vmem:[#allocation2 + $0x88] sm:$0xff]
    %v3406 = vld [vmem:[#allocation2 + $0x90] sm:$0xff]
    %v3407 = vld [vmem:[#allocation2 + $0x98] sm:$0xff]
    %v3408 = vld [vmem:[#allocation2 + $0xa0] sm:$0xff]
    %v3409 = vld [vmem:[#allocation2 + $0xa8] sm:$0xff]
    %v3410 = vld [vmem:[#allocation2 + $0xb0] sm:$0xff]
    %v3411 = vld [vmem:[#allocation2 + $0xb8] sm:$0xff]
    %v3412 = vld [vmem:[#allocation2 + $0xc0] sm:$0xff]
    %v3413 = vld [vmem:[#allocation2 + $0xc8] sm:$0xff]
    %v3414 = vld [vmem:[#allocation2 + $0xd0] sm:$0xff]
    %v3415 = vld [vmem:[#allocation2 + $0xd8] sm:$0xff]
    %v3416 = vld [vmem:[#allocation2 + $0xe0] sm:$0xff]
    %v3417 = vld [vmem:[#allocation2 + $0xe8] sm:$0xff]
    %v3418 = vld [vmem:[#allocation2 + $0xf0] sm:$0xff]
    %v3419 = vld [vmem:[#allocation2 + $0xf8] sm:$0xff]
    %v3420 = vld [vmem:[#allocation2 + $0x100] sm:$0xff]
    %v3421 = vld [vmem:[#allocation2 + $0x108] sm:$0xff]
    %v3422 = vld [vmem:[#allocation2 + $0x110] sm:$0xff]
    %v3423 = vld [vmem:[#allocation2 + $0x118] sm:$0xff]
    %v3424 = vld [vmem:[#allocation2 + $0x120] sm:$0xff]
    %v3425 = vld [vmem:[#allocation2 + $0x128] sm:$0xff]
    %v3426 = vld [vmem:[#allocation2 + $0x130] sm:$0xff]
    %v3427 = vld [vmem:[#allocation2 + $0x138] sm:$0xff]
    %v3428 = vld [vmem:[#allocation2 + $0x140] sm:$0xff]
    %v3429 = vld [vmem:[#allocation2 + $0x148] sm:$0xff]
    %v3430 = vld [vmem:[#allocation2 + $0x150] sm:$0xff]
    %v3431 = vld [vmem:[#allocation2 + $0x158] sm:$0xff]
    %v3432 = vld [vmem:[#allocation2 + $0x160] sm:$0xff]
    %v3433 = vld [vmem:[#allocation2 + $0x168] sm:$0xff]
    %v3434 = vld [vmem:[#allocation2 + $0x170] sm:$0xff]
    %v3435 = vld [vmem:[#allocation2 + $0x178] sm:$0xff]
    %v3436 = vld [vmem:[#allocation2 + $0x180] sm:$0xff]
    %v3437 = vld [vmem:[#allocation2 + $0x188] sm:$0xff]
    %v3438 = vld [vmem:[#allocation2 + $0x190] sm:$0xff]
    %v3439 = vld [vmem:[#allocation2 + $0x198] sm:$0xff]
    %v3440 = vld [vmem:[#allocation2 + $0x1a0] sm:$0xff]
    %v3441 = vld [vmem:[#allocation2 + $0x1a8] sm:$0xff]
    %v3442 = vld [vmem:[#allocation2 + $0x1b0] sm:$0xff]
    %v3443 = vld [vmem:[#allocation2 + $0x1b8] sm:$0xff]
    %v3444 = vld [vmem:[#allocation2 + $0x1c0] sm:$0xff]
    %v3445 = vld [vmem:[#allocation2 + $0x1c8] sm:$0xff]
    %v3446 = vld [vmem:[#allocation2 + $0x1d0] sm:$0xff]
    %v3447 = vld [vmem:[#allocation2 + $0x1d8] sm:$0xff]
    %v3448 = vld [vmem:[#allocation2 + $0x1e0] sm:$0xff]
    %v3449 = vld [vmem:[#allocation2 + $0x1e8] sm:$0xff]
    %v3450 = vld [vmem:[#allocation2 + $0x1f0] sm:$0xff]
    %v3451 = vld [vmem:[#allocation2 + $0x1f8] sm:$0xff]
    %v3454 = vrot.slane %v3377, 1
    %v3455 = vrot.slane %v3377, 2
    %v3456 = vrot.slane %v3377, 3
    %v3457 = vrot.slane %v3377, 4
    %v3458 = vrot.slane %v3377, 5
    %v3459 = vrot.slane %v3377, 6
    %v3460 = vrot.slane %v3377, 7
    %v3461 = vrot.slane %v3378, 1
    %v3462 = vrot.slane %v3378, 2
    %v3463 = vrot.slane %v3378, 3
    %v3464 = vrot.slane %v3378, 4
    %v3465 = vrot.slane %v3378, 5
    %v3466 = vrot.slane %v3378, 6
    %v3467 = vrot.slane %v3378, 7
    %v3468 = vperm.slane %v3377, 0
    %v3469 = vperm.slane %v3454, 0
    %v3470 = vperm.slane %v3455, 0
    %v3471 = vperm.slane %v3456, 0
    %v3472 = vperm.slane %v3457, 0
    %v3473 = vperm.slane %v3458, 0
    %v3474 = vperm.slane %v3459, 0
    %v3475 = vperm.slane %v3460, 0
    %v3476 = vperm.slane %v3378, 0
    %v3477 = vperm.slane %v3461, 0
    %v3478 = vperm.slane %v3462, 0
    %v3479 = vperm.slane %v3463, 0
    %v3480 = vperm.slane %v3464, 0
    %v3481 = vperm.slane %v3465, 0
    %v3482 = vperm.slane %v3466, 0
    %v3483 = vperm.slane %v3467, 0
    %v3500 = vmul.f32 %v3468, %v3388
    %v3501 = vmul.f32 %v3468, %v3389
    %v3502 = vmul.f32 %v3468, %v3390
    %v3503 = vmul.f32 %v3468, %v3391
    %v3504 = vmul.f32 %v3469, %v3392
    %v3505 = vmul.f32 %v3469, %v3393
    %v3506 = vmul.f32 %v3469, %v3394
    %v3507 = vmul.f32 %v3469, %v3395
    %v3508 = vmul.f32 %v3470, %v3396
    %v3509 = vmul.f32 %v3470, %v3397
    %v3510 = vmul.f32 %v3470, %v3398
    %v3511 = vmul.f32 %v3470, %v3399
    %v3512 = vmul.f32 %v3471, %v3400
    %v3513 = vmul.f32 %v3471, %v3401
    %v3514 = vmul.f32 %v3471, %v3402
    %v3515 = vmul.f32 %v3471, %v3403
    %v3516 = vmul.f32 %v3472, %v3404
    %v3517 = vmul.f32 %v3472, %v3405
    %v3518 = vmul.f32 %v3472, %v3406
    %v3519 = vmul.f32 %v3472, %v3407
    %v3520 = vmul.f32 %v3473, %v3408
    %v3521 = vmul.f32 %v3473, %v3409
    %v3522 = vmul.f32 %v3473, %v3410
    %v3523 = vmul.f32 %v3473, %v3411
    %v3524 = vmul.f32 %v3474, %v3412
    %v3525 = vmul.f32 %v3474, %v3413
    %v3526 = vmul.f32 %v3474, %v3414
    %v3527 = vmul.f32 %v3474, %v3415
    %v3528 = vmul.f32 %v3475, %v3416
    %v3529 = vmul.f32 %v3475, %v3417
    %v3530 = vmul.f32 %v3475, %v3418
    %v3531 = vmul.f32 %v3475, %v3419
    %v3532 = vmul.f32 %v3476, %v3420
    %v3533 = vmul.f32 %v3476, %v3421
    %v3534 = vmul.f32 %v3476, %v3422
    %v3535 = vmul.f32 %v3476, %v3423
    %v3536 = vmul.f32 %v3477, %v3424
    %v3537 = vmul.f32 %v3477, %v3425
    %v3538 = vmul.f32 %v3477, %v3426
    %v3539 = vmul.f32 %v3477, %v3427
    %v3540 = vmul.f32 %v3478, %v3428
    %v3541 = vmul.f32 %v3478, %v3429
    %v3542 = vmul.f32 %v3478, %v3430
    %v3543 = vmul.f32 %v3478, %v3431
    %v3544 = vmul.f32 %v3479, %v3432
    %v3545 = vmul.f32 %v3479, %v3433
    %v3546 = vmul.f32 %v3479, %v3434
    %v3547 = vmul.f32 %v3479, %v3435
    %v3548 = vmul.f32 %v3480, %v3436
    %v3549 = vmul.f32 %v3480, %v3437
    %v3550 = vmul.f32 %v3480, %v3438
    %v3551 = vmul.f32 %v3480, %v3439
    %v3552 = vmul.f32 %v3481, %v3440
    %v3553 = vmul.f32 %v3481, %v3441
    %v3554 = vmul.f32 %v3481, %v3442
    %v3555 = vmul.f32 %v3481, %v3443
    %v3556 = vmul.f32 %v3482, %v3444
    %v3557 = vmul.f32 %v3482, %v3445
    %v3558 = vmul.f32 %v3482, %v3446
    %v3559 = vmul.f32 %v3482, %v3447
    %v3560 = vmul.f32 %v3483, %v3448
    %v3561 = vmul.f32 %v3483, %v3449
    %v3562 = vmul.f32 %v3483, %v3450
    %v3563 = vmul.f32 %v3483, %v3451
    %v3564 = vadd.f32 %v3500, %v3504
    %v3565 = vadd.f32 %v3564, %v3508
    %v3566 = vadd.f32 %v3565, %v3512
    %v3567 = vadd.f32 %v3566, %v3516
    %v3568 = vadd.f32 %v3567, %v3520
    %v3569 = vadd.f32 %v3568, %v3524
    %v3570 = vadd.f32 %v3569, %v3528
    %v3571 = vadd.f32 %v3570, %v3532
    %v3572 = vadd.f32 %v3571, %v3536
    %v3573 = vadd.f32 %v3572, %v3540
    %v3574 = vadd.f32 %v3573, %v3544
    %v3575 = vadd.f32 %v3574, %v3548
    %v3576 = vadd.f32 %v3575, %v3552
    %v3577 = vadd.f32 %v3576, %v3556
    %v3578 = vadd.f32 %v3577, %v3560
    %v3579 = vadd.f32 %v3501, %v3505
    %v3580 = vadd.f32 %v3579, %v3509
    %v3581 = vadd.f32 %v3580, %v3513
    %v3582 = vadd.f32 %v3581, %v3517
    %v3583 = vadd.f32 %v3582, %v3521
    %v3584 = vadd.f32 %v3583, %v3525
    %v3585 = vadd.f32 %v3584, %v3529
    %v3586 = vadd.f32 %v3585, %v3533
    %v3587 = vadd.f32 %v3586, %v3537
    %v3588 = vadd.f32 %v3587, %v3541
    %v3589 = vadd.f32 %v3588, %v3545
    %v3590 = vadd.f32 %v3589, %v3549
    %v3591 = vadd.f32 %v3590, %v3553
    %v3592 = vadd.f32 %v3591, %v3557
    %v3593 = vadd.f32 %v3592, %v3561
    %v3594 = vadd.f32 %v3502, %v3506
    %v3595 = vadd.f32 %v3594, %v3510
    %v3596 = vadd.f32 %v3595, %v3514
    %v3597 = vadd.f32 %v3596, %v3518
    %v3598 = vadd.f32 %v3597, %v3522
    %v3599 = vadd.f32 %v3598, %v3526
    %v3600 = vadd.f32 %v3599, %v3530
    %v3601 = vadd.f32 %v3600, %v3534
    %v3602 = vadd.f32 %v3601, %v3538
    %v3603 = vadd.f32 %v3602, %v3542
    %v3604 = vadd.f32 %v3603, %v3546
    %v3605 = vadd.f32 %v3604, %v3550
    %v3606 = vadd.f32 %v3605, %v3554
    %v3607 = vadd.f32 %v3606, %v3558
    %v3608 = vadd.f32 %v3607, %v3562
    %v3609 = vadd.f32 %v3503, %v3507
    %v3610 = vadd.f32 %v3609, %v3511
    %v3611 = vadd.f32 %v3610, %v3515
    %v3612 = vadd.f32 %v3611, %v3519
    %v3613 = vadd.f32 %v3612, %v3523
    %v3614 = vadd.f32 %v3613, %v3527
    %v3615 = vadd.f32 %v3614, %v3531
    %v3616 = vadd.f32 %v3615, %v3535
    %v3617 = vadd.f32 %v3616, %v3539
    %v3618 = vadd.f32 %v3617, %v3543
    %v3619 = vadd.f32 %v3618, %v3547
    %v3620 = vadd.f32 %v3619, %v3551
    %v3621 = vadd.f32 %v3620, %v3555
    %v3622 = vadd.f32 %v3621, %v3559
    %v3623 = vadd.f32 %v3622, %v3563
    %s3624 = scalar_lea.vmem [#allocation9], 160
    %3625 = vst [vmem:[%s3624] sm:$0xff] %v3578
    %3626 = vst [vmem:[%s3624 + $0x8] sm:$0xff] %v3593
    %3627 = vst [vmem:[%s3624 + $0x10] sm:$0xff] %v3608
    %3628 = vst [vmem:[%s3624 + $0x18] sm:$0xff] %v3623
    %v3629 = vmul.f32 %v3468, %v3380
    %v3630 = vmul.f32 %v3468, %v3381
    %v3631 = vmul.f32 %v3468, %v3382
    %v3632 = vmul.f32 %v3468, %v3383
    %v3633 = vmul.f32 %v3469, %v3380
    %v3634 = vmul.f32 %v3469, %v3381
    %v3635 = vmul.f32 %v3469, %v3382
    %v3636 = vmul.f32 %v3469, %v3383
    %v3637 = vmul.f32 %v3470, %v3380
    %v3638 = vmul.f32 %v3470, %v3381
    %v3639 = vmul.f32 %v3470, %v3382
    %v3640 = vmul.f32 %v3470, %v3383
    %v3641 = vmul.f32 %v3471, %v3380
    %v3642 = vmul.f32 %v3471, %v3381
    %v3643 = vmul.f32 %v3471, %v3382
    %v3644 = vmul.f32 %v3471, %v3383
    %v3645 = vmul.f32 %v3472, %v3380
    %v3646 = vmul.f32 %v3472, %v3381
    %v3647 = vmul.f32 %v3472, %v3382
    %v3648 = vmul.f32 %v3472, %v3383
    %v3649 = vmul.f32 %v3473, %v3380
    %v3650 = vmul.f32 %v3473, %v3381
    %v3651 = vmul.f32 %v3473, %v3382
    %v3652 = vmul.f32 %v3473, %v3383
    %v3653 = vmul.f32 %v3474, %v3380
    %v3654 = vmul.f32 %v3474, %v3381
    %v3655 = vmul.f32 %v3474, %v3382
    %v3656 = vmul.f32 %v3474, %v3383
    %v3657 = vmul.f32 %v3475, %v3380
    %v3658 = vmul.f32 %v3475, %v3381
    %v3659 = vmul.f32 %v3475, %v3382
    %v3660 = vmul.f32 %v3475, %v3383
    %v3661 = vmul.f32 %v3476, %v3380
    %v3662 = vmul.f32 %v3476, %v3381
    %v3663 = vmul.f32 %v3476, %v3382
    %v3664 = vmul.f32 %v3476, %v3383
    %v3665 = vmul.f32 %v3477, %v3380
    %v3666 = vmul.f32 %v3477, %v3381
    %v3667 = vmul.f32 %v3477, %v3382
    %v3668 = vmul.f32 %v3477, %v3383
    %v3669 = vmul.f32 %v3478, %v3380
    %v3670 = vmul.f32 %v3478, %v3381
    %v3671 = vmul.f32 %v3478, %v3382
    %v3672 = vmul.f32 %v3478, %v3383
    %v3673 = vmul.f32 %v3479, %v3380
    %v3674 = vmul.f32 %v3479, %v3381
    %v3675 = vmul.f32 %v3479, %v3382
    %v3676 = vmul.f32 %v3479, %v3383
    %v3677 = vmul.f32 %v3480, %v3380
    %v3678 = vmul.f32 %v3480, %v3381
    %v3679 = vmul.f32 %v3480, %v3382
    %v3680 = vmul.f32 %v3480, %v3383
    %v3681 = vmul.f32 %v3481, %v3380
    %v3682 = vmul.f32 %v3481, %v3381
    %v3683 = vmul.f32 %v3481, %v3382
    %v3684 = vmul.f32 %v3481, %v3383
    %v3685 = vmul.f32 %v3482, %v3380
    %v3686 = vmul.f32 %v3482, %v3381
    %v3687 = vmul.f32 %v3482, %v3382
    %v3688 = vmul.f32 %v3482, %v3383
    %v3689 = vmul.f32 %v3483, %v3380
    %v3690 = vmul.f32 %v3483, %v3381
    %v3691 = vmul.f32 %v3483, %v3382
    %v3692 = vmul.f32 %v3483, %v3383
    %v3693 = vsub.f32 1.0, %v3629
    %v3694 = vsub.f32 1.0, %v3630
    %v3695 = vsub.f32 1.0, %v3631
    %v3696 = vsub.f32 1.0, %v3632
    %v3697 = vsub.f32 1.0, %v3633
    %v3698 = vsub.f32 1.0, %v3634
    %v3699 = vsub.f32 1.0, %v3635
    %v3700 = vsub.f32 1.0, %v3636
    %v3701 = vsub.f32 1.0, %v3637
    %v3702 = vsub.f32 1.0, %v3638
    %v3703 = vsub.f32 1.0, %v3639
    %v3704 = vsub.f32 1.0, %v3640
    %v3705 = vsub.f32 1.0, %v3641
    %v3706 = vsub.f32 1.0, %v3642
    %v3707 = vsub.f32 1.0, %v3643
    %v3708 = vsub.f32 1.0, %v3644
    %v3709 = vsub.f32 1.0, %v3645
    %v3710 = vsub.f32 1.0, %v3646
    %v3711 = vsub.f32 1.0, %v3647
    %v3712 = vsub.f32 1.0, %v3648
    %v3713 = vsub.f32 1.0, %v3649
    %v3714 = vsub.f32 1.0, %v3650
    %v3715 = vsub.f32 1.0, %v3651
    %v3716 = vsub.f32 1.0, %v3652
    %v3717 = vsub.f32 1.0, %v3653
    %v3718 = vsub.f32 1.0, %v3654
    %v3719 = vsub.f32 1.0, %v3655
    %v3720 = vsub.f32 1.0, %v3656
    %v3721 = vsub.f32 1.0, %v3657
    %v3722 = vsub.f32 1.0, %v3658
    %v3723 = vsub.f32 1.0, %v3659
    %v3724 = vsub.f32 1.0, %v3660
    %v3725 = vsub.f32 1.0, %v3661
    %v3726 = vsub.f32 1.0, %v3662
    %v3727 = vsub.f32 1.0, %v3663
    %v3728 = vsub.f32 1.0, %v3664
    %v3729 = vsub.f32 1.0, %v3665
    %v3730 = vsub.f32 1.0, %v3666
    %v3731 = vsub.f32 1.0, %v3667
    %v3732 = vsub.f32 1.0, %v3668
    %v3733 = vsub.f32 1.0, %v3669
    %v3734 = vsub.f32 1.0, %v3670
    %v3735 = vsub.f32 1.0, %v3671
    %v3736 = vsub.f32 1.0, %v3672
    %v3737 = vsub.f32 1.0, %v3673
    %v3738 = vsub.f32 1.0, %v3674
    %v3739 = vsub.f32 1.0, %v3675
    %v3740 = vsub.f32 1.0, %v3676
    %v3741 = vsub.f32 1.0, %v3677
    %v3742 = vsub.f32 1.0, %v3678
    %v3743 = vsub.f32 1.0, %v3679
    %v3744 = vsub.f32 1.0, %v3680
    %v3745 = vsub.f32 1.0, %v3681
    %v3746 = vsub.f32 1.0, %v3682
    %v3747 = vsub.f32 1.0, %v3683
    %v3748 = vsub.f32 1.0, %v3684
    %v3749 = vsub.f32 1.0, %v3685
    %v3750 = vsub.f32 1.0, %v3686
    %v3751 = vsub.f32 1.0, %v3687
    %v3752 = vsub.f32 1.0, %v3688
    %v3753 = vsub.f32 1.0, %v3689
    %v3754 = vsub.f32 1.0, %v3690
    %v3755 = vsub.f32 1.0, %v3691
    %v3756 = vsub.f32 1.0, %v3692
    %v3757 = vmul.f32 %v3388, %v3693
    %v3758 = vmul.f32 %v3389, %v3694
    %v3759 = vmul.f32 %v3390, %v3695
    %v3760 = vmul.f32 %v3391, %v3696
    %v3761 = vmul.f32 %v3392, %v3697
    %v3762 = vmul.f32 %v3393, %v3698
    %v3763 = vmul.f32 %v3394, %v3699
    %v3764 = vmul.f32 %v3395, %v3700
    %v3765 = vmul.f32 %v3396, %v3701
    %v3766 = vmul.f32 %v3397, %v3702
    %v3767 = vmul.f32 %v3398, %v3703
    %v3768 = vmul.f32 %v3399, %v3704
    %v3769 = vmul.f32 %v3400, %v3705
    %v3770 = vmul.f32 %v3401, %v3706
    %v3771 = vmul.f32 %v3402, %v3707
    %v3772 = vmul.f32 %v3403, %v3708
    %v3773 = vmul.f32 %v3404, %v3709
    %v3774 = vmul.f32 %v3405, %v3710
    %v3775 = vmul.f32 %v3406, %v3711
    %v3776 = vmul.f32 %v3407, %v3712
    %v3777 = vmul.f32 %v3408, %v3713
    %v3778 = vmul.f32 %v3409, %v3714
    %v3779 = vmul.f32 %v3410, %v3715
    %v3780 = vmul.f32 %v3411, %v3716
    %v3781 = vmul.f32 %v3412, %v3717
    %v3782 = vmul.f32 %v3413, %v3718
    %v3783 = vmul.f32 %v3414, %v3719
    %v3784 = vmul.f32 %v3415, %v3720
    %v3785 = vmul.f32 %v3416, %v3721
    %v3786 = vmul.f32 %v3417, %v3722
    %v3787 = vmul.f32 %v3418, %v3723
    %v3788 = vmul.f32 %v3419, %v3724
    %v3789 = vmul.f32 %v3420, %v3725
    %v3790 = vmul.f32 %v3421, %v3726
    %v3791 = vmul.f32 %v3422, %v3727
    %v3792 = vmul.f32 %v3423, %v3728
    %v3793 = vmul.f32 %v3424, %v3729
    %v3794 = vmul.f32 %v3425, %v3730
    %v3795 = vmul.f32 %v3426, %v3731
    %v3796 = vmul.f32 %v3427, %v3732
    %v3797 = vmul.f32 %v3428, %v3733
    %v3798 = vmul.f32 %v3429, %v3734
    %v3799 = vmul.f32 %v3430, %v3735
    %v3800 = vmul.f32 %v3431, %v3736
    %v3801 = vmul.f32 %v3432, %v3737
    %v3802 = vmul.f32 %v3433, %v3738
    %v3803 = vmul.f32 %v3434, %v3739
    %v3804 = vmul.f32 %v3435, %v3740
    %v3805 = vmul.f32 %v3436, %v3741
    %v3806 = vmul.f32 %v3437, %v3742
    %v3807 = vmul.f32 %v3438, %v3743
    %v3808 = vmul.f32 %v3439, %v3744
    %v3809 = vmul.f32 %v3440, %v3745
    %v3810 = vmul.f32 %v3441, %v3746
    %v3811 = vmul.f32 %v3442, %v3747
    %v3812 = vmul.f32 %v3443, %v3748
    %v3813 = vmul.f32 %v3444, %v3749
    %v3814 = vmul.f32 %v3445, %v3750
    %v3815 = vmul.f32 %v3446, %v3751
    %v3816 = vmul.f32 %v3447, %v3752
    %v3817 = vmul.f32 %v3448, %v3753
    %v3818 = vmul.f32 %v3449, %v3754
    %v3819 = vmul.f32 %v3450, %v3755
    %v3820 = vmul.f32 %v3451, %v3756
    %v3821 = vmul.f32 %v3468, %v3384
    %v3822 = vmul.f32 %v3468, %v3385
    %v3823 = vmul.f32 %v3468, %v3386
    %v3824 = vmul.f32 %v3468, %v3387
    %v3825 = vmul.f32 %v3469, %v3384
    %v3826 = vmul.f32 %v3469, %v3385
    %v3827 = vmul.f32 %v3469, %v3386
    %v3828 = vmul.f32 %v3469, %v3387
    %v3829 = vmul.f32 %v3470, %v3384
    %v3830 = vmul.f32 %v3470, %v3385
    %v3831 = vmul.f32 %v3470, %v3386
    %v3832 = vmul.f32 %v3470, %v3387
    %v3833 = vmul.f32 %v3471, %v3384
    %v3834 = vmul.f32 %v3471, %v3385
    %v3835 = vmul.f32 %v3471, %v3386
    %v3836 = vmul.f32 %v3471, %v3387
    %v3837 = vmul.f32 %v3472, %v3384
    %v3838 = vmul.f32 %v3472, %v3385
    %v3839 = vmul.f32 %v3472, %v3386
    %v3840 = vmul.f32 %v3472, %v3387
    %v3841 = vmul.f32 %v3473, %v3384
    %v3842 = vmul.f32 %v3473, %v3385
    %v3843 = vmul.f32 %v3473, %v3386
    %v3844 = vmul.f32 %v3473, %v3387
    %v3845 = vmul.f32 %v3474, %v3384
    %v3846 = vmul.f32 %v3474, %v3385
    %v3847 = vmul.f32 %v3474, %v3386
    %v3848 = vmul.f32 %v3474, %v3387
    %v3849 = vmul.f32 %v3475, %v3384
    %v3850 = vmul.f32 %v3475, %v3385
    %v3851 = vmul.f32 %v3475, %v3386
    %v3852 = vmul.f32 %v3475, %v3387
    %v3853 = vmul.f32 %v3476, %v3384
    %v3854 = vmul.f32 %v3476, %v3385
    %v3855 = vmul.f32 %v3476, %v3386
    %v3856 = vmul.f32 %v3476, %v3387
    %v3857 = vmul.f32 %v3477, %v3384
    %v3858 = vmul.f32 %v3477, %v3385
    %v3859 = vmul.f32 %v3477, %v3386
    %v3860 = vmul.f32 %v3477, %v3387
    %v3861 = vmul.f32 %v3478, %v3384
    %v3862 = vmul.f32 %v3478, %v3385
    %v3863 = vmul.f32 %v3478, %v3386
    %v3864 = vmul.f32 %v3478, %v3387
    %v3865 = vmul.f32 %v3479, %v3384
    %v3866 = vmul.f32 %v3479, %v3385
    %v3867 = vmul.f32 %v3479, %v3386
    %v3868 = vmul.f32 %v3479, %v3387
    %v3869 = vmul.f32 %v3480, %v3384
    %v3870 = vmul.f32 %v3480, %v3385
    %v3871 = vmul.f32 %v3480, %v3386
    %v3872 = vmul.f32 %v3480, %v3387
    %v3873 = vmul.f32 %v3481, %v3384
    %v3874 = vmul.f32 %v3481, %v3385
    %v3875 = vmul.f32 %v3481, %v3386
    %v3876 = vmul.f32 %v3481, %v3387
    %v3877 = vmul.f32 %v3482, %v3384
    %v3878 = vmul.f32 %v3482, %v3385
    %v3879 = vmul.f32 %v3482, %v3386
    %v3880 = vmul.f32 %v3482, %v3387
    %v3881 = vmul.f32 %v3483, %v3384
    %v3882 = vmul.f32 %v3483, %v3385
    %v3883 = vmul.f32 %v3483, %v3386
    %v3884 = vmul.f32 %v3483, %v3387
    %v3885 = vadd.f32 %v3757, %v3821
    %v3886 = vadd.f32 %v3758, %v3822
    %v3887 = vadd.f32 %v3759, %v3823
    %v3888 = vadd.f32 %v3760, %v3824
    %v3889 = vadd.f32 %v3761, %v3825
    %v3890 = vadd.f32 %v3762, %v3826
    %v3891 = vadd.f32 %v3763, %v3827
    %v3892 = vadd.f32 %v3764, %v3828
    %v3893 = vadd.f32 %v3765, %v3829
    %v3894 = vadd.f32 %v3766, %v3830
    %v3895 = vadd.f32 %v3767, %v3831
    %v3896 = vadd.f32 %v3768, %v3832
    %v3897 = vadd.f32 %v3769, %v3833
    %v3898 = vadd.f32 %v3770, %v3834
    %v3899 = vadd.f32 %v3771, %v3835
    %v3900 = vadd.f32 %v3772, %v3836
    %v3901 = vadd.f32 %v3773, %v3837
    %v3902 = vadd.f32 %v3774, %v3838
    %v3903 = vadd.f32 %v3775, %v3839
    %v3904 = vadd.f32 %v3776, %v3840
    %v3905 = vadd.f32 %v3777, %v3841
    %v3906 = vadd.f32 %v3778, %v3842
    %v3907 = vadd.f32 %v3779, %v3843
    %v3908 = vadd.f32 %v3780, %v3844
    %v3909 = vadd.f32 %v3781, %v3845
    %v3910 = vadd.f32 %v3782, %v3846
    %v3911 = vadd.f32 %v3783, %v3847
    %v3912 = vadd.f32 %v3784, %v3848
    %v3913 = vadd.f32 %v3785, %v3849
    %v3914 = vadd.f32 %v3786, %v3850
    %v3915 = vadd.f32 %v3787, %v3851
    %v3916 = vadd.f32 %v3788, %v3852
    %v3917 = vadd.f32 %v3789, %v3853
    %v3918 = vadd.f32 %v3790, %v3854
    %v3919 = vadd.f32 %v3791, %v3855
    %v3920 = vadd.f32 %v3792, %v3856
    %v3921 = vadd.f32 %v3793, %v3857
    %v3922 = vadd.f32 %v3794, %v3858
    %v3923 = vadd.f32 %v3795, %v3859
    %v3924 = vadd.f32 %v3796, %v3860
    %v3925 = vadd.f32 %v3797, %v3861
    %v3926 = vadd.f32 %v3798, %v3862
    %v3927 = vadd.f32 %v3799, %v3863
    %v3928 = vadd.f32 %v3800, %v3864
    %v3929 = vadd.f32 %v3801, %v3865
    %v3930 = vadd.f32 %v3802, %v3866
    %v3931 = vadd.f32 %v3803, %v3867
    %v3932 = vadd.f32 %v3804, %v3868
    %v3933 = vadd.f32 %v3805, %v3869
    %v3934 = vadd.f32 %v3806, %v3870
    %v3935 = vadd.f32 %v3807, %v3871
    %v3936 = vadd.f32 %v3808, %v3872
    %v3937 = vadd.f32 %v3809, %v3873
    %v3938 = vadd.f32 %v3810, %v3874
    %v3939 = vadd.f32 %v3811, %v3875
    %v3940 = vadd.f32 %v3812, %v3876
    %v3941 = vadd.f32 %v3813, %v3877
    %v3942 = vadd.f32 %v3814, %v3878
    %v3943 = vadd.f32 %v3815, %v3879
    %v3944 = vadd.f32 %v3816, %v3880
    %v3945 = vadd.f32 %v3817, %v3881
    %v3946 = vadd.f32 %v3818, %v3882
    %v3947 = vadd.f32 %v3819, %v3883
    %v3948 = vadd.f32 %v3820, %v3884
    %3949 = vst [vmem:[#allocation2] sm:$0xff] %v3885
    %3950 = vst [vmem:[#allocation2 + $0x8] sm:$0xff] %v3886
    %3951 = vst [vmem:[#allocation2 + $0x10] sm:$0xff] %v3887
    %3952 = vst [vmem:[#allocation2 + $0x18] sm:$0xff] %v3888
    %3953 = vst [vmem:[#allocation2 + $0x20] sm:$0xff] %v3889
    %3954 = vst [vmem:[#allocation2 + $0x28] sm:$0xff] %v3890
    %3955 = vst [vmem:[#allocation2 + $0x30] sm:$0xff] %v3891
    %3956 = vst [vmem:[#allocation2 + $0x38] sm:$0xff] %v3892
    %3957 = vst [vmem:[#allocation2 + $0x40] sm:$0xff] %v3893
    %3958 = vst [vmem:[#allocation2 + $0x48] sm:$0xff] %v3894
    %3959 = vst [vmem:[#allocation2 + $0x50] sm:$0xff] %v3895
    %3960 = vst [vmem:[#allocation2 + $0x58] sm:$0xff] %v3896
    %3961 = vst [vmem:[#allocation2 + $0x60] sm:$0xff] %v3897
    %3962 = vst [vmem:[#allocation2 + $0x68] sm:$0xff] %v3898
    %3963 = vst [vmem:[#allocation2 + $0x70] sm:$0xff] %v3899
    %3964 = vst [vmem:[#allocation2 + $0x78] sm:$0xff] %v3900
    %3965 = vst [vmem:[#allocation2 + $0x80] sm:$0xff] %v3901
    %3966 = vst [vmem:[#allocation2 + $0x88] sm:$0xff] %v3902
    %3967 = vst [vmem:[#allocation2 + $0x90] sm:$0xff] %v3903
    %3968 = vst [vmem:[#allocation2 + $0x98] sm:$0xff] %v3904
    %3969 = vst [vmem:[#allocation2 + $0xa0] sm:$0xff] %v3905
    %3970 = vst [vmem:[#allocation2 + $0xa8] sm:$0xff] %v3906
    %3971 = vst [vmem:[#allocation2 + $0xb0] sm:$0xff] %v3907
    %3972 = vst [vmem:[#allocation2 + $0xb8] sm:$0xff] %v3908
    %3973 = vst [vmem:[#allocation2 + $0xc0] sm:$0xff] %v3909
    %3974 = vst [vmem:[#allocation2 + $0xc8] sm:$0xff] %v3910
    %3975 = vst [vmem:[#allocation2 + $0xd0] sm:$0xff] %v3911
    %3976 = vst [vmem:[#allocation2 + $0xd8] sm:$0xff] %v3912
    %3977 = vst [vmem:[#allocation2 + $0xe0] sm:$0xff] %v3913
    %3978 = vst [vmem:[#allocation2 + $0xe8] sm:$0xff] %v3914
    %3979 = vst [vmem:[#allocation2 + $0xf0] sm:$0xff] %v3915
    %3980 = vst [vmem:[#allocation2 + $0xf8] sm:$0xff] %v3916
    %3981 = vst [vmem:[#allocation2 + $0x100] sm:$0xff] %v3917
    %3982 = vst [vmem:[#allocation2 + $0x108] sm:$0xff] %v3918
    %3983 = vst [vmem:[#allocation2 + $0x110] sm:$0xff] %v3919
    %3984 = vst [vmem:[#allocation2 + $0x118] sm:$0xff] %v3920
    %3985 = vst [vmem:[#allocation2 + $0x120] sm:$0xff] %v3921
    %3986 = vst [vmem:[#allocation2 + $0x128] sm:$0xff] %v3922
    %3987 = vst [vmem:[#allocation2 + $0x130] sm:$0xff] %v3923
    %3988 = vst [vmem:[#allocation2 + $0x138] sm:$0xff] %v3924
    %3989 = vst [vmem:[#allocation2 + $0x140] sm:$0xff] %v3925
    %3990 = vst [vmem:[#allocation2 + $0x148] sm:$0xff] %v3926
    %3991 = vst [vmem:[#allocation2 + $0x150] sm:$0xff] %v3927
    %3992 = vst [vmem:[#allocation2 + $0x158] sm:$0xff] %v3928
    %3993 = vst [vmem:[#allocation2 + $0x160] sm:$0xff] %v3929
    %3994 = vst [vmem:[#allocation2 + $0x168] sm:$0xff] %v3930
    %3995 = vst [vmem:[#allocation2 + $0x170] sm:$0xff] %v3931
    %3996 = vst [vmem:[#allocation2 + $0x178] sm:$0xff] %v3932
    %3997 = vst [vmem:[#allocation2 + $0x180] sm:$0xff] %v3933
    %3998 = vst [vmem:[#allocation2 + $0x188] sm:$0xff] %v3934
    %3999 = vst [vmem:[#allocation2 + $0x190] sm:$0xff] %v3935
    %4000 = vst [vmem:[#allocation2 + $0x198] sm:$0xff] %v3936
    %4001 = vst [vmem:[#allocation2 + $0x1a0] sm:$0xff] %v3937
    %4002 = vst [vmem:[#allocation2 + $0x1a8] sm:$0xff] %v3938
    %4003 = vst [vmem:[#allocation2 + $0x1b0] sm:$0xff] %v3939
    %4004 = vst [vmem:[#allocation2 + $0x1b8] sm:$0xff] %v3940
    %4005 = vst [vmem:[#allocation2 + $0x1c0] sm:$0xff] %v3941
    %4006 = vst [vmem:[#allocation2 + $0x1c8] sm:$0xff] %v3942
    %4007 = vst [vmem:[#allocation2 + $0x1d0] sm:$0xff] %v3943
    %4008 = vst [vmem:[#allocation2 + $0x1d8] sm:$0xff] %v3944
    %4009 = vst [vmem:[#allocation2 + $0x1e0] sm:$0xff] %v3945
    %4010 = vst [vmem:[#allocation2 + $0x1e8] sm:$0xff] %v3946
    %4011 = vst [vmem:[#allocation2 + $0x1f0] sm:$0xff] %v3947
    %4012 = vst [vmem:[#allocation2 + $0x1f8] sm:$0xff] %v3948
    %s4013 = scalar_lea.vmem [#allocation3], 96
    %v4014 = vld [vmem:[%s4013] sm:$0xff]
    %v4015 = vld [vmem:[%s4013 + $0x8] sm:$0xff]
    %s4016 = scalar_lea.vmem [#allocation6], 384
    %v4017 = vld [vmem:[%s4016] sm:$0xff]
    %v4018 = vld [vmem:[%s4016 + $0x8] sm:$0xff]
    %v4019 = vld [vmem:[%s4016 + $0x10] sm:$0xff]
    %v4020 = vld [vmem:[%s4016 + $0x18] sm:$0xff]
    %v4021 = vld [vmem:[%s4016 + $0x20] sm:$0xff]
    %v4022 = vld [vmem:[%s4016 + $0x28] sm:$0xff]
    %v4023 = vld [vmem:[%s4016 + $0x30] sm:$0xff]
    %v4024 = vld [vmem:[%s4016 + $0x38] sm:$0xff]
    %v4025 = vld [vmem:[#allocation2] sm:$0xff]
    %v4026 = vld [vmem:[#allocation2 + $0x8] sm:$0xff]
    %v4027 = vld [vmem:[#allocation2 + $0x10] sm:$0xff]
    %v4028 = vld [vmem:[#allocation2 + $0x18] sm:$0xff]
    %v4029 = vld [vmem:[#allocation2 + $0x20] sm:$0xff]
    %v4030 = vld [vmem:[#allocation2 + $0x28] sm:$0xff]
    %v4031 = vld [vmem:[#allocation2 + $0x30] sm:$0xff]
    %v4032 = vld [vmem:[#allocation2 + $0x38] sm:$0xff]
    %v4033 = vld [vmem:[#allocation2 + $0x40] sm:$0xff]
    %v4034 = vld [vmem:[#allocation2 + $0x48] sm:$0xff]
    %v4035 = vld [vmem:[#allocation2 + $0x50] sm:$0xff]
    %v4036 = vld [vmem:[#allocation2 + $0x58] sm:$0xff]
    %v4037 = vld [vmem:[#allocation2 + $0x60] sm:$0xff]
    %v4038 = vld [vmem:[#allocation2 + $0x68] sm:$0xff]
    %v4039 = vld [vmem:[#allocation2 + $0x70] sm:$0xff]
    %v4040 = vld [vmem:[#allocation2 + $0x78] sm:$0xff]
    %v4041 = vld [vmem:[#allocation2 + $0x80] sm:$0xff]
    %v4042 = vld [vmem:[#allocation2 + $0x88] sm:$0xff]
    %v4043 = vld [vmem:[#allocation2 + $0x90] sm:$0xff]
    %v4044 = vld [vmem:[#allocation2 + $0x98] sm:$0xff]
    %v4045 = vld [vmem:[#allocation2 + $0xa0] sm:$0xff]
    %v4046 = vld [vmem:[#allocation2 + $0xa8] sm:$0xff]
    %v4047 = vld [vmem:[#allocation2 + $0xb0] sm:$0xff]
    %v4048 = vld [vmem:[#allocation2 + $0xb8] sm:$0xff]
    %v4049 = vld [vmem:[#allocation2 + $0xc0] sm:$0xff]
    %v4050 = vld [vmem:[#allocation2 + $0xc8] sm:$0xff]
    %v4051 = vld [vmem:[#allocation2 + $0xd0] sm:$0xff]
    %v4052 = vld [vmem:[#allocation2 + $0xd8] sm:$0xff]
    %v4053 = vld [vmem:[#allocation2 + $0xe0] sm:$0xff]
    %v4054 = vld [vmem:[#allocation2 + $0xe8] sm:$0xff]
    %v4055 = vld [vmem:[#allocation2 + $0xf0] sm:$0xff]
    %v4056 = vld [vmem:[#allocation2 + $0xf8] sm:$0xff]
    %v4057 = vld [vmem:[#allocation2 + $0x100] sm:$0xff]
    %v4058 = vld [vmem:[#allocation2 + $0x108] sm:$0xff]
    %v4059 = vld [vmem:[#allocation2 + $0x110] sm:$0xff]
    %v4060 = vld [vmem:[#allocation2 + $0x118] sm:$0xff]
    %v4061 = vld [vmem:[#allocation2 + $0x120] sm:$0xff]
    %v4062 = vld [vmem:[#allocation2 + $0x128] sm:$0xff]
    %v4063 = vld [vmem:[#allocation2 + $0x130] sm:$0xff]
    %v4064 = vld [vmem:[#allocation2 + $0x138] sm:$0xff]
    %v4065 = vld [vmem:[#allocation2 + $0x140] sm:$0xff]
    %v4066 = vld [vmem:[#allocation2 + $0x148] sm:$0xff]
    %v4067 = vld [vmem:[#allocation2 + $0x150] sm:$0xff]
    %v4068 = vld [vmem:[#allocation2 + $0x158] sm:$0xff]
    %v4069 = vld [vmem:[#allocation2 + $0x160] sm:$0xff]
    %v4070 = vld [vmem:[#allocation2 + $0x168] sm:$0xff]
    %v4071 = vld [vmem:[#allocation2 + $0x170] sm:$0xff]
    %v4072 = vld [vmem:[#allocation2 + $0x178] sm:$0xff]
    %v4073 = vld [vmem:[#allocation2 + $0x180] sm:$0xff]
    %v4074 = vld [vmem:[#allocation2 + $0x188] sm:$0xff]
    %v4075 = vld [vmem:[#allocation2 + $0x190] sm:$0xff]
    %v4076 = vld [vmem:[#allocation2 + $0x198] sm:$0xff]
    %v4077 = vld [vmem:[#allocation2 + $0x1a0] sm:$0xff]
    %v4078 = vld [vmem:[#allocation2 + $0x1a8] sm:$0xff]
    %v4079 = vld [vmem:[#allocation2 + $0x1b0] sm:$0xff]
    %v4080 = vld [vmem:[#allocation2 + $0x1b8] sm:$0xff]
    %v4081 = vld [vmem:[#allocation2 + $0x1c0] sm:$0xff]
    %v4082 = vld [vmem:[#allocation2 + $0x1c8] sm:$0xff]
    %v4083 = vld [vmem:[#allocation2 + $0x1d0] sm:$0xff]
    %v4084 = vld [vmem:[#allocation2 + $0x1d8] sm:$0xff]
    %v4085 = vld [vmem:[#allocation2 + $0x1e0] sm:$0xff]
    %v4086 = vld [vmem:[#allocation2 + $0x1e8] sm:$0xff]
    %v4087 = vld [vmem:[#allocation2 + $0x1f0] sm:$0xff]
    %v4088 = vld [vmem:[#allocation2 + $0x1f8] sm:$0xff]
    %v4091 = vrot.slane %v4014, 1
    %v4092 = vrot.slane %v4014, 2
    %v4093 = vrot.slane %v4014, 3
    %v4094 = vrot.slane %v4014, 4
    %v4095 = vrot.slane %v4014, 5
    %v4096 = vrot.slane %v4014, 6
    %v4097 = vrot.slane %v4014, 7
    %v4098 = vrot.slane %v4015, 1
    %v4099 = vrot.slane %v4015, 2
    %v4100 = vrot.slane %v4015, 3
    %v4101 = vrot.slane %v4015, 4
    %v4102 = vrot.slane %v4015, 5
    %v4103 = vrot.slane %v4015, 6
    %v4104 = vrot.slane %v4015, 7
    %v4105 = vperm.slane %v4014, 0
    %v4106 = vperm.slane %v4091, 0
    %v4107 = vperm.slane %v4092, 0
    %v4108 = vperm.slane %v4093, 0
    %v4109 = vperm.slane %v4094, 0
    %v4110 = vperm.slane %v4095, 0
    %v4111 = vperm.slane %v4096, 0
    %v4112 = vperm.slane %v4097, 0
    %v4113 = vperm.slane %v4015, 0
    %v4114 = vperm.slane %v4098, 0
    %v4115 = vperm.slane %v4099, 0
    %v4116 = vperm.slane %v4100, 0
    %v4117 = vperm.slane %v4101, 0
    %v4118 = vperm.slane %v4102, 0
    %v4119 = vperm.slane %v4103, 0
    %v4120 = vperm.slane %v4104, 0
    %v4137 = vmul.f32 %v4105, %v4025
    %v4138 = vmul.f32 %v4105, %v4026
    %v4139 = vmul.f32 %v4105, %v4027
    %v4140 = vmul.f32 %v4105, %v4028
    %v4141 = vmul.f32 %v4106, %v4029
    %v4142 = vmul.f32 %v4106, %v4030
    %v4143 = vmul.f32 %v4106, %v4031
    %v4144 = vmul.f32 %v4106, %v4032
    %v4145 = vmul.f32 %v4107, %v4033
    %v4146 = vmul.f32 %v4107, %v4034
    %v4147 = vmul.f32 %v4107, %v4035
    %v4148 = vmul.f32 %v4107, %v4036
    %v4149 = vmul.f32 %v4108, %v4037
    %v4150 = vmul.f32 %v4108, %v4038
    %v4151 = vmul.f32 %v4108, %v4039
    %v4152 = vmul.f32 %v4108, %v4040
    %v4153 = vmul.f32 %v4109, %v4041
    %v4154 = vmul.f32 %v4109, %v4042
    %v4155 = vmul.f32 %v4109, %v4043
    %v4156 = vmul.f32 %v4109, %v4044
    %v4157 = vmul.f32 %v4110, %v4045
    %v4158 = vmul.f32 %v4110, %v4046
    %v4159 = vmul.f32 %v4110, %v4047
    %v4160 = vmul.f32 %v4110, %v4048
    %v4161 = vmul.f32 %v4111, %v4049
    %v4162 = vmul.f32 %v4111, %v4050
    %v4163 = vmul.f32 %v4111, %v4051
    %v4164 = vmul.f32 %v4111, %v4052
    %v4165 = vmul.f32 %v4112, %v4053
    %v4166 = vmul.f32 %v4112, %v4054
    %v4167 = vmul.f32 %v4112, %v4055
    %v4168 = vmul.f32 %v4112, %v4056
    %v4169 = vmul.f32 %v4113, %v4057
    %v4170 = vmul.f32 %v4113, %v4058
    %v4171 = vmul.f32 %v4113, %v4059
    %v4172 = vmul.f32 %v4113, %v4060
    %v4173 = vmul.f32 %v4114, %v4061
    %v4174 = vmul.f32 %v4114, %v4062
    %v4175 = vmul.f32 %v4114, %v4063
    %v4176 = vmul.f32 %v4114, %v4064
    %v4177 = vmul.f32 %v4115, %v4065
    %v4178 = vmul.f32 %v4115, %v4066
    %v4179 = vmul.f32 %v4115, %v4067
    %v4180 = vmul.f32 %v4115, %v4068
    %v4181 = vmul.f32 %v4116, %v4069
    %v4182 = vmul.f32 %v4116, %v4070
    %v4183 = vmul.f32 %v4116, %v4071
    %v4184 = vmul.f32 %v4116, %v4072
    %v4185 = vmul.f32 %v4117, %v4073
    %v4186 = vmul.f32 %v4117, %v4074
    %v4187 = vmul.f32 %v4117, %v4075
    %v4188 = vmul.f32 %v4117, %v4076
    %v4189 = vmul.f32 %v4118, %v4077
    %v4190 = vmul.f32 %v4118, %v4078
    %v4191 = vmul.f32 %v4118, %v4079
    %v4192 = vmul.f32 %v4118, %v4080
    %v4193 = vmul.f32 %v4119, %v4081
    %v4194 = vmul.f32 %v4119, %v4082
    %v4195 = vmul.f32 %v4119, %v4083
    %v4196 = vmul.f32 %v4119, %v4084
    %v4197 = vmul.f32 %v4120, %v4085
    %v4198 = vmul.f32 %v4120, %v4086
    %v4199 = vmul.f32 %v4120, %v4087
    %v4200 = vmul.f32 %v4120, %v4088
    %v4201 = vadd.f32 %v4137, %v4141
    %v4202 = vadd.f32 %v4201, %v4145
    %v4203 = vadd.f32 %v4202, %v4149
    %v4204 = vadd.f32 %v4203, %v4153
    %v4205 = vadd.f32 %v4204, %v4157
    %v4206 = vadd.f32 %v4205, %v4161
    %v4207 = vadd.f32 %v4206, %v4165
    %v4208 = vadd.f32 %v4207, %v4169
    %v4209 = vadd.f32 %v4208, %v4173
    %v4210 = vadd.f32 %v4209, %v4177
    %v4211 = vadd.f32 %v4210, %v4181
    %v4212 = vadd.f32 %v4211, %v4185
    %v4213 = vadd.f32 %v4212, %v4189
    %v4214 = vadd.f32 %v4213, %v4193
    %v4215 = vadd.f32 %v4214, %v4197
    %v4216 = vadd.f32 %v4138, %v4142
    %v4217 = vadd.f32 %v4216, %v4146
    %v4218 = vadd.f32 %v4217, %v4150
    %v4219 = vadd.f32 %v4218, %v4154
    %v4220 = vadd.f32 %v4219, %v4158
    %v4221 = vadd.f32 %v4220, %v4162
    %v4222 = vadd.f32 %v4221, %v4166
    %v4223 = vadd.f32 %v4222, %v4170
    %v4224 = vadd.f32 %v4223, %v4174
    %v4225 = vadd.f32 %v4224, %v4178
    %v4226 = vadd.f32 %v4225, %v4182
    %v4227 = vadd.f32 %v4226, %v4186
    %v4228 = vadd.f32 %v4227, %v4190
    %v4229 = vadd.f32 %v4228, %v4194
    %v4230 = vadd.f32 %v4229, %v4198
    %v4231 = vadd.f32 %v4139, %v4143
    %v4232 = vadd.f32 %v4231, %v4147
    %v4233 = vadd.f32 %v4232, %v4151
    %v4234 = vadd.f32 %v4233, %v4155
    %v4235 = vadd.f32 %v4234, %v4159
    %v4236 = vadd.f32 %v4235, %v4163
    %v4237 = vadd.f32 %v4236, %v4167
    %v4238 = vadd.f32 %v4237, %v4171
    %v4239 = vadd.f32 %v4238, %v4175
    %v4240 = vadd.f32 %v4239, %v4179
    %v4241 = vadd.f32 %v4240, %v4183
    %v4242 = vadd.f32 %v4241, %v4187
    %v4243 = vadd.f32 %v4242, %v4191
    %v4244 = vadd.f32 %v4243, %v4195
    %v4245 = vadd.f32 %v4244, %v4199
    %v4246 = vadd.f32 %v4140, %v4144
    %v4247 = vadd.f32 %v4246, %v4148
    %v4248 = vadd.f32 %v4247, %v4152
    %v4249 = vadd.f32 %v4248, %v4156
    %v4250 = vadd.f32 %v4249, %v4160
    %v4251 = vadd.f32 %v4250, %v4164
    %v4252 = vadd.f32 %v4251, %v4168
    %v4253 = vadd.f32 %v4252, %v4172
    %v4254 = vadd.f32 %v4253, %v4176
    %v4255 = vadd.f32 %v4254, %v4180
    %v4256 = vadd.f32 %v4255, %v4184
    %v4257 = vadd.f32 %v4256, %v4188
    %v4258 = vadd.f32 %v4257, %v4192
    %v4259 = vadd.f32 %v4258, %v4196
    %v4260 = vadd.f32 %v4259, %v4200
    %s4261 = scalar_lea.vmem [#allocation9], 192
    %4262 = vst [vmem:[%s4261] sm:$0xff] %v4215
    %4263 = vst [vmem:[%s4261 + $0x8] sm:$0xff] %v4230
    %4264 = vst [vmem:[%s4261 + $0x10] sm:$0xff] %v4245
    %4265 = vst [vmem:[%s4261 + $0x18] sm:$0xff] %v4260
    %v4266 = vmul.f32 %v4105, %v4017
    %v4267 = vmul.f32 %v4105, %v4018
    %v4268 = vmul.f32 %v4105, %v4019
    %v4269 = vmul.f32 %v4105, %v4020
    %v4270 = vmul.f32 %v4106, %v4017
    %v4271 = vmul.f32 %v4106, %v4018
    %v4272 = vmul.f32 %v4106, %v4019
    %v4273 = vmul.f32 %v4106, %v4020
    %v4274 = vmul.f32 %v4107, %v4017
    %v4275 = vmul.f32 %v4107, %v4018
    %v4276 = vmul.f32 %v4107, %v4019
    %v4277 = vmul.f32 %v4107, %v4020
    %v4278 = vmul.f32 %v4108, %v4017
    %v4279 = vmul.f32 %v4108, %v4018
    %v4280 = vmul.f32 %v4108, %v4019
    %v4281 = vmul.f32 %v4108, %v4020
    %v4282 = vmul.f32 %v4109, %v4017
    %v4283 = vmul.f32 %v4109, %v4018
    %v4284 = vmul.f32 %v4109, %v4019
    %v4285 = vmul.f32 %v4109, %v4020
    %v4286 = vmul.f32 %v4110, %v4017
    %v4287 = vmul.f32 %v4110, %v4018
    %v4288 = vmul.f32 %v4110, %v4019
    %v4289 = vmul.f32 %v4110, %v4020
    %v4290 = vmul.f32 %v4111, %v4017
    %v4291 = vmul.f32 %v4111, %v4018
    %v4292 = vmul.f32 %v4111, %v4019
    %v4293 = vmul.f32 %v4111, %v4020
    %v4294 = vmul.f32 %v4112, %v4017
    %v4295 = vmul.f32 %v4112, %v4018
    %v4296 = vmul.f32 %v4112, %v4019
    %v4297 = vmul.f32 %v4112, %v4020
    %v4298 = vmul.f32 %v4113, %v4017
    %v4299 = vmul.f32 %v4113, %v4018
    %v4300 = vmul.f32 %v4113, %v4019
    %v4301 = vmul.f32 %v4113, %v4020
    %v4302 = vmul.f32 %v4114, %v4017
    %v4303 = vmul.f32 %v4114, %v4018
    %v4304 = vmul.f32 %v4114, %v4019
    %v4305 = vmul.f32 %v4114, %v4020
    %v4306 = vmul.f32 %v4115, %v4017
    %v4307 = vmul.f32 %v4115, %v4018
    %v4308 = vmul.f32 %v4115, %v4019
    %v4309 = vmul.f32 %v4115, %v4020
    %v4310 = vmul.f32 %v4116, %v4017
    %v4311 = vmul.f32 %v4116, %v4018
    %v4312 = vmul.f32 %v4116, %v4019
    %v4313 = vmul.f32 %v4116, %v4020
    %v4314 = vmul.f32 %v4117, %v4017
    %v4315 = vmul.f32 %v4117, %v4018
    %v4316 = vmul.f32 %v4117, %v4019
    %v4317 = vmul.f32 %v4117, %v4020
    %v4318 = vmul.f32 %v4118, %v4017
    %v4319 = vmul.f32 %v4118, %v4018
    %v4320 = vmul.f32 %v4118, %v4019
    %v4321 = vmul.f32 %v4118, %v4020
    %v4322 = vmul.f32 %v4119, %v4017
    %v4323 = vmul.f32 %v4119, %v4018
    %v4324 = vmul.f32 %v4119, %v4019
    %v4325 = vmul.f32 %v4119, %v4020
    %v4326 = vmul.f32 %v4120, %v4017
    %v4327 = vmul.f32 %v4120, %v4018
    %v4328 = vmul.f32 %v4120, %v4019
    %v4329 = vmul.f32 %v4120, %v4020
    %v4330 = vsub.f32 1.0, %v4266
    %v4331 = vsub.f32 1.0, %v4267
    %v4332 = vsub.f32 1.0, %v4268
    %v4333 = vsub.f32 1.0, %v4269
    %v4334 = vsub.f32 1.0, %v4270
    %v4335 = vsub.f32 1.0, %v4271
    %v4336 = vsub.f32 1.0, %v4272
    %v4337 = vsub.f32 1.0, %v4273
    %v4338 = vsub.f32 1.0, %v4274
    %v4339 = vsub.f32 1.0, %v4275
    %v4340 = vsub.f32 1.0, %v4276
    %v4341 = vsub.f32 1.0, %v4277
    %v4342 = vsub.f32 1.0, %v4278
    %v4343 = vsub.f32 1.0, %v4279
    %v4344 = vsub.f32 1.0, %v4280
    %v4345 = vsub.f32 1.0, %v4281
    %v4346 = vsub.f32 1.0, %v4282
    %v4347 = vsub.f32 1.0, %v4283
    %v4348 = vsub.f32 1.0, %v4284
    %v4349 = vsub.f32 1.0, %v4285
    %v4350 = vsub.f32 1.0, %v4286
    %v4351 = vsub.f32 1.0, %v4287
    %v4352 = vsub.f32 1.0, %v4288
    %v4353 = vsub.f32 1.0, %v4289
    %v4354 = vsub.f32 1.0, %v4290
    %v4355 = vsub.f32 1.0, %v4291
    %v4356 = vsub.f32 1.0, %v4292
    %v4357 = vsub.f32 1.0, %v4293
    %v4358 = vsub.f32 1.0, %v4294
    %v4359 = vsub.f32 1.0, %v4295
    %v4360 = vsub.f32 1.0, %v4296
    %v4361 = vsub.f32 1.0, %v4297
    %v4362 = vsub.f32 1.0, %v4298
    %v4363 = vsub.f32 1.0, %v4299
    %v4364 = vsub.f32 1.0, %v4300
    %v4365 = vsub.f32 1.0, %v4301
    %v4366 = vsub.f32 1.0, %v4302
    %v4367 = vsub.f32 1.0, %v4303
    %v4368 = vsub.f32 1.0, %v4304
    %v4369 = vsub.f32 1.0, %v4305
    %v4370 = vsub.f32 1.0, %v4306
    %v4371 = vsub.f32 1.0, %v4307
    %v4372 = vsub.f32 1.0, %v4308
    %v4373 = vsub.f32 1.0, %v4309
    %v4374 = vsub.f32 1.0, %v4310
    %v4375 = vsub.f32 1.0, %v4311
    %v4376 = vsub.f32 1.0, %v4312
    %v4377 = vsub.f32 1.0, %v4313
    %v4378 = vsub.f32 1.0, %v4314
    %v4379 = vsub.f32 1.0, %v4315
    %v4380 = vsub.f32 1.0, %v4316
    %v4381 = vsub.f32 1.0, %v4317
    %v4382 = vsub.f32 1.0, %v4318
    %v4383 = vsub.f32 1.0, %v4319
    %v4384 = vsub.f32 1.0, %v4320
    %v4385 = vsub.f32 1.0, %v4321
    %v4386 = vsub.f32 1.0, %v4322
    %v4387 = vsub.f32 1.0, %v4323
    %v4388 = vsub.f32 1.0, %v4324
    %v4389 = vsub.f32 1.0, %v4325
    %v4390 = vsub.f32 1.0, %v4326
    %v4391 = vsub.f32 1.0, %v4327
    %v4392 = vsub.f32 1.0, %v4328
    %v4393 = vsub.f32 1.0, %v4329
    %v4394 = vmul.f32 %v4025, %v4330
    %v4395 = vmul.f32 %v4026, %v4331
    %v4396 = vmul.f32 %v4027, %v4332
    %v4397 = vmul.f32 %v4028, %v4333
    %v4398 = vmul.f32 %v4029, %v4334
    %v4399 = vmul.f32 %v4030, %v4335
    %v4400 = vmul.f32 %v4031, %v4336
    %v4401 = vmul.f32 %v4032, %v4337
    %v4402 = vmul.f32 %v4033, %v4338
    %v4403 = vmul.f32 %v4034, %v4339
    %v4404 = vmul.f32 %v4035, %v4340
    %v4405 = vmul.f32 %v4036, %v4341
    %v4406 = vmul.f32 %v4037, %v4342
    %v4407 = vmul.f32 %v4038, %v4343
    %v4408 = vmul.f32 %v4039, %v4344
    %v4409 = vmul.f32 %v4040, %v4345
    %v4410 = vmul.f32 %v4041, %v4346
    %v4411 = vmul.f32 %v4042, %v4347
    %v4412 = vmul.f32 %v4043, %v4348
    %v4413 = vmul.f32 %v4044, %v4349
    %v4414 = vmul.f32 %v4045, %v4350
    %v4415 = vmul.f32 %v4046, %v4351
    %v4416 = vmul.f32 %v4047, %v4352
    %v4417 = vmul.f32 %v4048, %v4353
    %v4418 = vmul.f32 %v4049, %v4354
    %v4419 = vmul.f32 %v4050, %v4355
    %v4420 = vmul.f32 %v4051, %v4356
    %v4421 = vmul.f32 %v4052, %v4357
    %v4422 = vmul.f32 %v4053, %v4358
    %v4423 = vmul.f32 %v4054, %v4359
    %v4424 = vmul.f32 %v4055, %v4360
    %v4425 = vmul.f32 %v4056, %v4361
    %v4426 = vmul.f32 %v4057, %v4362
    %v4427 = vmul.f32 %v4058, %v4363
    %v4428 = vmul.f32 %v4059, %v4364
    %v4429 = vmul.f32 %v4060, %v4365
    %v4430 = vmul.f32 %v4061, %v4366
    %v4431 = vmul.f32 %v4062, %v4367
    %v4432 = vmul.f32 %v4063, %v4368
    %v4433 = vmul.f32 %v4064, %v4369
    %v4434 = vmul.f32 %v4065, %v4370
    %v4435 = vmul.f32 %v4066, %v4371
    %v4436 = vmul.f32 %v4067, %v4372
    %v4437 = vmul.f32 %v4068, %v4373
    %v4438 = vmul.f32 %v4069, %v4374
    %v4439 = vmul.f32 %v4070, %v4375
    %v4440 = vmul.f32 %v4071, %v4376
    %v4441 = vmul.f32 %v4072, %v4377
    %v4442 = vmul.f32 %v4073, %v4378
    %v4443 = vmul.f32 %v4074, %v4379
    %v4444 = vmul.f32 %v4075, %v4380
    %v4445 = vmul.f32 %v4076, %v4381
    %v4446 = vmul.f32 %v4077, %v4382
    %v4447 = vmul.f32 %v4078, %v4383
    %v4448 = vmul.f32 %v4079, %v4384
    %v4449 = vmul.f32 %v4080, %v4385
    %v4450 = vmul.f32 %v4081, %v4386
    %v4451 = vmul.f32 %v4082, %v4387
    %v4452 = vmul.f32 %v4083, %v4388
    %v4453 = vmul.f32 %v4084, %v4389
    %v4454 = vmul.f32 %v4085, %v4390
    %v4455 = vmul.f32 %v4086, %v4391
    %v4456 = vmul.f32 %v4087, %v4392
    %v4457 = vmul.f32 %v4088, %v4393
    %v4458 = vmul.f32 %v4105, %v4021
    %v4459 = vmul.f32 %v4105, %v4022
    %v4460 = vmul.f32 %v4105, %v4023
    %v4461 = vmul.f32 %v4105, %v4024
    %v4462 = vmul.f32 %v4106, %v4021
    %v4463 = vmul.f32 %v4106, %v4022
    %v4464 = vmul.f32 %v4106, %v4023
    %v4465 = vmul.f32 %v4106, %v4024
    %v4466 = vmul.f32 %v4107, %v4021
    %v4467 = vmul.f32 %v4107, %v4022
    %v4468 = vmul.f32 %v4107, %v4023
    %v4469 = vmul.f32 %v4107, %v4024
    %v4470 = vmul.f32 %v4108, %v4021
    %v4471 = vmul.f32 %v4108, %v4022
    %v4472 = vmul.f32 %v4108, %v4023
    %v4473 = vmul.f32 %v4108, %v4024
    %v4474 = vmul.f32 %v4109, %v4021
    %v4475 = vmul.f32 %v4109, %v4022
    %v4476 = vmul.f32 %v4109, %v4023
    %v4477 = vmul.f32 %v4109, %v4024
    %v4478 = vmul.f32 %v4110, %v4021
    %v4479 = vmul.f32 %v4110, %v4022
    %v4480 = vmul.f32 %v4110, %v4023
    %v4481 = vmul.f32 %v4110, %v4024
    %v4482 = vmul.f32 %v4111, %v4021
    %v4483 = vmul.f32 %v4111, %v4022
    %v4484 = vmul.f32 %v4111, %v4023
    %v4485 = vmul.f32 %v4111, %v4024
    %v4486 = vmul.f32 %v4112, %v4021
    %v4487 = vmul.f32 %v4112, %v4022
    %v4488 = vmul.f32 %v4112, %v4023
    %v4489 = vmul.f32 %v4112, %v4024
    %v4490 = vmul.f32 %v4113, %v4021
    %v4491 = vmul.f32 %v4113, %v4022
    %v4492 = vmul.f32 %v4113, %v4023
    %v4493 = vmul.f32 %v4113, %v4024
    %v4494 = vmul.f32 %v4114, %v4021
    %v4495 = vmul.f32 %v4114, %v4022
    %v4496 = vmul.f32 %v4114, %v4023
    %v4497 = vmul.f32 %v4114, %v4024
    %v4498 = vmul.f32 %v4115, %v4021
    %v4499 = vmul.f32 %v4115, %v4022
    %v4500 = vmul.f32 %v4115, %v4023
    %v4501 = vmul.f32 %v4115, %v4024
    %v4502 = vmul.f32 %v4116, %v4021
    %v4503 = vmul.f32 %v4116, %v4022
    %v4504 = vmul.f32 %v4116, %v4023
    %v4505 = vmul.f32 %v4116, %v4024
    %v4506 = vmul.f32 %v4117, %v4021
    %v4507 = vmul.f32 %v4117, %v4022
    %v4508 = vmul.f32 %v4117, %v4023
    %v4509 = vmul.f32 %v4117, %v4024
    %v4510 = vmul.f32 %v4118, %v4021
    %v4511 = vmul.f32 %v4118, %v4022
    %v4512 = vmul.f32 %v4118, %v4023
    %v4513 = vmul.f32 %v4118, %v4024
    %v4514 = vmul.f32 %v4119, %v4021
    %v4515 = vmul.f32 %v4119, %v4022
    %v4516 = vmul.f32 %v4119, %v4023
    %v4517 = vmul.f32 %v4119, %v4024
    %v4518 = vmul.f32 %v4120, %v4021
    %v4519 = vmul.f32 %v4120, %v4022
    %v4520 = vmul.f32 %v4120, %v4023
    %v4521 = vmul.f32 %v4120, %v4024
    %v4522 = vadd.f32 %v4394, %v4458
    %v4523 = vadd.f32 %v4395, %v4459
    %v4524 = vadd.f32 %v4396, %v4460
    %v4525 = vadd.f32 %v4397, %v4461
    %v4526 = vadd.f32 %v4398, %v4462
    %v4527 = vadd.f32 %v4399, %v4463
    %v4528 = vadd.f32 %v4400, %v4464
    %v4529 = vadd.f32 %v4401, %v4465
    %v4530 = vadd.f32 %v4402, %v4466
    %v4531 = vadd.f32 %v4403, %v4467
    %v4532 = vadd.f32 %v4404, %v4468
    %v4533 = vadd.f32 %v4405, %v4469
    %v4534 = vadd.f32 %v4406, %v4470
    %v4535 = vadd.f32 %v4407, %v4471
    %v4536 = vadd.f32 %v4408, %v4472
    %v4537 = vadd.f32 %v4409, %v4473
    %v4538 = vadd.f32 %v4410, %v4474
    %v4539 = vadd.f32 %v4411, %v4475
    %v4540 = vadd.f32 %v4412, %v4476
    %v4541 = vadd.f32 %v4413, %v4477
    %v4542 = vadd.f32 %v4414, %v4478
    %v4543 = vadd.f32 %v4415, %v4479
    %v4544 = vadd.f32 %v4416, %v4480
    %v4545 = vadd.f32 %v4417, %v4481
    %v4546 = vadd.f32 %v4418, %v4482
    %v4547 = vadd.f32 %v4419, %v4483
    %v4548 = vadd.f32 %v4420, %v4484
    %v4549 = vadd.f32 %v4421, %v4485
    %v4550 = vadd.f32 %v4422, %v4486
    %v4551 = vadd.f32 %v4423, %v4487
    %v4552 = vadd.f32 %v4424, %v4488
    %v4553 = vadd.f32 %v4425, %v4489
    %v4554 = vadd.f32 %v4426, %v4490
    %v4555 = vadd.f32 %v4427, %v4491
    %v4556 = vadd.f32 %v4428, %v4492
    %v4557 = vadd.f32 %v4429, %v4493
    %v4558 = vadd.f32 %v4430, %v4494
    %v4559 = vadd.f32 %v4431, %v4495
    %v4560 = vadd.f32 %v4432, %v4496
    %v4561 = vadd.f32 %v4433, %v4497
    %v4562 = vadd.f32 %v4434, %v4498
    %v4563 = vadd.f32 %v4435, %v4499
    %v4564 = vadd.f32 %v4436, %v4500
    %v4565 = vadd.f32 %v4437, %v4501
    %v4566 = vadd.f32 %v4438, %v4502
    %v4567 = vadd.f32 %v4439, %v4503
    %v4568 = vadd.f32 %v4440, %v4504
    %v4569 = vadd.f32 %v4441, %v4505
    %v4570 = vadd.f32 %v4442, %v4506
    %v4571 = vadd.f32 %v4443, %v4507
    %v4572 = vadd.f32 %v4444, %v4508
    %v4573 = vadd.f32 %v4445, %v4509
    %v4574 = vadd.f32 %v4446, %v4510
    %v4575 = vadd.f32 %v4447, %v4511
    %v4576 = vadd.f32 %v4448, %v4512
    %v4577 = vadd.f32 %v4449, %v4513
    %v4578 = vadd.f32 %v4450, %v4514
    %v4579 = vadd.f32 %v4451, %v4515
    %v4580 = vadd.f32 %v4452, %v4516
    %v4581 = vadd.f32 %v4453, %v4517
    %v4582 = vadd.f32 %v4454, %v4518
    %v4583 = vadd.f32 %v4455, %v4519
    %v4584 = vadd.f32 %v4456, %v4520
    %v4585 = vadd.f32 %v4457, %v4521
    %4586 = vst [vmem:[#allocation2] sm:$0xff] %v4522
    %4587 = vst [vmem:[#allocation2 + $0x8] sm:$0xff] %v4523
    %4588 = vst [vmem:[#allocation2 + $0x10] sm:$0xff] %v4524
    %4589 = vst [vmem:[#allocation2 + $0x18] sm:$0xff] %v4525
    %4590 = vst [vmem:[#allocation2 + $0x20] sm:$0xff] %v4526
    %4591 = vst [vmem:[#allocation2 + $0x28] sm:$0xff] %v4527
    %4592 = vst [vmem:[#allocation2 + $0x30] sm:$0xff] %v4528
    %4593 = vst [vmem:[#allocation2 + $0x38] sm:$0xff] %v4529
    %4594 = vst [vmem:[#allocation2 + $0x40] sm:$0xff] %v4530
    %4595 = vst [vmem:[#allocation2 + $0x48] sm:$0xff] %v4531
    %4596 = vst [vmem:[#allocation2 + $0x50] sm:$0xff] %v4532
    %4597 = vst [vmem:[#allocation2 + $0x58] sm:$0xff] %v4533
    %4598 = vst [vmem:[#allocation2 + $0x60] sm:$0xff] %v4534
    %4599 = vst [vmem:[#allocation2 + $0x68] sm:$0xff] %v4535
    %4600 = vst [vmem:[#allocation2 + $0x70] sm:$0xff] %v4536
    %4601 = vst [vmem:[#allocation2 + $0x78] sm:$0xff] %v4537
    %4602 = vst [vmem:[#allocation2 + $0x80] sm:$0xff] %v4538
    %4603 = vst [vmem:[#allocation2 + $0x88] sm:$0xff] %v4539
    %4604 = vst [vmem:[#allocation2 + $0x90] sm:$0xff] %v4540
    %4605 = vst [vmem:[#allocation2 + $0x98] sm:$0xff] %v4541
    %4606 = vst [vmem:[#allocation2 + $0xa0] sm:$0xff] %v4542
    %4607 = vst [vmem:[#allocation2 + $0xa8] sm:$0xff] %v4543
    %4608 = vst [vmem:[#allocation2 + $0xb0] sm:$0xff] %v4544
    %4609 = vst [vmem:[#allocation2 + $0xb8] sm:$0xff] %v4545
    %4610 = vst [vmem:[#allocation2 + $0xc0] sm:$0xff] %v4546
    %4611 = vst [vmem:[#allocation2 + $0xc8] sm:$0xff] %v4547
    %4612 = vst [vmem:[#allocation2 + $0xd0] sm:$0xff] %v4548
    %4613 = vst [vmem:[#allocation2 + $0xd8] sm:$0xff] %v4549
    %4614 = vst [vmem:[#allocation2 + $0xe0] sm:$0xff] %v4550
    %4615 = vst [vmem:[#allocation2 + $0xe8] sm:$0xff] %v4551
    %4616 = vst [vmem:[#allocation2 + $0xf0] sm:$0xff] %v4552
    %4617 = vst [vmem:[#allocation2 + $0xf8] sm:$0xff] %v4553
    %4618 = vst [vmem:[#allocation2 + $0x100] sm:$0xff] %v4554
    %4619 = vst [vmem:[#allocation2 + $0x108] sm:$0xff] %v4555
    %4620 = vst [vmem:[#allocation2 + $0x110] sm:$0xff] %v4556
    %4621 = vst [vmem:[#allocation2 + $0x118] sm:$0xff] %v4557
    %4622 = vst [vmem:[#allocation2 + $0x120] sm:$0xff] %v4558
    %4623 = vst [vmem:[#allocation2 + $0x128] sm:$0xff] %v4559
    %4624 = vst [vmem:[#allocation2 + $0x130] sm:$0xff] %v4560
    %4625 = vst [vmem:[#allocation2 + $0x138] sm:$0xff] %v4561
    %4626 = vst [vmem:[#allocation2 + $0x140] sm:$0xff] %v4562
    %4627 = vst [vmem:[#allocation2 + $0x148] sm:$0xff] %v4563
    %4628 = vst [vmem:[#allocation2 + $0x150] sm:$0xff] %v4564
    %4629 = vst [vmem:[#allocation2 + $0x158] sm:$0xff] %v4565
    %4630 = vst [vmem:[#allocation2 + $0x160] sm:$0xff] %v4566
    %4631 = vst [vmem:[#allocation2 + $0x168] sm:$0xff] %v4567
    %4632 = vst [vmem:[#allocation2 + $0x170] sm:$0xff] %v4568
    %4633 = vst [vmem:[#allocation2 + $0x178] sm:$0xff] %v4569
    %4634 = vst [vmem:[#allocation2 + $0x180] sm:$0xff] %v4570
    %4635 = vst [vmem:[#allocation2 + $0x188] sm:$0xff] %v4571
    %4636 = vst [vmem:[#allocation2 + $0x190] sm:$0xff] %v4572
    %4637 = vst [vmem:[#allocation2 + $0x198] sm:$0xff] %v4573
    %4638 = vst [vmem:[#allocation2 + $0x1a0] sm:$0xff] %v4574
    %4639 = vst [vmem:[#allocation2 + $0x1a8] sm:$0xff] %v4575
    %4640 = vst [vmem:[#allocation2 + $0x1b0] sm:$0xff] %v4576
    %4641 = vst [vmem:[#allocation2 + $0x1b8] sm:$0xff] %v4577
    %4642 = vst [vmem:[#allocation2 + $0x1c0] sm:$0xff] %v4578
    %4643 = vst [vmem:[#allocation2 + $0x1c8] sm:$0xff] %v4579
    %4644 = vst [vmem:[#allocation2 + $0x1d0] sm:$0xff] %v4580
    %4645 = vst [vmem:[#allocation2 + $0x1d8] sm:$0xff] %v4581
    %4646 = vst [vmem:[#allocation2 + $0x1e0] sm:$0xff] %v4582
    %4647 = vst [vmem:[#allocation2 + $0x1e8] sm:$0xff] %v4583
    %4648 = vst [vmem:[#allocation2 + $0x1f0] sm:$0xff] %v4584
    %4649 = vst [vmem:[#allocation2 + $0x1f8] sm:$0xff] %v4585
    %s4650 = scalar_lea.vmem [#allocation3], 112
    %v4651 = vld [vmem:[%s4650] sm:$0xff]
    %v4652 = vld [vmem:[%s4650 + $0x8] sm:$0xff]
    %s4653 = scalar_lea.vmem [#allocation6], 448
    %v4654 = vld [vmem:[%s4653] sm:$0xff]
    %v4655 = vld [vmem:[%s4653 + $0x8] sm:$0xff]
    %v4656 = vld [vmem:[%s4653 + $0x10] sm:$0xff]
    %v4657 = vld [vmem:[%s4653 + $0x18] sm:$0xff]
    %v4658 = vld [vmem:[%s4653 + $0x20] sm:$0xff]
    %v4659 = vld [vmem:[%s4653 + $0x28] sm:$0xff]
    %v4660 = vld [vmem:[%s4653 + $0x30] sm:$0xff]
    %v4661 = vld [vmem:[%s4653 + $0x38] sm:$0xff]
    %v4662 = vld [vmem:[#allocation2] sm:$0xff]
    %v4663 = vld [vmem:[#allocation2 + $0x8] sm:$0xff]
    %v4664 = vld [vmem:[#allocation2 + $0x10] sm:$0xff]
    %v4665 = vld [vmem:[#allocation2 + $0x18] sm:$0xff]
    %v4666 = vld [vmem:[#allocation2 + $0x20] sm:$0xff]
    %v4667 = vld [vmem:[#allocation2 + $0x28] sm:$0xff]
    %v4668 = vld [vmem:[#allocation2 + $0x30] sm:$0xff]
    %v4669 = vld [vmem:[#allocation2 + $0x38] sm:$0xff]
    %v4670 = vld [vmem:[#allocation2 + $0x40] sm:$0xff]
    %v4671 = vld [vmem:[#allocation2 + $0x48] sm:$0xff]
    %v4672 = vld [vmem:[#allocation2 + $0x50] sm:$0xff]
    %v4673 = vld [vmem:[#allocation2 + $0x58] sm:$0xff]
    %v4674 = vld [vmem:[#allocation2 + $0x60] sm:$0xff]
    %v4675 = vld [vmem:[#allocation2 + $0x68] sm:$0xff]
    %v4676 = vld [vmem:[#allocation2 + $0x70] sm:$0xff]
    %v4677 = vld [vmem:[#allocation2 + $0x78] sm:$0xff]
    %v4678 = vld [vmem:[#allocation2 + $0x80] sm:$0xff]
    %v4679 = vld [vmem:[#allocation2 + $0x88] sm:$0xff]
    %v4680 = vld [vmem:[#allocation2 + $0x90] sm:$0xff]
    %v4681 = vld [vmem:[#allocation2 + $0x98] sm:$0xff]
    %v4682 = vld [vmem:[#allocation2 + $0xa0] sm:$0xff]
    %v4683 = vld [vmem:[#allocation2 + $0xa8] sm:$0xff]
    %v4684 = vld [vmem:[#allocation2 + $0xb0] sm:$0xff]
    %v4685 = vld [vmem:[#allocation2 + $0xb8] sm:$0xff]
    %v4686 = vld [vmem:[#allocation2 + $0xc0] sm:$0xff]
    %v4687 = vld [vmem:[#allocation2 + $0xc8] sm:$0xff]
    %v4688 = vld [vmem:[#allocation2 + $0xd0] sm:$0xff]
    %v4689 = vld [vmem:[#allocation2 + $0xd8] sm:$0xff]
    %v4690 = vld [vmem:[#allocation2 + $0xe0] sm:$0xff]
    %v4691 = vld [vmem:[#allocation2 + $0xe8] sm:$0xff]
    %v4692 = vld [vmem:[#allocation2 + $0xf0] sm:$0xff]
    %v4693 = vld [vmem:[#allocation2 + $0xf8] sm:$0xff]
    %v4694 = vld [vmem:[#allocation2 + $0x100] sm:$0xff]
    %v4695 = vld [vmem:[#allocation2 + $0x108] sm:$0xff]
    %v4696 = vld [vmem:[#allocation2 + $0x110] sm:$0xff]
    %v4697 = vld [vmem:[#allocation2 + $0x118] sm:$0xff]
    %v4698 = vld [vmem:[#allocation2 + $0x120] sm:$0xff]
    %v4699 = vld [vmem:[#allocation2 + $0x128] sm:$0xff]
    %v4700 = vld [vmem:[#allocation2 + $0x130] sm:$0xff]
    %v4701 = vld [vmem:[#allocation2 + $0x138] sm:$0xff]
    %v4702 = vld [vmem:[#allocation2 + $0x140] sm:$0xff]
    %v4703 = vld [vmem:[#allocation2 + $0x148] sm:$0xff]
    %v4704 = vld [vmem:[#allocation2 + $0x150] sm:$0xff]
    %v4705 = vld [vmem:[#allocation2 + $0x158] sm:$0xff]
    %v4706 = vld [vmem:[#allocation2 + $0x160] sm:$0xff]
    %v4707 = vld [vmem:[#allocation2 + $0x168] sm:$0xff]
    %v4708 = vld [vmem:[#allocation2 + $0x170] sm:$0xff]
    %v4709 = vld [vmem:[#allocation2 + $0x178] sm:$0xff]
    %v4710 = vld [vmem:[#allocation2 + $0x180] sm:$0xff]
    %v4711 = vld [vmem:[#allocation2 + $0x188] sm:$0xff]
    %v4712 = vld [vmem:[#allocation2 + $0x190] sm:$0xff]
    %v4713 = vld [vmem:[#allocation2 + $0x198] sm:$0xff]
    %v4714 = vld [vmem:[#allocation2 + $0x1a0] sm:$0xff]
    %v4715 = vld [vmem:[#allocation2 + $0x1a8] sm:$0xff]
    %v4716 = vld [vmem:[#allocation2 + $0x1b0] sm:$0xff]
    %v4717 = vld [vmem:[#allocation2 + $0x1b8] sm:$0xff]
    %v4718 = vld [vmem:[#allocation2 + $0x1c0] sm:$0xff]
    %v4719 = vld [vmem:[#allocation2 + $0x1c8] sm:$0xff]
    %v4720 = vld [vmem:[#allocation2 + $0x1d0] sm:$0xff]
    %v4721 = vld [vmem:[#allocation2 + $0x1d8] sm:$0xff]
    %v4722 = vld [vmem:[#allocation2 + $0x1e0] sm:$0xff]
    %v4723 = vld [vmem:[#allocation2 + $0x1e8] sm:$0xff]
    %v4724 = vld [vmem:[#allocation2 + $0x1f0] sm:$0xff]
    %v4725 = vld [vmem:[#allocation2 + $0x1f8] sm:$0xff]
    %v4728 = vrot.slane %v4651, 1
    %v4729 = vrot.slane %v4651, 2
    %v4730 = vrot.slane %v4651, 3
    %v4731 = vrot.slane %v4651, 4
    %v4732 = vrot.slane %v4651, 5
    %v4733 = vrot.slane %v4651, 6
    %v4734 = vrot.slane %v4651, 7
    %v4735 = vrot.slane %v4652, 1
    %v4736 = vrot.slane %v4652, 2
    %v4737 = vrot.slane %v4652, 3
    %v4738 = vrot.slane %v4652, 4
    %v4739 = vrot.slane %v4652, 5
    %v4740 = vrot.slane %v4652, 6
    %v4741 = vrot.slane %v4652, 7
    %v4742 = vperm.slane %v4651, 0
    %v4743 = vperm.slane %v4728, 0
    %v4744 = vperm.slane %v4729, 0
    %v4745 = vperm.slane %v4730, 0
    %v4746 = vperm.slane %v4731, 0
    %v4747 = vperm.slane %v4732, 0
    %v4748 = vperm.slane %v4733, 0
    %v4749 = vperm.slane %v4734, 0
    %v4750 = vperm.slane %v4652, 0
    %v4751 = vperm.slane %v4735, 0
    %v4752 = vperm.slane %v4736, 0
    %v4753 = vperm.slane %v4737, 0
    %v4754 = vperm.slane %v4738, 0
    %v4755 = vperm.slane %v4739, 0
    %v4756 = vperm.slane %v4740, 0
    %v4757 = vperm.slane %v4741, 0
    %v4774 = vmul.f32 %v4742, %v4662
    %v4775 = vmul.f32 %v4742, %v4663
    %v4776 = vmul.f32 %v4742, %v4664
    %v4777 = vmul.f32 %v4742, %v4665
    %v4778 = vmul.f32 %v4743, %v4666
    %v4779 = vmul.f32 %v4743, %v4667
    %v4780 = vmul.f32 %v4743, %v4668
    %v4781 = vmul.f32 %v4743, %v4669
    %v4782 = vmul.f32 %v4744, %v4670
    %v4783 = vmul.f32 %v4744, %v4671
    %v4784 = vmul.f32 %v4744, %v4672
    %v4785 = vmul.f32 %v4744, %v4673
    %v4786 = vmul.f32 %v4745, %v4674
    %v4787 = vmul.f32 %v4745, %v4675
    %v4788 = vmul.f32 %v4745, %v4676
    %v4789 = vmul.f32 %v4745, %v4677
    %v4790 = vmul.f32 %v4746, %v4678
    %v4791 = vmul.f32 %v4746, %v4679
    %v4792 = vmul.f32 %v4746, %v4680
    %v4793 = vmul.f32 %v4746, %v4681
    %v4794 = vmul.f32 %v4747, %v4682
    %v4795 = vmul.f32 %v4747, %v4683
    %v4796 = vmul.f32 %v4747, %v4684
    %v4797 = vmul.f32 %v4747, %v4685
    %v4798 = vmul.f32 %v4748, %v4686
    %v4799 = vmul.f32 %v4748, %v4687
    %v4800 = vmul.f32 %v4748, %v4688
    %v4801 = vmul.f32 %v4748, %v4689
    %v4802 = vmul.f32 %v4749, %v4690
    %v4803 = vmul.f32 %v4749, %v4691
    %v4804 = vmul.f32 %v4749, %v4692
    %v4805 = vmul.f32 %v4749, %v4693
    %v4806 = vmul.f32 %v4750, %v4694
    %v4807 = vmul.f32 %v4750, %v4695
    %v4808 = vmul.f32 %v4750, %v4696
    %v4809 = vmul.f32 %v4750, %v4697
    %v4810 = vmul.f32 %v4751, %v4698
    %v4811 = vmul.f32 %v4751, %v4699
    %v4812 = vmul.f32 %v4751, %v4700
    %v4813 = vmul.f32 %v4751, %v4701
    %v4814 = vmul.f32 %v4752, %v4702
    %v4815 = vmul.f32 %v4752, %v4703
    %v4816 = vmul.f32 %v4752, %v4704
    %v4817 = vmul.f32 %v4752, %v4705
    %v4818 = vmul.f32 %v4753, %v4706
    %v4819 = vmul.f32 %v4753, %v4707
    %v4820 = vmul.f32 %v4753, %v4708
    %v4821 = vmul.f32 %v4753, %v4709
    %v4822 = vmul.f32 %v4754, %v4710
    %v4823 = vmul.f32 %v4754, %v4711
    %v4824 = vmul.f32 %v4754, %v4712
    %v4825 = vmul.f32 %v4754, %v4713
    %v4826 = vmul.f32 %v4755, %v4714
    %v4827 = vmul.f32 %v4755, %v4715
    %v4828 = vmul.f32 %v4755, %v4716
    %v4829 = vmul.f32 %v4755, %v4717
    %v4830 = vmul.f32 %v4756, %v4718
    %v4831 = vmul.f32 %v4756, %v4719
    %v4832 = vmul.f32 %v4756, %v4720
    %v4833 = vmul.f32 %v4756, %v4721
    %v4834 = vmul.f32 %v4757, %v4722
    %v4835 = vmul.f32 %v4757, %v4723
    %v4836 = vmul.f32 %v4757, %v4724
    %v4837 = vmul.f32 %v4757, %v4725
    %v4838 = vadd.f32 %v4774, %v4778
    %v4839 = vadd.f32 %v4838, %v4782
    %v4840 = vadd.f32 %v4839, %v4786
    %v4841 = vadd.f32 %v4840, %v4790
    %v4842 = vadd.f32 %v4841, %v4794
    %v4843 = vadd.f32 %v4842, %v4798
    %v4844 = vadd.f32 %v4843, %v4802
    %v4845 = vadd.f32 %v4844, %v4806
    %v4846 = vadd.f32 %v4845, %v4810
    %v4847 = vadd.f32 %v4846, %v4814
    %v4848 = vadd.f32 %v4847, %v4818
    %v4849 = vadd.f32 %v4848, %v4822
    %v4850 = vadd.f32 %v4849, %v4826
    %v4851 = vadd.f32 %v4850, %v4830
    %v4852 = vadd.f32 %v4851, %v4834
    %v4853 = vadd.f32 %v4775, %v4779
    %v4854 = vadd.f32 %v4853, %v4783
    %v4855 = vadd.f32 %v4854, %v4787
    %v4856 = vadd.f32 %v4855, %v4791
    %v4857 = vadd.f32 %v4856, %v4795
    %v4858 = vadd.f32 %v4857, %v4799
    %v4859 = vadd.f32 %v4858, %v4803
    %v4860 = vadd.f32 %v4859, %v4807
    %v4861 = vadd.f32 %v4860, %v4811
    %v4862 = vadd.f32 %v4861, %v4815
    %v4863 = vadd.f32 %v4862, %v4819
    %v4864 = vadd.f32 %v4863, %v4823
    %v4865 = vadd.f32 %v4864, %v4827
    %v4866 = vadd.f32 %v4865, %v4831
    %v4867 = vadd.f32 %v4866, %v4835
    %v4868 = vadd.f32 %v4776, %v4780
    %v4869 = vadd.f32 %v4868, %v4784
    %v4870 = vadd.f32 %v4869, %v4788
    %v4871 = vadd.f32 %v4870, %v4792
    %v4872 = vadd.f32 %v4871, %v4796
    %v4873 = vadd.f32 %v4872, %v4800
    %v4874 = vadd.f32 %v4873, %v4804
    %v4875 = vadd.f32 %v4874, %v4808
    %v4876 = vadd.f32 %v4875, %v4812
    %v4877 = vadd.f32 %v4876, %v4816
    %v4878 = vadd.f32 %v4877, %v4820
    %v4879 = vadd.f32 %v4878, %v4824
    %v4880 = vadd.f32 %v4879, %v4828
    %v4881 = vadd.f32 %v4880, %v4832
    %v4882 = vadd.f32 %v4881, %v4836
    %v4883 = vadd.f32 %v4777, %v4781
    %v4884 = vadd.f32 %v4883, %v4785
    %v4885 = vadd.f32 %v4884, %v4789
    %v4886 = vadd.f32 %v4885, %v4793
    %v4887 = vadd.f32 %v4886, %v4797
    %v4888 = vadd.f32 %v4887, %v4801
    %v4889 = vadd.f32 %v4888, %v4805
    %v4890 = vadd.f32 %v4889, %v4809
    %v4891 = vadd.f32 %v4890, %v4813
    %v4892 = vadd.f32 %v4891, %v4817
    %v4893 = vadd.f32 %v4892, %v4821
    %v4894 = vadd.f32 %v4893, %v4825
    %v4895 = vadd.f32 %v4894, %v4829
    %v4896 = vadd.f32 %v4895, %v4833
    %v4897 = vadd.f32 %v4896, %v4837
    %s4898 = scalar_lea.vmem [#allocation9], 224
    %4899 = vst [vmem:[%s4898] sm:$0xff] %v4852
    %4900 = vst [vmem:[%s4898 + $0x8] sm:$0xff] %v4867
    %4901 = vst [vmem:[%s4898 + $0x10] sm:$0xff] %v4882
    %4902 = vst [vmem:[%s4898 + $0x18] sm:$0xff] %v4897
    %v4903 = vmul.f32 %v4742, %v4654
    %v4904 = vmul.f32 %v4742, %v4655
    %v4905 = vmul.f32 %v4742, %v4656
    %v4906 = vmul.f32 %v4742, %v4657
    %v4907 = vmul.f32 %v4743, %v4654
    %v4908 = vmul.f32 %v4743, %v4655
    %v4909 = vmul.f32 %v4743, %v4656
    %v4910 = vmul.f32 %v4743, %v4657
    %v4911 = vmul.f32 %v4744, %v4654
    %v4912 = vmul.f32 %v4744, %v4655
    %v4913 = vmul.f32 %v4744, %v4656
    %v4914 = vmul.f32 %v4744, %v4657
    %v4915 = vmul.f32 %v4745, %v4654
    %v4916 = vmul.f32 %v4745, %v4655
    %v4917 = vmul.f32 %v4745, %v4656
    %v4918 = vmul.f32 %v4745, %v4657
    %v4919 = vmul.f32 %v4746, %v4654
    %v4920 = vmul.f32 %v4746, %v4655
    %v4921 = vmul.f32 %v4746, %v4656
    %v4922 = vmul.f32 %v4746, %v4657
    %v4923 = vmul.f32 %v4747, %v4654
    %v4924 = vmul.f32 %v4747, %v4655
    %v4925 = vmul.f32 %v4747, %v4656
    %v4926 = vmul.f32 %v4747, %v4657
    %v4927 = vmul.f32 %v4748, %v4654
    %v4928 = vmul.f32 %v4748, %v4655
    %v4929 = vmul.f32 %v4748, %v4656
    %v4930 = vmul.f32 %v4748, %v4657
    %v4931 = vmul.f32 %v4749, %v4654
    %v4932 = vmul.f32 %v4749, %v4655
    %v4933 = vmul.f32 %v4749, %v4656
    %v4934 = vmul.f32 %v4749, %v4657
    %v4935 = vmul.f32 %v4750, %v4654
    %v4936 = vmul.f32 %v4750, %v4655
    %v4937 = vmul.f32 %v4750, %v4656
    %v4938 = vmul.f32 %v4750, %v4657
    %v4939 = vmul.f32 %v4751, %v4654
    %v4940 = vmul.f32 %v4751, %v4655
    %v4941 = vmul.f32 %v4751, %v4656
    %v4942 = vmul.f32 %v4751, %v4657
    %v4943 = vmul.f32 %v4752, %v4654
    %v4944 = vmul.f32 %v4752, %v4655
    %v4945 = vmul.f32 %v4752, %v4656
    %v4946 = vmul.f32 %v4752, %v4657
    %v4947 = vmul.f32 %v4753, %v4654
    %v4948 = vmul.f32 %v4753, %v4655
    %v4949 = vmul.f32 %v4753, %v4656
    %v4950 = vmul.f32 %v4753, %v4657
    %v4951 = vmul.f32 %v4754, %v4654
    %v4952 = vmul.f32 %v4754, %v4655
    %v4953 = vmul.f32 %v4754, %v4656
    %v4954 = vmul.f32 %v4754, %v4657
    %v4955 = vmul.f32 %v4755, %v4654
    %v4956 = vmul.f32 %v4755, %v4655
    %v4957 = vmul.f32 %v4755, %v4656
    %v4958 = vmul.f32 %v4755, %v4657
    %v4959 = vmul.f32 %v4756, %v4654
    %v4960 = vmul.f32 %v4756, %v4655
    %v4961 = vmul.f32 %v4756, %v4656
    %v4962 = vmul.f32 %v4756, %v4657
    %v4963 = vmul.f32 %v4757, %v4654
    %v4964 = vmul.f32 %v4757, %v4655
    %v4965 = vmul.f32 %v4757, %v4656
    %v4966 = vmul.f32 %v4757, %v4657
    %v4967 = vsub.f32 1.0, %v4903
    %v4968 = vsub.f32 1.0, %v4904
    %v4969 = vsub.f32 1.0, %v4905
    %v4970 = vsub.f32 1.0, %v4906
    %v4971 = vsub.f32 1.0, %v4907
    %v4972 = vsub.f32 1.0, %v4908
    %v4973 = vsub.f32 1.0, %v4909
    %v4974 = vsub.f32 1.0, %v4910
    %v4975 = vsub.f32 1.0, %v4911
    %v4976 = vsub.f32 1.0, %v4912
    %v4977 = vsub.f32 1.0, %v4913
    %v4978 = vsub.f32 1.0, %v4914
    %v4979 = vsub.f32 1.0, %v4915
    %v4980 = vsub.f32 1.0, %v4916
    %v4981 = vsub.f32 1.0, %v4917
    %v4982 = vsub.f32 1.0, %v4918
    %v4983 = vsub.f32 1.0, %v4919
    %v4984 = vsub.f32 1.0, %v4920
    %v4985 = vsub.f32 1.0, %v4921
    %v4986 = vsub.f32 1.0, %v4922
    %v4987 = vsub.f32 1.0, %v4923
    %v4988 = vsub.f32 1.0, %v4924
    %v4989 = vsub.f32 1.0, %v4925
    %v4990 = vsub.f32 1.0, %v4926
    %v4991 = vsub.f32 1.0, %v4927
    %v4992 = vsub.f32 1.0, %v4928
    %v4993 = vsub.f32 1.0, %v4929
    %v4994 = vsub.f32 1.0, %v4930
    %v4995 = vsub.f32 1.0, %v4931
    %v4996 = vsub.f32 1.0, %v4932
    %v4997 = vsub.f32 1.0, %v4933
    %v4998 = vsub.f32 1.0, %v4934
    %v4999 = vsub.f32 1.0, %v4935
    %v5000 = vsub.f32 1.0, %v4936
    %v5001 = vsub.f32 1.0, %v4937
    %v5002 = vsub.f32 1.0, %v4938
    %v5003 = vsub.f32 1.0, %v4939
    %v5004 = vsub.f32 1.0, %v4940
    %v5005 = vsub.f32 1.0, %v4941
    %v5006 = vsub.f32 1.0, %v4942
    %v5007 = vsub.f32 1.0, %v4943
    %v5008 = vsub.f32 1.0, %v4944
    %v5009 = vsub.f32 1.0, %v4945
    %v5010 = vsub.f32 1.0, %v4946
    %v5011 = vsub.f32 1.0, %v4947
    %v5012 = vsub.f32 1.0, %v4948
    %v5013 = vsub.f32 1.0, %v4949
    %v5014 = vsub.f32 1.0, %v4950
    %v5015 = vsub.f32 1.0, %v4951
    %v5016 = vsub.f32 1.0, %v4952
    %v5017 = vsub.f32 1.0, %v4953
    %v5018 = vsub.f32 1.0, %v4954
    %v5019 = vsub.f32 1.0, %v4955
    %v5020 = vsub.f32 1.0, %v4956
    %v5021 = vsub.f32 1.0, %v4957
    %v5022 = vsub.f32 1.0, %v4958
    %v5023 = vsub.f32 1.0, %v4959
    %v5024 = vsub.f32 1.0, %v4960
    %v5025 = vsub.f32 1.0, %v4961
    %v5026 = vsub.f32 1.0, %v4962
    %v5027 = vsub.f32 1.0, %v4963
    %v5028 = vsub.f32 1.0, %v4964
    %v5029 = vsub.f32 1.0, %v4965
    %v5030 = vsub.f32 1.0, %v4966
    %v5031 = vmul.f32 %v4662, %v4967
    %v5032 = vmul.f32 %v4663, %v4968
    %v5033 = vmul.f32 %v4664, %v4969
    %v5034 = vmul.f32 %v4665, %v4970
    %v5035 = vmul.f32 %v4666, %v4971
    %v5036 = vmul.f32 %v4667, %v4972
    %v5037 = vmul.f32 %v4668, %v4973
    %v5038 = vmul.f32 %v4669, %v4974
    %v5039 = vmul.f32 %v4670, %v4975
    %v5040 = vmul.f32 %v4671, %v4976
    %v5041 = vmul.f32 %v4672, %v4977
    %v5042 = vmul.f32 %v4673, %v4978
    %v5043 = vmul.f32 %v4674, %v4979
    %v5044 = vmul.f32 %v4675, %v4980
    %v5045 = vmul.f32 %v4676, %v4981
    %v5046 = vmul.f32 %v4677, %v4982
    %v5047 = vmul.f32 %v4678, %v4983
    %v5048 = vmul.f32 %v4679, %v4984
    %v5049 = vmul.f32 %v4680, %v4985
    %v5050 = vmul.f32 %v4681, %v4986
    %v5051 = vmul.f32 %v4682, %v4987
    %v5052 = vmul.f32 %v4683, %v4988
    %v5053 = vmul.f32 %v4684, %v4989
    %v5054 = vmul.f32 %v4685, %v4990
    %v5055 = vmul.f32 %v4686, %v4991
    %v5056 = vmul.f32 %v4687, %v4992
    %v5057 = vmul.f32 %v4688, %v4993
    %v5058 = vmul.f32 %v4689, %v4994
    %v5059 = vmul.f32 %v4690, %v4995
    %v5060 = vmul.f32 %v4691, %v4996
    %v5061 = vmul.f32 %v4692, %v4997
    %v5062 = vmul.f32 %v4693, %v4998
    %v5063 = vmul.f32 %v4694, %v4999
    %v5064 = vmul.f32 %v4695, %v5000
    %v5065 = vmul.f32 %v4696, %v5001
    %v5066 = vmul.f32 %v4697, %v5002
    %v5067 = vmul.f32 %v4698, %v5003
    %v5068 = vmul.f32 %v4699, %v5004
    %v5069 = vmul.f32 %v4700, %v5005
    %v5070 = vmul.f32 %v4701, %v5006
    %v5071 = vmul.f32 %v4702, %v5007
    %v5072 = vmul.f32 %v4703, %v5008
    %v5073 = vmul.f32 %v4704, %v5009
    %v5074 = vmul.f32 %v4705, %v5010
    %v5075 = vmul.f32 %v4706, %v5011
    %v5076 = vmul.f32 %v4707, %v5012
    %v5077 = vmul.f32 %v4708, %v5013
    %v5078 = vmul.f32 %v4709, %v5014
    %v5079 = vmul.f32 %v4710, %v5015
    %v5080 = vmul.f32 %v4711, %v5016
    %v5081 = vmul.f32 %v4712, %v5017
    %v5082 = vmul.f32 %v4713, %v5018
    %v5083 = vmul.f32 %v4714, %v5019
    %v5084 = vmul.f32 %v4715, %v5020
    %v5085 = vmul.f32 %v4716, %v5021
    %v5086 = vmul.f32 %v4717, %v5022
    %v5087 = vmul.f32 %v4718, %v5023
    %v5088 = vmul.f32 %v4719, %v5024
    %v5089 = vmul.f32 %v4720, %v5025
    %v5090 = vmul.f32 %v4721, %v5026
    %v5091 = vmul.f32 %v4722, %v5027
    %v5092 = vmul.f32 %v4723, %v5028
    %v5093 = vmul.f32 %v4724, %v5029
    %v5094 = vmul.f32 %v4725, %v5030
    %v5095 = vmul.f32 %v4742, %v4658
    %v5096 = vmul.f32 %v4742, %v4659
    %v5097 = vmul.f32 %v4742, %v4660
    %v5098 = vmul.f32 %v4742, %v4661
    %v5099 = vmul.f32 %v4743, %v4658
    %v5100 = vmul.f32 %v4743, %v4659
    %v5101 = vmul.f32 %v4743, %v4660
    %v5102 = vmul.f32 %v4743, %v4661
    %v5103 = vmul.f32 %v4744, %v4658
    %v5104 = vmul.f32 %v4744, %v4659
    %v5105 = vmul.f32 %v4744, %v4660
    %v5106 = vmul.f32 %v4744, %v4661
    %v5107 = vmul.f32 %v4745, %v4658
    %v5108 = vmul.f32 %v4745, %v4659
    %v5109 = vmul.f32 %v4745, %v4660
    %v5110 = vmul.f32 %v4745, %v4661
    %v5111 = vmul.f32 %v4746, %v4658
    %v5112 = vmul.f32 %v4746, %v4659
    %v5113 = vmul.f32 %v4746, %v4660
    %v5114 = vmul.f32 %v4746, %v4661
    %v5115 = vmul.f32 %v4747, %v4658
    %v5116 = vmul.f32 %v4747, %v4659
    %v5117 = vmul.f32 %v4747, %v4660
    %v5118 = vmul.f32 %v4747, %v4661
    %v5119 = vmul.f32 %v4748, %v4658
    %v5120 = vmul.f32 %v4748, %v4659
    %v5121 = vmul.f32 %v4748, %v4660
    %v5122 = vmul.f32 %v4748, %v4661
    %v5123 = vmul.f32 %v4749, %v4658
    %v5124 = vmul.f32 %v4749, %v4659
    %v5125 = vmul.f32 %v4749, %v4660
    %v5126 = vmul.f32 %v4749, %v4661
    %v5127 = vmul.f32 %v4750, %v4658
    %v5128 = vmul.f32 %v4750, %v4659
    %v5129 = vmul.f32 %v4750, %v4660
    %v5130 = vmul.f32 %v4750, %v4661
    %v5131 = vmul.f32 %v4751, %v4658
    %v5132 = vmul.f32 %v4751, %v4659
    %v5133 = vmul.f32 %v4751, %v4660
    %v5134 = vmul.f32 %v4751, %v4661
    %v5135 = vmul.f32 %v4752, %v4658
    %v5136 = vmul.f32 %v4752, %v4659
    %v5137 = vmul.f32 %v4752, %v4660
    %v5138 = vmul.f32 %v4752, %v4661
    %v5139 = vmul.f32 %v4753, %v4658
    %v5140 = vmul.f32 %v4753, %v4659
    %v5141 = vmul.f32 %v4753, %v4660
    %v5142 = vmul.f32 %v4753, %v4661
    %v5143 = vmul.f32 %v4754, %v4658
    %v5144 = vmul.f32 %v4754, %v4659
    %v5145 = vmul.f32 %v4754, %v4660
    %v5146 = vmul.f32 %v4754, %v4661
    %v5147 = vmul.f32 %v4755, %v4658
    %v5148 = vmul.f32 %v4755, %v4659
    %v5149 = vmul.f32 %v4755, %v4660
    %v5150 = vmul.f32 %v4755, %v4661
    %v5151 = vmul.f32 %v4756, %v4658
    %v5152 = vmul.f32 %v4756, %v4659
    %v5153 = vmul.f32 %v4756, %v4660
    %v5154 = vmul.f32 %v4756, %v4661
    %v5155 = vmul.f32 %v4757, %v4658
    %v5156 = vmul.f32 %v4757, %v4659
    %v5157 = vmul.f32 %v4757, %v4660
    %v5158 = vmul.f32 %v4757, %v4661
    %v5159 = vadd.f32 %v5031, %v5095
    %v5160 = vadd.f32 %v5032, %v5096
    %v5161 = vadd.f32 %v5033, %v5097
    %v5162 = vadd.f32 %v5034, %v5098
    %v5163 = vadd.f32 %v5035, %v5099
    %v5164 = vadd.f32 %v5036, %v5100
    %v5165 = vadd.f32 %v5037, %v5101
    %v5166 = vadd.f32 %v5038, %v5102
    %v5167 = vadd.f32 %v5039, %v5103
    %v5168 = vadd.f32 %v5040, %v5104
    %v5169 = vadd.f32 %v5041, %v5105
    %v5170 = vadd.f32 %v5042, %v5106
    %v5171 = vadd.f32 %v5043, %v5107
    %v5172 = vadd.f32 %v5044, %v5108
    %v5173 = vadd.f32 %v5045, %v5109
    %v5174 = vadd.f32 %v5046, %v5110
    %v5175 = vadd.f32 %v5047, %v5111
    %v5176 = vadd.f32 %v5048, %v5112
    %v5177 = vadd.f32 %v5049, %v5113
    %v5178 = vadd.f32 %v5050, %v5114
    %v5179 = vadd.f32 %v5051, %v5115
    %v5180 = vadd.f32 %v5052, %v5116
    %v5181 = vadd.f32 %v5053, %v5117
    %v5182 = vadd.f32 %v5054, %v5118
    %v5183 = vadd.f32 %v5055, %v5119
    %v5184 = vadd.f32 %v5056, %v5120
    %v5185 = vadd.f32 %v5057, %v5121
    %v5186 = vadd.f32 %v5058, %v5122
    %v5187 = vadd.f32 %v5059, %v5123
    %v5188 = vadd.f32 %v5060, %v5124
    %v5189 = vadd.f32 %v5061, %v5125
    %v5190 = vadd.f32 %v5062, %v5126
    %v5191 = vadd.f32 %v5063, %v5127
    %v5192 = vadd.f32 %v5064, %v5128
    %v5193 = vadd.f32 %v5065, %v5129
    %v5194 = vadd.f32 %v5066, %v5130
    %v5195 = vadd.f32 %v5067, %v5131
    %v5196 = vadd.f32 %v5068, %v5132
    %v5197 = vadd.f32 %v5069, %v5133
    %v5198 = vadd.f32 %v5070, %v5134
    %v5199 = vadd.f32 %v5071, %v5135
    %v5200 = vadd.f32 %v5072, %v5136
    %v5201 = vadd.f32 %v5073, %v5137
    %v5202 = vadd.f32 %v5074, %v5138
    %v5203 = vadd.f32 %v5075, %v5139
    %v5204 = vadd.f32 %v5076, %v5140
    %v5205 = vadd.f32 %v5077, %v5141
    %v5206 = vadd.f32 %v5078, %v5142
    %v5207 = vadd.f32 %v5079, %v5143
    %v5208 = vadd.f32 %v5080, %v5144
    %v5209 = vadd.f32 %v5081, %v5145
    %v5210 = vadd.f32 %v5082, %v5146
    %v5211 = vadd.f32 %v5083, %v5147
    %v5212 = vadd.f32 %v5084, %v5148
    %v5213 = vadd.f32 %v5085, %v5149
    %v5214 = vadd.f32 %v5086, %v5150
    %v5215 = vadd.f32 %v5087, %v5151
    %v5216 = vadd.f32 %v5088, %v5152
    %v5217 = vadd.f32 %v5089, %v5153
    %v5218 = vadd.f32 %v5090, %v5154
    %v5219 = vadd.f32 %v5091, %v5155
    %v5220 = vadd.f32 %v5092, %v5156
    %v5221 = vadd.f32 %v5093, %v5157
    %v5222 = vadd.f32 %v5094, %v5158
    %5223 = vst [vmem:[#allocation2] sm:$0xff] %v5159
    %5224 = vst [vmem:[#allocation2 + $0x8] sm:$0xff] %v5160
    %5225 = vst [vmem:[#allocation2 + $0x10] sm:$0xff] %v5161
    %5226 = vst [vmem:[#allocation2 + $0x18] sm:$0xff] %v5162
    %5227 = vst [vmem:[#allocation2 + $0x20] sm:$0xff] %v5163
    %5228 = vst [vmem:[#allocation2 + $0x28] sm:$0xff] %v5164
    %5229 = vst [vmem:[#allocation2 + $0x30] sm:$0xff] %v5165
    %5230 = vst [vmem:[#allocation2 + $0x38] sm:$0xff] %v5166
    %5231 = vst [vmem:[#allocation2 + $0x40] sm:$0xff] %v5167
    %5232 = vst [vmem:[#allocation2 + $0x48] sm:$0xff] %v5168
    %5233 = vst [vmem:[#allocation2 + $0x50] sm:$0xff] %v5169
    %5234 = vst [vmem:[#allocation2 + $0x58] sm:$0xff] %v5170
    %5235 = vst [vmem:[#allocation2 + $0x60] sm:$0xff] %v5171
    %5236 = vst [vmem:[#allocation2 + $0x68] sm:$0xff] %v5172
    %5237 = vst [vmem:[#allocation2 + $0x70] sm:$0xff] %v5173
    %5238 = vst [vmem:[#allocation2 + $0x78] sm:$0xff] %v5174
    %5239 = vst [vmem:[#allocation2 + $0x80] sm:$0xff] %v5175
    %5240 = vst [vmem:[#allocation2 + $0x88] sm:$0xff] %v5176
    %5241 = vst [vmem:[#allocation2 + $0x90] sm:$0xff] %v5177
    %5242 = vst [vmem:[#allocation2 + $0x98] sm:$0xff] %v5178
    %5243 = vst [vmem:[#allocation2 + $0xa0] sm:$0xff] %v5179
    %5244 = vst [vmem:[#allocation2 + $0xa8] sm:$0xff] %v5180
    %5245 = vst [vmem:[#allocation2 + $0xb0] sm:$0xff] %v5181
    %5246 = vst [vmem:[#allocation2 + $0xb8] sm:$0xff] %v5182
    %5247 = vst [vmem:[#allocation2 + $0xc0] sm:$0xff] %v5183
    %5248 = vst [vmem:[#allocation2 + $0xc8] sm:$0xff] %v5184
    %5249 = vst [vmem:[#allocation2 + $0xd0] sm:$0xff] %v5185
    %5250 = vst [vmem:[#allocation2 + $0xd8] sm:$0xff] %v5186
    %5251 = vst [vmem:[#allocation2 + $0xe0] sm:$0xff] %v5187
    %5252 = vst [vmem:[#allocation2 + $0xe8] sm:$0xff] %v5188
    %5253 = vst [vmem:[#allocation2 + $0xf0] sm:$0xff] %v5189
    %5254 = vst [vmem:[#allocation2 + $0xf8] sm:$0xff] %v5190
    %5255 = vst [vmem:[#allocation2 + $0x100] sm:$0xff] %v5191
    %5256 = vst [vmem:[#allocation2 + $0x108] sm:$0xff] %v5192
    %5257 = vst [vmem:[#allocation2 + $0x110] sm:$0xff] %v5193
    %5258 = vst [vmem:[#allocation2 + $0x118] sm:$0xff] %v5194
    %5259 = vst [vmem:[#allocation2 + $0x120] sm:$0xff] %v5195
    %5260 = vst [vmem:[#allocation2 + $0x128] sm:$0xff] %v5196
    %5261 = vst [vmem:[#allocation2 + $0x130] sm:$0xff] %v5197
    %5262 = vst [vmem:[#allocation2 + $0x138] sm:$0xff] %v5198
    %5263 = vst [vmem:[#allocation2 + $0x140] sm:$0xff] %v5199
    %5264 = vst [vmem:[#allocation2 + $0x148] sm:$0xff] %v5200
    %5265 = vst [vmem:[#allocation2 + $0x150] sm:$0xff] %v5201
    %5266 = vst [vmem:[#allocation2 + $0x158] sm:$0xff] %v5202
    %5267 = vst [vmem:[#allocation2 + $0x160] sm:$0xff] %v5203
    %5268 = vst [vmem:[#allocation2 + $0x168] sm:$0xff] %v5204
    %5269 = vst [vmem:[#allocation2 + $0x170] sm:$0xff] %v5205
    %5270 = vst [vmem:[#allocation2 + $0x178] sm:$0xff] %v5206
    %5271 = vst [vmem:[#allocation2 + $0x180] sm:$0xff] %v5207
    %5272 = vst [vmem:[#allocation2 + $0x188] sm:$0xff] %v5208
    %5273 = vst [vmem:[#allocation2 + $0x190] sm:$0xff] %v5209
    %5274 = vst [vmem:[#allocation2 + $0x198] sm:$0xff] %v5210
    %5275 = vst [vmem:[#allocation2 + $0x1a0] sm:$0xff] %v5211
    %5276 = vst [vmem:[#allocation2 + $0x1a8] sm:$0xff] %v5212
    %5277 = vst [vmem:[#allocation2 + $0x1b0] sm:$0xff] %v5213
    %5278 = vst [vmem:[#allocation2 + $0x1b8] sm:$0xff] %v5214
    %5279 = vst [vmem:[#allocation2 + $0x1c0] sm:$0xff] %v5215
    %5280 = vst [vmem:[#allocation2 + $0x1c8] sm:$0xff] %v5216
    %5281 = vst [vmem:[#allocation2 + $0x1d0] sm:$0xff] %v5217
    %5282 = vst [vmem:[#allocation2 + $0x1d8] sm:$0xff] %v5218
    %5283 = vst [vmem:[#allocation2 + $0x1e0] sm:$0xff] %v5219
    %5284 = vst [vmem:[#allocation2 + $0x1e8] sm:$0xff] %v5220
    %5285 = vst [vmem:[#allocation2 + $0x1f0] sm:$0xff] %v5221
    %5286 = vst [vmem:[#allocation2 + $0x1f8] sm:$0xff] %v5222
    // Predicated region
    $region30: #{tpu_custom_call.1} parent=1 // pred_check
      _
    $region31: #{tpu_custom_call.1} parent=1 // pred_check_branch
      %5288 = sbr.rel (0) target = $region33
    $region32: #{tpu_custom_call.1} parent=1 // pred_region
      %5290 = vsyncadd [#allocation5], 0
      %s5291 = sshll.u32 [#allocation9], 4
      %s5292 = int_to_ptr.vmem [resolvable:$true] %s5291
      %s5293 = sshll.u32 %s3, 4
      %s5294 = int_to_ptr.hbm [resolvable:$true] %s5293
      %5299 = dma.vmem_to_hbm [thread:$0]  %s5292, 4096, %s5294, [#allocation5], 128, 128, 8
    $region33: #{tpu_custom_call.1} parent=1 // pred_fallthru
      _
    // Predicated region
    $region34: #{tpu_custom_call.1} parent=1 // pred_check
      _
    $region35: #{tpu_custom_call.1} parent=1 // pred_check_branch
      %5301 = sbr.rel (0) target = $region37
    $region36: #{tpu_custom_call.1} parent=1 // pred_region
      %5303 = dma.done [#allocation5], 4096
    $region37: #{tpu_custom_call.1} parent=1 // pred_fallthru
      _
    %5304 = vsyncpa [#allocation4], 1
    %5305 = vsyncpa [#allocation7], 1
    %5306 = vsyncpa [#allocation5], 1

</llo_original>
